<compile_context>
chip_gen: v7x
topology: tpu7x:2x2x1
jax: 0.10.0
libtpu: 0.0.40
codegen_flags: <defaults>
</compile_context>

<pallas_src>
import functools

import jax
import jax.numpy as jnp
from jax import lax
from jax.experimental import pallas as pl
from jax.experimental.pallas import tpu as pltpu


# ----------------------------------------------------------------------------
# in-kernel helpers (traced inline inside the Pallas kernel)
# ----------------------------------------------------------------------------
def _group_norm(x, gamma, beta, gmat, *, eps, relu):
    """torch.GroupNorm (biased var) + optional ReLU on a (C, L) tile.

    gmat is host-precomputed: gmat[i, j] = [group(i)==group(j)] / ((C/G)*L), so a
    single small matmul with the (C, 2) moment matrix yields per-channel group
    means of x and x^2 simultaneously."""
    s = jnp.sum(x, axis=1, keepdims=True)                       # (C, 1)
    sq = jnp.sum(x * x, axis=1, keepdims=True)                  # (C, 1)
    mom = jnp.concatenate([s, sq], axis=1)                      # (C, 2)
    gmom = jnp.dot(gmat, mom, preferred_element_type=jnp.float32)   # (C, 2)
    mean = gmom[:, 0:1]
    var = jnp.maximum(gmom[:, 1:2] - mean * mean, 0.0)          # guard cancellation
    scale = gamma * lax.rsqrt(var + eps)
    shift = beta - mean * scale
    y = x * scale + shift
    return jnp.maximum(y, 0.0) if relu else y


def _conv3x3x3(x, w_flat, bias, mask_ref, *, H, W):
    """3x3x3 'same' conv on a flattened (Cin, L) f32 tile, L = D*H*W lane-dense.

    The 27 taps are lane rotations of x (pltpu.roll -> XLU), masked by the
    host-precomputed boundary masks, cast to bf16 and stacked into a single
    (27*Cin, L) operand; one MXU matmul (K = 27*Cin) with f32 accumulation."""
    L = x.shape[-1]
    slabs = []
    t = 0
    for kd in (-1, 0, 1):
        for kh in (-1, 0, 1):
            for kw in (-1, 0, 1):
                off = kd * H * W + kh * W + kw
                if off == 0:
                    s = x                                        # center tap: always valid
                else:
                    s = pltpu.roll(x, shift=(-off) % L, axis=1) * mask_ref[t]
                slabs.append(s.astype(jnp.bfloat16))
                t += 1
    col = jnp.concatenate(slabs, axis=0)                         # (27*Cin, L) bf16
    return jnp.dot(w_flat, col, preferred_element_type=jnp.float32) + bias


# ----------------------------------------------------------------------------
# fused Down kernel: ResidualConv + ProjectExcite on the pooled activations
# ----------------------------------------------------------------------------
def _down_kernel(xp_ref, w1_ref, b1_ref, w2_ref, b2_ref, wsk_ref,
                 g1w_ref, g1b_ref, g2w_ref, g2b_ref, gsw_ref, gsb_ref,
                 wc_ref, bc_ref, wct_ref, bct_ref,
                 gmin_ref, gmout_ref, mask_ref, pem_ref, o_ref,
                 *, H, W, eps):
    xp = xp_ref[0]                                               # (Cin, L) f32, pooled

    # ---- conv_block: GN -> ReLU -> Conv3x3x3 -> GN -> ReLU -> Conv3x3x3 ----
    r1 = _group_norm(xp, g1w_ref[...], g1b_ref[...], gmin_ref[...], eps=eps, relu=True)
    c1 = _conv3x3x3(r1, w1_ref[...], b1_ref[...], mask_ref, H=H, W=W)
    r2 = _group_norm(c1, g2w_ref[...], g2b_ref[...], gmout_ref[...], eps=eps, relu=True)
    c2 = _conv3x3x3(r2, w2_ref[...], b2_ref[...], mask_ref, H=H, W=W)

    # ---- skip path: 1x1x1 conv (no bias) -> GN, then residual add ----
    sk = jnp.dot(wsk_ref[...], xp, preferred_element_type=jnp.float32)
    sk = _group_norm(sk, gsw_ref[...], gsb_ref[...], gmout_ref[...], eps=eps, relu=False)
    z = c2 + sk                                                  # (Cout, L) f32

    # ---- ProjectExciteLayer: one (L, L) pooling matmul + 1x1 convs + sigmoid ----
    fs = jnp.dot(z, pem_ref[...], preferred_element_type=jnp.float32)        # (Cout, L)
    h1 = jnp.maximum(jnp.dot(wc_ref[...], fs, preferred_element_type=jnp.float32)
                     + bc_ref[...], 0.0)
    logits = (jnp.dot(wct_ref[...], h1, preferred_element_type=jnp.float32)
              + bct_ref[...])
    gate = pl.reciprocal(1.0 + jnp.exp(-logits), approx=True)   # sigmoid via EUP recip
    o_ref[0] = z * gate


# ----------------------------------------------------------------------------
# host-precomputed static tables (constant-folded under jit)
# ----------------------------------------------------------------------------
def _conv_boundary_masks(D, H, W):
    L = D * H * W
    lane = jnp.arange(L, dtype=jnp.int32)
    di, hi, wi = lane // (H * W), (lane // W) % H, lane % W
    rows = []
    for kd in (-1, 0, 1):
        for kh in (-1, 0, 1):
            for kw in (-1, 0, 1):
                rows.append((di + kd >= 0) & (di + kd < D) & (hi + kh >= 0)
                            & (hi + kh < H) & (wi + kw >= 0) & (wi + kw < W))
    return jnp.stack(rows).astype(jnp.float32).reshape(27, 1, L)


def _pe_pool_matrix(D, H, W):
    # fs = z @ M, M[l', l] = [d'=d]/(HW) + [h'=h]/(DW) + [w'=w]/(DH)
    # TODO(synk): with L-tiling, keep per-axis pools instead of the O(L^2) matrix.
    L = D * H * W
    lane = jnp.arange(L, dtype=jnp.int32)
    di, hi, wi = lane // (H * W), (lane // W) % H, lane % W
    md = (di[:, None] == di[None, :]).astype(jnp.float32) / (H * W)
    mh = (hi[:, None] == hi[None, :]).astype(jnp.float32) / (D * W)
    mw = (wi[:, None] == wi[None, :]).astype(jnp.float32) / (D * H)
    return md + mh + mw                                          # (L, L) f32


def _group_matrix(c, groups, denom):
    gi = jnp.arange(c) // (c // groups)
    return (gi[:, None] == gi[None, :]).astype(jnp.float32) / denom


# ----------------------------------------------------------------------------
# host wrapper
# ----------------------------------------------------------------------------
def down_forward(x, kparams, *, groups=8, eps=1e-5):
    """x: (B, Cin, D, H, W) f32 -> (B, Cout, D//2, H//2, W//2) f32."""
    b, cin, d0, h0, w0 = x.shape
    dp, hp, wp = d0 // 2, h0 // 2, w0 // 2
    L = dp * hp * wp
    cout = kparams["b1"].shape[0]

    # MaxPool3d(2,2,2) as one XLA reduce_window pass (no x8 HBM gather); the fused
    # Pallas kernel then consumes only the pooled (B, Cin, L) tensor.
    xp = lax.reduce_window(x, -jnp.inf, lax.max,
                           (1, 1, 2, 2, 2), (1, 1, 2, 2, 2), "VALID")
    xp = xp.reshape(b, cin, L)

    masks = _conv_boundary_masks(dp, hp, wp)                     # (27, 1, L) f32
    pem = _pe_pool_matrix(dp, hp, wp)                            # (L, L)     f32
    gmin = _group_matrix(cin, groups, (cin // groups) * L)       # (Cin, Cin) f32
    gmout = _group_matrix(cout, groups, (cout // groups) * L)    # (Cout, Cout) f32

    worder = ("w1", "b1", "w2", "b2", "wsk", "g1w", "g1b", "g2w", "g2b",
              "gsw", "gsb", "wc", "bc", "wct", "bct")
    weights = [kparams[k] for k in worder] + [gmin, gmout, masks, pem]

    def full_spec(shape):
        n = len(shape)
        return pl.BlockSpec(shape, lambda i, n=n: (0,) * n)

    kernel = functools.partial(_down_kernel, H=hp, W=wp, eps=eps)

    flops = 2 * b * L * (27 * cin * cout + 27 * cout * cout + cin * cout
                         + cout * L + cout * cout)
    bytes_accessed = (xp.size * 4 + b * cout * L * 4
                      + sum(int(w.size) * w.dtype.itemsize for w in weights))

    out = pl.pallas_call(
        kernel,
        out_shape=jax.ShapeDtypeStruct((b, cout, L), jnp.float32),
        grid=(b,),
        in_specs=[pl.BlockSpec((1, cin, L), lambda i: (i, 0, 0))]
                 + [full_spec(w.shape) for w in weights],
        out_specs=pl.BlockSpec((1, cout, L), lambda i: (i, 0, 0)),
        compiler_params=pltpu.CompilerParams(dimension_semantics=("parallel",)),
        cost_estimate=pl.CostEstimate(flops=int(flops),
                                      transcendentals=int(b * cout * L),
                                      bytes_accessed=int(bytes_accessed)),
    )(xp, *weights)
    return out.reshape(b, cout, dp, hp, wp)


# ----------------------------------------------------------------------------
# parameters: torch-layout init + kernel-layout prep
# ----------------------------------------------------------------------------
def init_params(key, cin, cout):
    cr = cout // 2
    ks = iter(jax.random.split(key, 15))

    def nrm(shape, scale):
        return jax.random.normal(next(ks), shape, jnp.float32) * scale

    return dict(
        conv1_w=nrm((cout, cin, 3, 3, 3), (cin * 27) ** -0.5),
        conv1_b=nrm((cout,), 0.05),
        conv2_w=nrm((cout, cout, 3, 3, 3), (cout * 27) ** -0.5),
        conv2_b=nrm((cout,), 0.05),
        skip_w=nrm((cout, cin), cin ** -0.5),
        gn1_w=1.0 + nrm((cin,), 0.1), gn1_b=nrm((cin,), 0.1),
        gn2_w=1.0 + nrm((cout,), 0.1), gn2_b=nrm((cout,), 0.1),
        gns_w=1.0 + nrm((cout,), 0.1), gns_b=nrm((cout,), 0.1),
        pe_c_w=nrm((cr, cout), cout ** -0.5), pe_c_b=nrm((cr,), 0.05),
        pe_ct_w=nrm((cout, cr), cr ** -0.5), pe_ct_b=nrm((cout,), 0.05),
    )


def prep_params(p):
    """torch layout -> kernel layout.

    Conv weights are flattened to (Cout, 27*Cin) bf16 with K ordered [tap, cin],
    matching the in-kernel stacking order (tap-major kd, kh, kw)."""
    def prep_conv(w5):
        cout, cin = w5.shape[:2]
        return (jnp.transpose(w5, (0, 2, 3, 4, 1))
                .reshape(cout, 27 * cin).astype(jnp.bfloat16))

    def col(v):
        return v.reshape(-1, 1).astype(jnp.float32)

    return dict(
        w1=prep_conv(p["conv1_w"]), b1=col(p["conv1_b"]),
        w2=prep_conv(p["conv2_w"]), b2=col(p["conv2_b"]),
        wsk=p["skip_w"].astype(jnp.float32),
        g1w=col(p["gn1_w"]), g1b=col(p["gn1_b"]),
        g2w=col(p["gn2_w"]), g2b=col(p["gn2_b"]),
        gsw=col(p["gns_w"]), gsb=col(p["gns_b"]),
        wc=p["pe_c_w"].astype(jnp.float32), bc=col(p["pe_c_b"]),
        wct=p["pe_ct_w"].astype(jnp.float32), bct=col(p["pe_ct_b"]),
    )


# ----------------------------------------------------------------------------
# pure-JAX reference (torch semantics) for validation
# ----------------------------------------------------------------------------
def down_forward_ref(x, p, *, groups=8, eps=1e-5):
    xp = lax.reduce_window(x, -jnp.inf, lax.max,
                           (1, 1, 2, 2, 2), (1, 1, 2, 2, 2), "VALID")

    def gn(t, w, b):
        bb, c = t.shape[:2]
        sp = t.shape[2:]
        tg = t.reshape(bb, groups, c // groups, *sp)
        m = jnp.mean(tg, axis=(2, 3, 4, 5), keepdims=True)
        v = jnp.mean((tg - m) ** 2, axis=(2, 3, 4, 5), keepdims=True)
        tn = ((tg - m) * lax.rsqrt(v + eps)).reshape(bb, c, *sp)
        return tn * w.reshape(1, c, 1, 1, 1) + b.reshape(1, c, 1, 1, 1)

    def conv3(t, w5, bias):
        y = lax.conv_general_dilated(t, w5, (1, 1, 1), [(1, 1)] * 3,
                                     dimension_numbers=("NCDHW", "OIDHW", "NCDHW"))
        return y + bias.reshape(1, -1, 1, 1, 1)

    r1 = jax.nn.relu(gn(xp, p["gn1_w"], p["gn1_b"]))
    c1 = conv3(r1, p["conv1_w"], p["conv1_b"])
    r2 = jax.nn.relu(gn(c1, p["gn2_w"], p["gn2_b"]))
    c2 = conv3(r2, p["conv2_w"], p["conv2_b"])
    sk = gn(jnp.einsum("oc,bcdhw->bodhw", p["skip_w"], xp), p["gns_w"], p["gns_b"])
    z = c2 + sk
    fs = (jnp.mean(z, axis=(3, 4), keepdims=True)
          + jnp.mean(z, axis=(2, 4), keepdims=True)
          + jnp.mean(z, axis=(2, 3), keepdims=True))
    h1 = jax.nn.relu(jnp.einsum("rc,bcdhw->brdhw", p["pe_c_w"], fs)
                     + p["pe_c_b"].reshape(1, -1, 1, 1, 1))
    gate = jax.nn.sigmoid(jnp.einsum("cr,brdhw->bcdhw", p["pe_ct_w"], h1)
                          + p["pe_ct_b"].reshape(1, -1, 1, 1, 1))
    return z * gate


if __name__ == "__main__":
    B, CIN, COUT = 2, 16, 32
    D0, H0, W0 = 4, 16, 16          # pooled volume (2, 8, 8) -> L = 128 (lane-dense)

    key = jax.random.PRNGKey(0)
    kx, kp = jax.random.split(key)
    x = jax.random.normal(kx, (B, CIN, D0, H0, W0), jnp.float32)
    tparams = init_params(kp, CIN, COUT)
    kparams = prep_params(tparams)

    y = jax.block_until_ready(jax.jit(down_forward)(x, kparams))
    assert y.shape == (B, COUT, D0 // 2, H0 // 2, W0 // 2)
    assert bool(jnp.all(jnp.isfinite(y)))

    # validate against the pure-JAX reference (bf16 conv operands -> loose tolerance)
    y_ref = down_forward_ref(x, tparams)
    err = jnp.abs(y - y_ref)
    ok = bool(jnp.all(err <= 5e-2 + 5e-2 * jnp.abs(y_ref)))
    assert ok, f"mismatch vs reference: max abs err = {float(jnp.max(err))}"

    print("KERNEL_OK")
</pallas_src>

<mosaic_0001>
module attributes {stable_mosaic.version = 11 : i64} {
  func.func @_down_kernel(%arg0: i32, %arg1: memref<1x16x128xf32, #tpu.memory_space<vmem>>, %arg2: memref<32x432xbf16, #tpu.memory_space<vmem>>, %arg3: memref<32x1xf32, #tpu.memory_space<vmem>>, %arg4: memref<32x864xbf16, #tpu.memory_space<vmem>>, %arg5: memref<32x1xf32, #tpu.memory_space<vmem>>, %arg6: memref<32x16xf32, #tpu.memory_space<vmem>>, %arg7: memref<16x1xf32, #tpu.memory_space<vmem>>, %arg8: memref<16x1xf32, #tpu.memory_space<vmem>>, %arg9: memref<32x1xf32, #tpu.memory_space<vmem>>, %arg10: memref<32x1xf32, #tpu.memory_space<vmem>>, %arg11: memref<32x1xf32, #tpu.memory_space<vmem>>, %arg12: memref<32x1xf32, #tpu.memory_space<vmem>>, %arg13: memref<16x32xf32, #tpu.memory_space<vmem>>, %arg14: memref<16x1xf32, #tpu.memory_space<vmem>>, %arg15: memref<32x16xf32, #tpu.memory_space<vmem>>, %arg16: memref<32x1xf32, #tpu.memory_space<vmem>>, %arg17: memref<16x16xf32, #tpu.memory_space<vmem>>, %arg18: memref<32x32xf32, #tpu.memory_space<vmem>>, %arg19: memref<27x1x128xf32, #tpu.memory_space<vmem>>, %arg20: memref<128x128xf32, #tpu.memory_space<vmem>>, %arg21: memref<1x32x128xf32, #tpu.memory_space<vmem>>) attributes {dimension_semantics = [#tpu.dimension_semantics<parallel>], iteration_bounds = array<i64: 2>, scalar_prefetch = 0 : i64, scratch_operands = 0 : i64, tpu.core_type = #tpu.core_type<tc>, window_params = [{transform_indices = @transform_0, window_bounds = array<i64: 1, 16, 128>}, {pipeline_mode = #tpu.pipeline_mode<synchronous>, transform_indices = @transform_1, window_bounds = array<i64: 32, 432>}, {pipeline_mode = #tpu.pipeline_mode<synchronous>, transform_indices = @transform_2, window_bounds = array<i64: 32, 1>}, {pipeline_mode = #tpu.pipeline_mode<synchronous>, transform_indices = @transform_3, window_bounds = array<i64: 32, 864>}, {pipeline_mode = #tpu.pipeline_mode<synchronous>, transform_indices = @transform_4, window_bounds = array<i64: 32, 1>}, {pipeline_mode = #tpu.pipeline_mode<synchronous>, transform_indices = @transform_5, window_bounds = array<i64: 32, 16>}, {pipeline_mode = #tpu.pipeline_mode<synchronous>, transform_indices = @transform_6, window_bounds = array<i64: 16, 1>}, {pipeline_mode = #tpu.pipeline_mode<synchronous>, transform_indices = @transform_7, window_bounds = array<i64: 16, 1>}, {pipeline_mode = #tpu.pipeline_mode<synchronous>, transform_indices = @transform_8, window_bounds = array<i64: 32, 1>}, {pipeline_mode = #tpu.pipeline_mode<synchronous>, transform_indices = @transform_9, window_bounds = array<i64: 32, 1>}, {pipeline_mode = #tpu.pipeline_mode<synchronous>, transform_indices = @transform_10, window_bounds = array<i64: 32, 1>}, {pipeline_mode = #tpu.pipeline_mode<synchronous>, transform_indices = @transform_11, window_bounds = array<i64: 32, 1>}, {pipeline_mode = #tpu.pipeline_mode<synchronous>, transform_indices = @transform_12, window_bounds = array<i64: 16, 32>}, {pipeline_mode = #tpu.pipeline_mode<synchronous>, transform_indices = @transform_13, window_bounds = array<i64: 16, 1>}, {pipeline_mode = #tpu.pipeline_mode<synchronous>, transform_indices = @transform_14, window_bounds = array<i64: 32, 16>}, {pipeline_mode = #tpu.pipeline_mode<synchronous>, transform_indices = @transform_15, window_bounds = array<i64: 32, 1>}, {pipeline_mode = #tpu.pipeline_mode<synchronous>, transform_indices = @transform_16, window_bounds = array<i64: 16, 16>}, {pipeline_mode = #tpu.pipeline_mode<synchronous>, transform_indices = @transform_17, window_bounds = array<i64: 32, 32>}, {pipeline_mode = #tpu.pipeline_mode<synchronous>, transform_indices = @transform_18, window_bounds = array<i64: 27, 1, 128>}, {pipeline_mode = #tpu.pipeline_mode<synchronous>, transform_indices = @transform_19, window_bounds = array<i64: 128, 128>}, {transform_indices = @transform_20, window_bounds = array<i64: 1, 32, 128>}]} {
    %c0 = arith.constant 0 : index
    %c0_0 = arith.constant 0 : index
    %c0_1 = arith.constant 0 : index
    %0 = vector.load %arg1[%c0, %c0_0, %c0_1] : memref<1x16x128xf32, #tpu.memory_space<vmem>>, vector<1x16x128xf32>
    %1 = vector.shape_cast %0 : vector<1x16x128xf32> to vector<16x128xf32>
    %c0_2 = arith.constant 0 : index
    %c0_3 = arith.constant 0 : index
    %2 = vector.load %arg7[%c0_2, %c0_3] : memref<16x1xf32, #tpu.memory_space<vmem>>, vector<16x1xf32>
    %c0_4 = arith.constant 0 : index
    %c0_5 = arith.constant 0 : index
    %3 = vector.load %arg8[%c0_4, %c0_5] : memref<16x1xf32, #tpu.memory_space<vmem>>, vector<16x1xf32>
    %c0_6 = arith.constant 0 : index
    %c0_7 = arith.constant 0 : index
    %4 = vector.load %arg17[%c0_6, %c0_7] : memref<16x16xf32, #tpu.memory_space<vmem>>, vector<16x16xf32>
    %cst = arith.constant dense<0.000000e+00> : vector<16xf32>
    %5 = vector.multi_reduction <add>, %1, %cst [1] : vector<16x128xf32> to vector<16xf32>
    %6 = vector.shape_cast %5 : vector<16xf32> to vector<16x1xf32>
    %7 = arith.mulf %1, %1 : vector<16x128xf32>
    %cst_8 = arith.constant dense<0.000000e+00> : vector<16xf32>
    %8 = vector.multi_reduction <add>, %7, %cst_8 [1] : vector<16x128xf32> to vector<16xf32>
    %9 = vector.shape_cast %8 : vector<16xf32> to vector<16x1xf32>
    %10 = tpu.concatenate %6, %9 in 1 : vector<16x1xf32>, vector<16x1xf32> -> vector<16x2xf32>
    %cst_9 = arith.constant dense<0.000000e+00> : vector<16x2xf32>
    %11 = tpu.matmul %4, %10, %cst_9 {dimension_numbers = #tpu.dot_dimension_numbers<[1], [0], [0], [1], [0, 0, 1, 1], [], []>} : vector<16x16xf32>, vector<16x2xf32>, vector<16x2xf32> -> vector<16x2xf32>
    %12 = vector.extract_strided_slice %11 {offsets = [0, 0], sizes = [16, 1], strides = [1, 1]} : vector<16x2xf32> to vector<16x1xf32>
    %13 = vector.extract_strided_slice %11 {offsets = [0, 1], sizes = [16, 1], strides = [1, 1]} : vector<16x2xf32> to vector<16x1xf32>
    %14 = arith.mulf %12, %12 : vector<16x1xf32>
    %15 = arith.subf %13, %14 : vector<16x1xf32>
    %cst_10 = arith.constant 0.000000e+00 : f32
    %16 = vector.broadcast %cst_10 : f32 to vector<16x1xf32>
    %17 = arith.maximumf %15, %16 : vector<16x1xf32>
    %cst_11 = arith.constant 9.99999974E-6 : f32
    %18 = vector.broadcast %cst_11 : f32 to vector<16x1xf32>
    %19 = arith.addf %17, %18 : vector<16x1xf32>
    %20 = math.rsqrt %19 : vector<16x1xf32>
    %21 = arith.mulf %2, %20 : vector<16x1xf32>
    %22 = arith.mulf %12, %21 : vector<16x1xf32>
    %23 = arith.subf %3, %22 : vector<16x1xf32>
    %24 = vector.broadcast %21 : vector<16x1xf32> to vector<16x128xf32>
    %25 = arith.mulf %1, %24 : vector<16x128xf32>
    %26 = vector.broadcast %23 : vector<16x1xf32> to vector<16x128xf32>
    %27 = arith.addf %25, %26 : vector<16x128xf32>
    %cst_12 = arith.constant 0.000000e+00 : f32
    %28 = vector.broadcast %cst_12 : f32 to vector<16x128xf32>
    %29 = arith.maximumf %27, %28 : vector<16x128xf32>
    %c0_13 = arith.constant 0 : index
    %c0_14 = arith.constant 0 : index
    %30 = vector.load %arg2[%c0_13, %c0_14] : memref<32x432xbf16, #tpu.memory_space<vmem>>, vector<32x432xbf16>
    %c0_15 = arith.constant 0 : index
    %c0_16 = arith.constant 0 : index
    %31 = vector.load %arg3[%c0_15, %c0_16] : memref<32x1xf32, #tpu.memory_space<vmem>>, vector<32x1xf32>
    %c73_i32 = arith.constant 73 : i32
    %32 = tpu.dynamic_rotate %29 by %c73_i32 dim 1 : vector<16x128xf32>, i32 -> vector<16x128xf32>
    %c0_17 = arith.constant 0 : index
    %c0_18 = arith.constant 0 : index
    %c0_19 = arith.constant 0 : index
    %33 = vector.load %arg19[%c0_17, %c0_18, %c0_19] : memref<27x1x128xf32, #tpu.memory_space<vmem>>, vector<1x1x128xf32>
    %34 = vector.shape_cast %33 : vector<1x1x128xf32> to vector<1x128xf32>
    %35 = vector.broadcast %34 : vector<1x128xf32> to vector<16x128xf32>
    %36 = arith.mulf %32, %35 : vector<16x128xf32>
    %37 = arith.truncf %36 : vector<16x128xf32> to vector<16x128xbf16>
    %c72_i32 = arith.constant 72 : i32
    %38 = tpu.dynamic_rotate %29 by %c72_i32 dim 1 : vector<16x128xf32>, i32 -> vector<16x128xf32>
    %c1 = arith.constant 1 : index
    %c0_20 = arith.constant 0 : index
    %c0_21 = arith.constant 0 : index
    %39 = vector.load %arg19[%c1, %c0_20, %c0_21] : memref<27x1x128xf32, #tpu.memory_space<vmem>>, vector<1x1x128xf32>
    %40 = vector.shape_cast %39 : vector<1x1x128xf32> to vector<1x128xf32>
    %41 = vector.broadcast %40 : vector<1x128xf32> to vector<16x128xf32>
    %42 = arith.mulf %38, %41 : vector<16x128xf32>
    %43 = arith.truncf %42 : vector<16x128xf32> to vector<16x128xbf16>
    %c71_i32 = arith.constant 71 : i32
    %44 = tpu.dynamic_rotate %29 by %c71_i32 dim 1 : vector<16x128xf32>, i32 -> vector<16x128xf32>
    %c2 = arith.constant 2 : index
    %c0_22 = arith.constant 0 : index
    %c0_23 = arith.constant 0 : index
    %45 = vector.load %arg19[%c2, %c0_22, %c0_23] : memref<27x1x128xf32, #tpu.memory_space<vmem>>, vector<1x1x128xf32>
    %46 = vector.shape_cast %45 : vector<1x1x128xf32> to vector<1x128xf32>
    %47 = vector.broadcast %46 : vector<1x128xf32> to vector<16x128xf32>
    %48 = arith.mulf %44, %47 : vector<16x128xf32>
    %49 = arith.truncf %48 : vector<16x128xf32> to vector<16x128xbf16>
    %c65_i32 = arith.constant 65 : i32
    %50 = tpu.dynamic_rotate %29 by %c65_i32 dim 1 : vector<16x128xf32>, i32 -> vector<16x128xf32>
    %c3 = arith.constant 3 : index
    %c0_24 = arith.constant 0 : index
    %c0_25 = arith.constant 0 : index
    %51 = vector.load %arg19[%c3, %c0_24, %c0_25] : memref<27x1x128xf32, #tpu.memory_space<vmem>>, vector<1x1x128xf32>
    %52 = vector.shape_cast %51 : vector<1x1x128xf32> to vector<1x128xf32>
    %53 = vector.broadcast %52 : vector<1x128xf32> to vector<16x128xf32>
    %54 = arith.mulf %50, %53 : vector<16x128xf32>
    %55 = arith.truncf %54 : vector<16x128xf32> to vector<16x128xbf16>
    %c64_i32 = arith.constant 64 : i32
    %56 = tpu.dynamic_rotate %29 by %c64_i32 dim 1 : vector<16x128xf32>, i32 -> vector<16x128xf32>
    %c4 = arith.constant 4 : index
    %c0_26 = arith.constant 0 : index
    %c0_27 = arith.constant 0 : index
    %57 = vector.load %arg19[%c4, %c0_26, %c0_27] : memref<27x1x128xf32, #tpu.memory_space<vmem>>, vector<1x1x128xf32>
    %58 = vector.shape_cast %57 : vector<1x1x128xf32> to vector<1x128xf32>
    %59 = vector.broadcast %58 : vector<1x128xf32> to vector<16x128xf32>
    %60 = arith.mulf %56, %59 : vector<16x128xf32>
    %61 = arith.truncf %60 : vector<16x128xf32> to vector<16x128xbf16>
    %c63_i32 = arith.constant 63 : i32
    %62 = tpu.dynamic_rotate %29 by %c63_i32 dim 1 : vector<16x128xf32>, i32 -> vector<16x128xf32>
    %c5 = arith.constant 5 : index
    %c0_28 = arith.constant 0 : index
    %c0_29 = arith.constant 0 : index
    %63 = vector.load %arg19[%c5, %c0_28, %c0_29] : memref<27x1x128xf32, #tpu.memory_space<vmem>>, vector<1x1x128xf32>
    %64 = vector.shape_cast %63 : vector<1x1x128xf32> to vector<1x128xf32>
    %65 = vector.broadcast %64 : vector<1x128xf32> to vector<16x128xf32>
    %66 = arith.mulf %62, %65 : vector<16x128xf32>
    %67 = arith.truncf %66 : vector<16x128xf32> to vector<16x128xbf16>
    %c57_i32 = arith.constant 57 : i32
    %68 = tpu.dynamic_rotate %29 by %c57_i32 dim 1 : vector<16x128xf32>, i32 -> vector<16x128xf32>
    %c6 = arith.constant 6 : index
    %c0_30 = arith.constant 0 : index
    %c0_31 = arith.constant 0 : index
    %69 = vector.load %arg19[%c6, %c0_30, %c0_31] : memref<27x1x128xf32, #tpu.memory_space<vmem>>, vector<1x1x128xf32>
    %70 = vector.shape_cast %69 : vector<1x1x128xf32> to vector<1x128xf32>
    %71 = vector.broadcast %70 : vector<1x128xf32> to vector<16x128xf32>
    %72 = arith.mulf %68, %71 : vector<16x128xf32>
    %73 = arith.truncf %72 : vector<16x128xf32> to vector<16x128xbf16>
    %c56_i32 = arith.constant 56 : i32
    %74 = tpu.dynamic_rotate %29 by %c56_i32 dim 1 : vector<16x128xf32>, i32 -> vector<16x128xf32>
    %c7 = arith.constant 7 : index
    %c0_32 = arith.constant 0 : index
    %c0_33 = arith.constant 0 : index
    %75 = vector.load %arg19[%c7, %c0_32, %c0_33] : memref<27x1x128xf32, #tpu.memory_space<vmem>>, vector<1x1x128xf32>
    %76 = vector.shape_cast %75 : vector<1x1x128xf32> to vector<1x128xf32>
    %77 = vector.broadcast %76 : vector<1x128xf32> to vector<16x128xf32>
    %78 = arith.mulf %74, %77 : vector<16x128xf32>
    %79 = arith.truncf %78 : vector<16x128xf32> to vector<16x128xbf16>
    %c55_i32 = arith.constant 55 : i32
    %80 = tpu.dynamic_rotate %29 by %c55_i32 dim 1 : vector<16x128xf32>, i32 -> vector<16x128xf32>
    %c8 = arith.constant 8 : index
    %c0_34 = arith.constant 0 : index
    %c0_35 = arith.constant 0 : index
    %81 = vector.load %arg19[%c8, %c0_34, %c0_35] : memref<27x1x128xf32, #tpu.memory_space<vmem>>, vector<1x1x128xf32>
    %82 = vector.shape_cast %81 : vector<1x1x128xf32> to vector<1x128xf32>
    %83 = vector.broadcast %82 : vector<1x128xf32> to vector<16x128xf32>
    %84 = arith.mulf %80, %83 : vector<16x128xf32>
    %85 = arith.truncf %84 : vector<16x128xf32> to vector<16x128xbf16>
    %c9_i32 = arith.constant 9 : i32
    %86 = tpu.dynamic_rotate %29 by %c9_i32 dim 1 : vector<16x128xf32>, i32 -> vector<16x128xf32>
    %c9 = arith.constant 9 : index
    %c0_36 = arith.constant 0 : index
    %c0_37 = arith.constant 0 : index
    %87 = vector.load %arg19[%c9, %c0_36, %c0_37] : memref<27x1x128xf32, #tpu.memory_space<vmem>>, vector<1x1x128xf32>
    %88 = vector.shape_cast %87 : vector<1x1x128xf32> to vector<1x128xf32>
    %89 = vector.broadcast %88 : vector<1x128xf32> to vector<16x128xf32>
    %90 = arith.mulf %86, %89 : vector<16x128xf32>
    %91 = arith.truncf %90 : vector<16x128xf32> to vector<16x128xbf16>
    %c8_i32 = arith.constant 8 : i32
    %92 = tpu.dynamic_rotate %29 by %c8_i32 dim 1 : vector<16x128xf32>, i32 -> vector<16x128xf32>
    %c10 = arith.constant 10 : index
    %c0_38 = arith.constant 0 : index
    %c0_39 = arith.constant 0 : index
    %93 = vector.load %arg19[%c10, %c0_38, %c0_39] : memref<27x1x128xf32, #tpu.memory_space<vmem>>, vector<1x1x128xf32>
    %94 = vector.shape_cast %93 : vector<1x1x128xf32> to vector<1x128xf32>
    %95 = vector.broadcast %94 : vector<1x128xf32> to vector<16x128xf32>
    %96 = arith.mulf %92, %95 : vector<16x128xf32>
    %97 = arith.truncf %96 : vector<16x128xf32> to vector<16x128xbf16>
    %c7_i32 = arith.constant 7 : i32
    %98 = tpu.dynamic_rotate %29 by %c7_i32 dim 1 : vector<16x128xf32>, i32 -> vector<16x128xf32>
    %c11 = arith.constant 11 : index
    %c0_40 = arith.constant 0 : index
    %c0_41 = arith.constant 0 : index
    %99 = vector.load %arg19[%c11, %c0_40, %c0_41] : memref<27x1x128xf32, #tpu.memory_space<vmem>>, vector<1x1x128xf32>
    %100 = vector.shape_cast %99 : vector<1x1x128xf32> to vector<1x128xf32>
    %101 = vector.broadcast %100 : vector<1x128xf32> to vector<16x128xf32>
    %102 = arith.mulf %98, %101 : vector<16x128xf32>
    %103 = arith.truncf %102 : vector<16x128xf32> to vector<16x128xbf16>
    %c1_i32 = arith.constant 1 : i32
    %104 = tpu.dynamic_rotate %29 by %c1_i32 dim 1 : vector<16x128xf32>, i32 -> vector<16x128xf32>
    %c12 = arith.constant 12 : index
    %c0_42 = arith.constant 0 : index
    %c0_43 = arith.constant 0 : index
    %105 = vector.load %arg19[%c12, %c0_42, %c0_43] : memref<27x1x128xf32, #tpu.memory_space<vmem>>, vector<1x1x128xf32>
    %106 = vector.shape_cast %105 : vector<1x1x128xf32> to vector<1x128xf32>
    %107 = vector.broadcast %106 : vector<1x128xf32> to vector<16x128xf32>
    %108 = arith.mulf %104, %107 : vector<16x128xf32>
    %109 = arith.truncf %108 : vector<16x128xf32> to vector<16x128xbf16>
    %110 = arith.truncf %29 : vector<16x128xf32> to vector<16x128xbf16>
    %c127_i32 = arith.constant 127 : i32
    %111 = tpu.dynamic_rotate %29 by %c127_i32 dim 1 : vector<16x128xf32>, i32 -> vector<16x128xf32>
    %c14 = arith.constant 14 : index
    %c0_44 = arith.constant 0 : index
    %c0_45 = arith.constant 0 : index
    %112 = vector.load %arg19[%c14, %c0_44, %c0_45] : memref<27x1x128xf32, #tpu.memory_space<vmem>>, vector<1x1x128xf32>
    %113 = vector.shape_cast %112 : vector<1x1x128xf32> to vector<1x128xf32>
    %114 = vector.broadcast %113 : vector<1x128xf32> to vector<16x128xf32>
    %115 = arith.mulf %111, %114 : vector<16x128xf32>
    %116 = arith.truncf %115 : vector<16x128xf32> to vector<16x128xbf16>
    %c121_i32 = arith.constant 121 : i32
    %117 = tpu.dynamic_rotate %29 by %c121_i32 dim 1 : vector<16x128xf32>, i32 -> vector<16x128xf32>
    %c15 = arith.constant 15 : index
    %c0_46 = arith.constant 0 : index
    %c0_47 = arith.constant 0 : index
    %118 = vector.load %arg19[%c15, %c0_46, %c0_47] : memref<27x1x128xf32, #tpu.memory_space<vmem>>, vector<1x1x128xf32>
    %119 = vector.shape_cast %118 : vector<1x1x128xf32> to vector<1x128xf32>
    %120 = vector.broadcast %119 : vector<1x128xf32> to vector<16x128xf32>
    %121 = arith.mulf %117, %120 : vector<16x128xf32>
    %122 = arith.truncf %121 : vector<16x128xf32> to vector<16x128xbf16>
    %c120_i32 = arith.constant 120 : i32
    %123 = tpu.dynamic_rotate %29 by %c120_i32 dim 1 : vector<16x128xf32>, i32 -> vector<16x128xf32>
    %c16 = arith.constant 16 : index
    %c0_48 = arith.constant 0 : index
    %c0_49 = arith.constant 0 : index
    %124 = vector.load %arg19[%c16, %c0_48, %c0_49] : memref<27x1x128xf32, #tpu.memory_space<vmem>>, vector<1x1x128xf32>
    %125 = vector.shape_cast %124 : vector<1x1x128xf32> to vector<1x128xf32>
    %126 = vector.broadcast %125 : vector<1x128xf32> to vector<16x128xf32>
    %127 = arith.mulf %123, %126 : vector<16x128xf32>
    %128 = arith.truncf %127 : vector<16x128xf32> to vector<16x128xbf16>
    %c119_i32 = arith.constant 119 : i32
    %129 = tpu.dynamic_rotate %29 by %c119_i32 dim 1 : vector<16x128xf32>, i32 -> vector<16x128xf32>
    %c17 = arith.constant 17 : index
    %c0_50 = arith.constant 0 : index
    %c0_51 = arith.constant 0 : index
    %130 = vector.load %arg19[%c17, %c0_50, %c0_51] : memref<27x1x128xf32, #tpu.memory_space<vmem>>, vector<1x1x128xf32>
    %131 = vector.shape_cast %130 : vector<1x1x128xf32> to vector<1x128xf32>
    %132 = vector.broadcast %131 : vector<1x128xf32> to vector<16x128xf32>
    %133 = arith.mulf %129, %132 : vector<16x128xf32>
    %134 = arith.truncf %133 : vector<16x128xf32> to vector<16x128xbf16>
    %c73_i32_52 = arith.constant 73 : i32
    %135 = tpu.dynamic_rotate %29 by %c73_i32_52 dim 1 : vector<16x128xf32>, i32 -> vector<16x128xf32>
    %c18 = arith.constant 18 : index
    %c0_53 = arith.constant 0 : index
    %c0_54 = arith.constant 0 : index
    %136 = vector.load %arg19[%c18, %c0_53, %c0_54] : memref<27x1x128xf32, #tpu.memory_space<vmem>>, vector<1x1x128xf32>
    %137 = vector.shape_cast %136 : vector<1x1x128xf32> to vector<1x128xf32>
    %138 = vector.broadcast %137 : vector<1x128xf32> to vector<16x128xf32>
    %139 = arith.mulf %135, %138 : vector<16x128xf32>
    %140 = arith.truncf %139 : vector<16x128xf32> to vector<16x128xbf16>
    %c72_i32_55 = arith.constant 72 : i32
    %141 = tpu.dynamic_rotate %29 by %c72_i32_55 dim 1 : vector<16x128xf32>, i32 -> vector<16x128xf32>
    %c19 = arith.constant 19 : index
    %c0_56 = arith.constant 0 : index
    %c0_57 = arith.constant 0 : index
    %142 = vector.load %arg19[%c19, %c0_56, %c0_57] : memref<27x1x128xf32, #tpu.memory_space<vmem>>, vector<1x1x128xf32>
    %143 = vector.shape_cast %142 : vector<1x1x128xf32> to vector<1x128xf32>
    %144 = vector.broadcast %143 : vector<1x128xf32> to vector<16x128xf32>
    %145 = arith.mulf %141, %144 : vector<16x128xf32>
    %146 = arith.truncf %145 : vector<16x128xf32> to vector<16x128xbf16>
    %c71_i32_58 = arith.constant 71 : i32
    %147 = tpu.dynamic_rotate %29 by %c71_i32_58 dim 1 : vector<16x128xf32>, i32 -> vector<16x128xf32>
    %c20 = arith.constant 20 : index
    %c0_59 = arith.constant 0 : index
    %c0_60 = arith.constant 0 : index
    %148 = vector.load %arg19[%c20, %c0_59, %c0_60] : memref<27x1x128xf32, #tpu.memory_space<vmem>>, vector<1x1x128xf32>
    %149 = vector.shape_cast %148 : vector<1x1x128xf32> to vector<1x128xf32>
    %150 = vector.broadcast %149 : vector<1x128xf32> to vector<16x128xf32>
    %151 = arith.mulf %147, %150 : vector<16x128xf32>
    %152 = arith.truncf %151 : vector<16x128xf32> to vector<16x128xbf16>
    %c65_i32_61 = arith.constant 65 : i32
    %153 = tpu.dynamic_rotate %29 by %c65_i32_61 dim 1 : vector<16x128xf32>, i32 -> vector<16x128xf32>
    %c21 = arith.constant 21 : index
    %c0_62 = arith.constant 0 : index
    %c0_63 = arith.constant 0 : index
    %154 = vector.load %arg19[%c21, %c0_62, %c0_63] : memref<27x1x128xf32, #tpu.memory_space<vmem>>, vector<1x1x128xf32>
    %155 = vector.shape_cast %154 : vector<1x1x128xf32> to vector<1x128xf32>
    %156 = vector.broadcast %155 : vector<1x128xf32> to vector<16x128xf32>
    %157 = arith.mulf %153, %156 : vector<16x128xf32>
    %158 = arith.truncf %157 : vector<16x128xf32> to vector<16x128xbf16>
    %c64_i32_64 = arith.constant 64 : i32
    %159 = tpu.dynamic_rotate %29 by %c64_i32_64 dim 1 : vector<16x128xf32>, i32 -> vector<16x128xf32>
    %c22 = arith.constant 22 : index
    %c0_65 = arith.constant 0 : index
    %c0_66 = arith.constant 0 : index
    %160 = vector.load %arg19[%c22, %c0_65, %c0_66] : memref<27x1x128xf32, #tpu.memory_space<vmem>>, vector<1x1x128xf32>
    %161 = vector.shape_cast %160 : vector<1x1x128xf32> to vector<1x128xf32>
    %162 = vector.broadcast %161 : vector<1x128xf32> to vector<16x128xf32>
    %163 = arith.mulf %159, %162 : vector<16x128xf32>
    %164 = arith.truncf %163 : vector<16x128xf32> to vector<16x128xbf16>
    %c63_i32_67 = arith.constant 63 : i32
    %165 = tpu.dynamic_rotate %29 by %c63_i32_67 dim 1 : vector<16x128xf32>, i32 -> vector<16x128xf32>
    %c23 = arith.constant 23 : index
    %c0_68 = arith.constant 0 : index
    %c0_69 = arith.constant 0 : index
    %166 = vector.load %arg19[%c23, %c0_68, %c0_69] : memref<27x1x128xf32, #tpu.memory_space<vmem>>, vector<1x1x128xf32>
    %167 = vector.shape_cast %166 : vector<1x1x128xf32> to vector<1x128xf32>
    %168 = vector.broadcast %167 : vector<1x128xf32> to vector<16x128xf32>
    %169 = arith.mulf %165, %168 : vector<16x128xf32>
    %170 = arith.truncf %169 : vector<16x128xf32> to vector<16x128xbf16>
    %c57_i32_70 = arith.constant 57 : i32
    %171 = tpu.dynamic_rotate %29 by %c57_i32_70 dim 1 : vector<16x128xf32>, i32 -> vector<16x128xf32>
    %c24 = arith.constant 24 : index
    %c0_71 = arith.constant 0 : index
    %c0_72 = arith.constant 0 : index
    %172 = vector.load %arg19[%c24, %c0_71, %c0_72] : memref<27x1x128xf32, #tpu.memory_space<vmem>>, vector<1x1x128xf32>
    %173 = vector.shape_cast %172 : vector<1x1x128xf32> to vector<1x128xf32>
    %174 = vector.broadcast %173 : vector<1x128xf32> to vector<16x128xf32>
    %175 = arith.mulf %171, %174 : vector<16x128xf32>
    %176 = arith.truncf %175 : vector<16x128xf32> to vector<16x128xbf16>
    %c56_i32_73 = arith.constant 56 : i32
    %177 = tpu.dynamic_rotate %29 by %c56_i32_73 dim 1 : vector<16x128xf32>, i32 -> vector<16x128xf32>
    %c25 = arith.constant 25 : index
    %c0_74 = arith.constant 0 : index
    %c0_75 = arith.constant 0 : index
    %178 = vector.load %arg19[%c25, %c0_74, %c0_75] : memref<27x1x128xf32, #tpu.memory_space<vmem>>, vector<1x1x128xf32>
    %179 = vector.shape_cast %178 : vector<1x1x128xf32> to vector<1x128xf32>
    %180 = vector.broadcast %179 : vector<1x128xf32> to vector<16x128xf32>
    %181 = arith.mulf %177, %180 : vector<16x128xf32>
    %182 = arith.truncf %181 : vector<16x128xf32> to vector<16x128xbf16>
    %c55_i32_76 = arith.constant 55 : i32
    %183 = tpu.dynamic_rotate %29 by %c55_i32_76 dim 1 : vector<16x128xf32>, i32 -> vector<16x128xf32>
    %c26 = arith.constant 26 : index
    %c0_77 = arith.constant 0 : index
    %c0_78 = arith.constant 0 : index
    %184 = vector.load %arg19[%c26, %c0_77, %c0_78] : memref<27x1x128xf32, #tpu.memory_space<vmem>>, vector<1x1x128xf32>
    %185 = vector.shape_cast %184 : vector<1x1x128xf32> to vector<1x128xf32>
    %186 = vector.broadcast %185 : vector<1x128xf32> to vector<16x128xf32>
    %187 = arith.mulf %183, %186 : vector<16x128xf32>
    %188 = arith.truncf %187 : vector<16x128xf32> to vector<16x128xbf16>
    %189 = tpu.concatenate %37, %43, %49, %55, %61, %67, %73, %79, %85, %91, %97, %103, %109, %110, %116, %122 in 0 : vector<16x128xbf16>, vector<16x128xbf16>, vector<16x128xbf16>, vector<16x128xbf16>, vector<16x128xbf16>, vector<16x128xbf16>, vector<16x128xbf16>, vector<16x128xbf16>, vector<16x128xbf16>, vector<16x128xbf16>, vector<16x128xbf16>, vector<16x128xbf16>, vector<16x128xbf16>, vector<16x128xbf16>, vector<16x128xbf16>, vector<16x128xbf16> -> vector<256x128xbf16>
    %190 = tpu.concatenate %128, %134, %140, %146, %152, %158, %164, %170, %176, %182, %188 in 0 : vector<16x128xbf16>, vector<16x128xbf16>, vector<16x128xbf16>, vector<16x128xbf16>, vector<16x128xbf16>, vector<16x128xbf16>, vector<16x128xbf16>, vector<16x128xbf16>, vector<16x128xbf16>, vector<16x128xbf16>, vector<16x128xbf16> -> vector<176x128xbf16>
    %191 = tpu.concatenate %189, %190 in 0 : vector<256x128xbf16>, vector<176x128xbf16> -> vector<432x128xbf16>
    %cst_79 = arith.constant dense<0.000000e+00> : vector<32x128xf32>
    %192 = tpu.matmul %30, %191, %cst_79 {dimension_numbers = #tpu.dot_dimension_numbers<[1], [0], [0], [1], [0, 0, 1, 1], [], []>} : vector<32x432xbf16>, vector<432x128xbf16>, vector<32x128xf32> -> vector<32x128xf32>
    %193 = vector.broadcast %31 : vector<32x1xf32> to vector<32x128xf32>
    %194 = arith.addf %192, %193 : vector<32x128xf32>
    %c0_80 = arith.constant 0 : index
    %c0_81 = arith.constant 0 : index
    %195 = vector.load %arg9[%c0_80, %c0_81] : memref<32x1xf32, #tpu.memory_space<vmem>>, vector<32x1xf32>
    %c0_82 = arith.constant 0 : index
    %c0_83 = arith.constant 0 : index
    %196 = vector.load %arg10[%c0_82, %c0_83] : memref<32x1xf32, #tpu.memory_space<vmem>>, vector<32x1xf32>
    %c0_84 = arith.constant 0 : index
    %c0_85 = arith.constant 0 : index
    %197 = vector.load %arg18[%c0_84, %c0_85] : memref<32x32xf32, #tpu.memory_space<vmem>>, vector<32x32xf32>
    %cst_86 = arith.constant dense<0.000000e+00> : vector<32xf32>
    %198 = vector.multi_reduction <add>, %194, %cst_86 [1] : vector<32x128xf32> to vector<32xf32>
    %199 = vector.shape_cast %198 : vector<32xf32> to vector<32x1xf32>
    %200 = arith.mulf %194, %194 : vector<32x128xf32>
    %cst_87 = arith.constant dense<0.000000e+00> : vector<32xf32>
    %201 = vector.multi_reduction <add>, %200, %cst_87 [1] : vector<32x128xf32> to vector<32xf32>
    %202 = vector.shape_cast %201 : vector<32xf32> to vector<32x1xf32>
    %203 = tpu.concatenate %199, %202 in 1 : vector<32x1xf32>, vector<32x1xf32> -> vector<32x2xf32>
    %cst_88 = arith.constant dense<0.000000e+00> : vector<32x2xf32>
    %204 = tpu.matmul %197, %203, %cst_88 {dimension_numbers = #tpu.dot_dimension_numbers<[1], [0], [0], [1], [0, 0, 1, 1], [], []>} : vector<32x32xf32>, vector<32x2xf32>, vector<32x2xf32> -> vector<32x2xf32>
    %205 = vector.extract_strided_slice %204 {offsets = [0, 0], sizes = [32, 1], strides = [1, 1]} : vector<32x2xf32> to vector<32x1xf32>
    %206 = vector.extract_strided_slice %204 {offsets = [0, 1], sizes = [32, 1], strides = [1, 1]} : vector<32x2xf32> to vector<32x1xf32>
    %207 = arith.mulf %205, %205 : vector<32x1xf32>
    %208 = arith.subf %206, %207 : vector<32x1xf32>
    %cst_89 = arith.constant 0.000000e+00 : f32
    %209 = vector.broadcast %cst_89 : f32 to vector<32x1xf32>
    %210 = arith.maximumf %208, %209 : vector<32x1xf32>
    %cst_90 = arith.constant 9.99999974E-6 : f32
    %211 = vector.broadcast %cst_90 : f32 to vector<32x1xf32>
    %212 = arith.addf %210, %211 : vector<32x1xf32>
    %213 = math.rsqrt %212 : vector<32x1xf32>
    %214 = arith.mulf %195, %213 : vector<32x1xf32>
    %215 = arith.mulf %205, %214 : vector<32x1xf32>
    %216 = arith.subf %196, %215 : vector<32x1xf32>
    %217 = vector.broadcast %214 : vector<32x1xf32> to vector<32x128xf32>
    %218 = arith.mulf %194, %217 : vector<32x128xf32>
    %219 = vector.broadcast %216 : vector<32x1xf32> to vector<32x128xf32>
    %220 = arith.addf %218, %219 : vector<32x128xf32>
    %cst_91 = arith.constant 0.000000e+00 : f32
    %221 = vector.broadcast %cst_91 : f32 to vector<32x128xf32>
    %222 = arith.maximumf %220, %221 : vector<32x128xf32>
    %c0_92 = arith.constant 0 : index
    %c0_93 = arith.constant 0 : index
    %223 = vector.load %arg4[%c0_92, %c0_93] : memref<32x864xbf16, #tpu.memory_space<vmem>>, vector<32x864xbf16>
    %c0_94 = arith.constant 0 : index
    %c0_95 = arith.constant 0 : index
    %224 = vector.load %arg5[%c0_94, %c0_95] : memref<32x1xf32, #tpu.memory_space<vmem>>, vector<32x1xf32>
    %c73_i32_96 = arith.constant 73 : i32
    %225 = tpu.dynamic_rotate %222 by %c73_i32_96 dim 1 : vector<32x128xf32>, i32 -> vector<32x128xf32>
    %c0_97 = arith.constant 0 : index
    %c0_98 = arith.constant 0 : index
    %c0_99 = arith.constant 0 : index
    %226 = vector.load %arg19[%c0_97, %c0_98, %c0_99] : memref<27x1x128xf32, #tpu.memory_space<vmem>>, vector<1x1x128xf32>
    %227 = vector.shape_cast %226 : vector<1x1x128xf32> to vector<1x128xf32>
    %228 = vector.broadcast %227 : vector<1x128xf32> to vector<32x128xf32>
    %229 = arith.mulf %225, %228 : vector<32x128xf32>
    %230 = arith.truncf %229 : vector<32x128xf32> to vector<32x128xbf16>
    %c72_i32_100 = arith.constant 72 : i32
    %231 = tpu.dynamic_rotate %222 by %c72_i32_100 dim 1 : vector<32x128xf32>, i32 -> vector<32x128xf32>
    %c1_101 = arith.constant 1 : index
    %c0_102 = arith.constant 0 : index
    %c0_103 = arith.constant 0 : index
    %232 = vector.load %arg19[%c1_101, %c0_102, %c0_103] : memref<27x1x128xf32, #tpu.memory_space<vmem>>, vector<1x1x128xf32>
    %233 = vector.shape_cast %232 : vector<1x1x128xf32> to vector<1x128xf32>
    %234 = vector.broadcast %233 : vector<1x128xf32> to vector<32x128xf32>
    %235 = arith.mulf %231, %234 : vector<32x128xf32>
    %236 = arith.truncf %235 : vector<32x128xf32> to vector<32x128xbf16>
    %c71_i32_104 = arith.constant 71 : i32
    %237 = tpu.dynamic_rotate %222 by %c71_i32_104 dim 1 : vector<32x128xf32>, i32 -> vector<32x128xf32>
    %c2_105 = arith.constant 2 : index
    %c0_106 = arith.constant 0 : index
    %c0_107 = arith.constant 0 : index
    %238 = vector.load %arg19[%c2_105, %c0_106, %c0_107] : memref<27x1x128xf32, #tpu.memory_space<vmem>>, vector<1x1x128xf32>
    %239 = vector.shape_cast %238 : vector<1x1x128xf32> to vector<1x128xf32>
    %240 = vector.broadcast %239 : vector<1x128xf32> to vector<32x128xf32>
    %241 = arith.mulf %237, %240 : vector<32x128xf32>
    %242 = arith.truncf %241 : vector<32x128xf32> to vector<32x128xbf16>
    %c65_i32_108 = arith.constant 65 : i32
    %243 = tpu.dynamic_rotate %222 by %c65_i32_108 dim 1 : vector<32x128xf32>, i32 -> vector<32x128xf32>
    %c3_109 = arith.constant 3 : index
    %c0_110 = arith.constant 0 : index
    %c0_111 = arith.constant 0 : index
    %244 = vector.load %arg19[%c3_109, %c0_110, %c0_111] : memref<27x1x128xf32, #tpu.memory_space<vmem>>, vector<1x1x128xf32>
    %245 = vector.shape_cast %244 : vector<1x1x128xf32> to vector<1x128xf32>
    %246 = vector.broadcast %245 : vector<1x128xf32> to vector<32x128xf32>
    %247 = arith.mulf %243, %246 : vector<32x128xf32>
    %248 = arith.truncf %247 : vector<32x128xf32> to vector<32x128xbf16>
    %c64_i32_112 = arith.constant 64 : i32
    %249 = tpu.dynamic_rotate %222 by %c64_i32_112 dim 1 : vector<32x128xf32>, i32 -> vector<32x128xf32>
    %c4_113 = arith.constant 4 : index
    %c0_114 = arith.constant 0 : index
    %c0_115 = arith.constant 0 : index
    %250 = vector.load %arg19[%c4_113, %c0_114, %c0_115] : memref<27x1x128xf32, #tpu.memory_space<vmem>>, vector<1x1x128xf32>
    %251 = vector.shape_cast %250 : vector<1x1x128xf32> to vector<1x128xf32>
    %252 = vector.broadcast %251 : vector<1x128xf32> to vector<32x128xf32>
    %253 = arith.mulf %249, %252 : vector<32x128xf32>
    %254 = arith.truncf %253 : vector<32x128xf32> to vector<32x128xbf16>
    %c63_i32_116 = arith.constant 63 : i32
    %255 = tpu.dynamic_rotate %222 by %c63_i32_116 dim 1 : vector<32x128xf32>, i32 -> vector<32x128xf32>
    %c5_117 = arith.constant 5 : index
    %c0_118 = arith.constant 0 : index
    %c0_119 = arith.constant 0 : index
    %256 = vector.load %arg19[%c5_117, %c0_118, %c0_119] : memref<27x1x128xf32, #tpu.memory_space<vmem>>, vector<1x1x128xf32>
    %257 = vector.shape_cast %256 : vector<1x1x128xf32> to vector<1x128xf32>
    %258 = vector.broadcast %257 : vector<1x128xf32> to vector<32x128xf32>
    %259 = arith.mulf %255, %258 : vector<32x128xf32>
    %260 = arith.truncf %259 : vector<32x128xf32> to vector<32x128xbf16>
    %c57_i32_120 = arith.constant 57 : i32
    %261 = tpu.dynamic_rotate %222 by %c57_i32_120 dim 1 : vector<32x128xf32>, i32 -> vector<32x128xf32>
    %c6_121 = arith.constant 6 : index
    %c0_122 = arith.constant 0 : index
    %c0_123 = arith.constant 0 : index
    %262 = vector.load %arg19[%c6_121, %c0_122, %c0_123] : memref<27x1x128xf32, #tpu.memory_space<vmem>>, vector<1x1x128xf32>
    %263 = vector.shape_cast %262 : vector<1x1x128xf32> to vector<1x128xf32>
    %264 = vector.broadcast %263 : vector<1x128xf32> to vector<32x128xf32>
    %265 = arith.mulf %261, %264 : vector<32x128xf32>
    %266 = arith.truncf %265 : vector<32x128xf32> to vector<32x128xbf16>
    %c56_i32_124 = arith.constant 56 : i32
    %267 = tpu.dynamic_rotate %222 by %c56_i32_124 dim 1 : vector<32x128xf32>, i32 -> vector<32x128xf32>
    %c7_125 = arith.constant 7 : index
    %c0_126 = arith.constant 0 : index
    %c0_127 = arith.constant 0 : index
    %268 = vector.load %arg19[%c7_125, %c0_126, %c0_127] : memref<27x1x128xf32, #tpu.memory_space<vmem>>, vector<1x1x128xf32>
    %269 = vector.shape_cast %268 : vector<1x1x128xf32> to vector<1x128xf32>
    %270 = vector.broadcast %269 : vector<1x128xf32> to vector<32x128xf32>
    %271 = arith.mulf %267, %270 : vector<32x128xf32>
    %272 = arith.truncf %271 : vector<32x128xf32> to vector<32x128xbf16>
    %c55_i32_128 = arith.constant 55 : i32
    %273 = tpu.dynamic_rotate %222 by %c55_i32_128 dim 1 : vector<32x128xf32>, i32 -> vector<32x128xf32>
    %c8_129 = arith.constant 8 : index
    %c0_130 = arith.constant 0 : index
    %c0_131 = arith.constant 0 : index
    %274 = vector.load %arg19[%c8_129, %c0_130, %c0_131] : memref<27x1x128xf32, #tpu.memory_space<vmem>>, vector<1x1x128xf32>
    %275 = vector.shape_cast %274 : vector<1x1x128xf32> to vector<1x128xf32>
    %276 = vector.broadcast %275 : vector<1x128xf32> to vector<32x128xf32>
    %277 = arith.mulf %273, %276 : vector<32x128xf32>
    %278 = arith.truncf %277 : vector<32x128xf32> to vector<32x128xbf16>
    %c9_i32_132 = arith.constant 9 : i32
    %279 = tpu.dynamic_rotate %222 by %c9_i32_132 dim 1 : vector<32x128xf32>, i32 -> vector<32x128xf32>
    %c9_133 = arith.constant 9 : index
    %c0_134 = arith.constant 0 : index
    %c0_135 = arith.constant 0 : index
    %280 = vector.load %arg19[%c9_133, %c0_134, %c0_135] : memref<27x1x128xf32, #tpu.memory_space<vmem>>, vector<1x1x128xf32>
    %281 = vector.shape_cast %280 : vector<1x1x128xf32> to vector<1x128xf32>
    %282 = vector.broadcast %281 : vector<1x128xf32> to vector<32x128xf32>
    %283 = arith.mulf %279, %282 : vector<32x128xf32>
    %284 = arith.truncf %283 : vector<32x128xf32> to vector<32x128xbf16>
    %c8_i32_136 = arith.constant 8 : i32
    %285 = tpu.dynamic_rotate %222 by %c8_i32_136 dim 1 : vector<32x128xf32>, i32 -> vector<32x128xf32>
    %c10_137 = arith.constant 10 : index
    %c0_138 = arith.constant 0 : index
    %c0_139 = arith.constant 0 : index
    %286 = vector.load %arg19[%c10_137, %c0_138, %c0_139] : memref<27x1x128xf32, #tpu.memory_space<vmem>>, vector<1x1x128xf32>
    %287 = vector.shape_cast %286 : vector<1x1x128xf32> to vector<1x128xf32>
    %288 = vector.broadcast %287 : vector<1x128xf32> to vector<32x128xf32>
    %289 = arith.mulf %285, %288 : vector<32x128xf32>
    %290 = arith.truncf %289 : vector<32x128xf32> to vector<32x128xbf16>
    %c7_i32_140 = arith.constant 7 : i32
    %291 = tpu.dynamic_rotate %222 by %c7_i32_140 dim 1 : vector<32x128xf32>, i32 -> vector<32x128xf32>
    %c11_141 = arith.constant 11 : index
    %c0_142 = arith.constant 0 : index
    %c0_143 = arith.constant 0 : index
    %292 = vector.load %arg19[%c11_141, %c0_142, %c0_143] : memref<27x1x128xf32, #tpu.memory_space<vmem>>, vector<1x1x128xf32>
    %293 = vector.shape_cast %292 : vector<1x1x128xf32> to vector<1x128xf32>
    %294 = vector.broadcast %293 : vector<1x128xf32> to vector<32x128xf32>
    %295 = arith.mulf %291, %294 : vector<32x128xf32>
    %296 = arith.truncf %295 : vector<32x128xf32> to vector<32x128xbf16>
    %c1_i32_144 = arith.constant 1 : i32
    %297 = tpu.dynamic_rotate %222 by %c1_i32_144 dim 1 : vector<32x128xf32>, i32 -> vector<32x128xf32>
    %c12_145 = arith.constant 12 : index
    %c0_146 = arith.constant 0 : index
    %c0_147 = arith.constant 0 : index
    %298 = vector.load %arg19[%c12_145, %c0_146, %c0_147] : memref<27x1x128xf32, #tpu.memory_space<vmem>>, vector<1x1x128xf32>
    %299 = vector.shape_cast %298 : vector<1x1x128xf32> to vector<1x128xf32>
    %300 = vector.broadcast %299 : vector<1x128xf32> to vector<32x128xf32>
    %301 = arith.mulf %297, %300 : vector<32x128xf32>
    %302 = arith.truncf %301 : vector<32x128xf32> to vector<32x128xbf16>
    %303 = arith.truncf %222 : vector<32x128xf32> to vector<32x128xbf16>
    %c127_i32_148 = arith.constant 127 : i32
    %304 = tpu.dynamic_rotate %222 by %c127_i32_148 dim 1 : vector<32x128xf32>, i32 -> vector<32x128xf32>
    %c14_149 = arith.constant 14 : index
    %c0_150 = arith.constant 0 : index
    %c0_151 = arith.constant 0 : index
    %305 = vector.load %arg19[%c14_149, %c0_150, %c0_151] : memref<27x1x128xf32, #tpu.memory_space<vmem>>, vector<1x1x128xf32>
    %306 = vector.shape_cast %305 : vector<1x1x128xf32> to vector<1x128xf32>
    %307 = vector.broadcast %306 : vector<1x128xf32> to vector<32x128xf32>
    %308 = arith.mulf %304, %307 : vector<32x128xf32>
    %309 = arith.truncf %308 : vector<32x128xf32> to vector<32x128xbf16>
    %c121_i32_152 = arith.constant 121 : i32
    %310 = tpu.dynamic_rotate %222 by %c121_i32_152 dim 1 : vector<32x128xf32>, i32 -> vector<32x128xf32>
    %c15_153 = arith.constant 15 : index
    %c0_154 = arith.constant 0 : index
    %c0_155 = arith.constant 0 : index
    %311 = vector.load %arg19[%c15_153, %c0_154, %c0_155] : memref<27x1x128xf32, #tpu.memory_space<vmem>>, vector<1x1x128xf32>
    %312 = vector.shape_cast %311 : vector<1x1x128xf32> to vector<1x128xf32>
    %313 = vector.broadcast %312 : vector<1x128xf32> to vector<32x128xf32>
    %314 = arith.mulf %310, %313 : vector<32x128xf32>
    %315 = arith.truncf %314 : vector<32x128xf32> to vector<32x128xbf16>
    %c120_i32_156 = arith.constant 120 : i32
    %316 = tpu.dynamic_rotate %222 by %c120_i32_156 dim 1 : vector<32x128xf32>, i32 -> vector<32x128xf32>
    %c16_157 = arith.constant 16 : index
    %c0_158 = arith.constant 0 : index
    %c0_159 = arith.constant 0 : index
    %317 = vector.load %arg19[%c16_157, %c0_158, %c0_159] : memref<27x1x128xf32, #tpu.memory_space<vmem>>, vector<1x1x128xf32>
    %318 = vector.shape_cast %317 : vector<1x1x128xf32> to vector<1x128xf32>
    %319 = vector.broadcast %318 : vector<1x128xf32> to vector<32x128xf32>
    %320 = arith.mulf %316, %319 : vector<32x128xf32>
    %321 = arith.truncf %320 : vector<32x128xf32> to vector<32x128xbf16>
    %c119_i32_160 = arith.constant 119 : i32
    %322 = tpu.dynamic_rotate %222 by %c119_i32_160 dim 1 : vector<32x128xf32>, i32 -> vector<32x128xf32>
    %c17_161 = arith.constant 17 : index
    %c0_162 = arith.constant 0 : index
    %c0_163 = arith.constant 0 : index
    %323 = vector.load %arg19[%c17_161, %c0_162, %c0_163] : memref<27x1x128xf32, #tpu.memory_space<vmem>>, vector<1x1x128xf32>
    %324 = vector.shape_cast %323 : vector<1x1x128xf32> to vector<1x128xf32>
    %325 = vector.broadcast %324 : vector<1x128xf32> to vector<32x128xf32>
    %326 = arith.mulf %322, %325 : vector<32x128xf32>
    %327 = arith.truncf %326 : vector<32x128xf32> to vector<32x128xbf16>
    %c73_i32_164 = arith.constant 73 : i32
    %328 = tpu.dynamic_rotate %222 by %c73_i32_164 dim 1 : vector<32x128xf32>, i32 -> vector<32x128xf32>
    %c18_165 = arith.constant 18 : index
    %c0_166 = arith.constant 0 : index
    %c0_167 = arith.constant 0 : index
    %329 = vector.load %arg19[%c18_165, %c0_166, %c0_167] : memref<27x1x128xf32, #tpu.memory_space<vmem>>, vector<1x1x128xf32>
    %330 = vector.shape_cast %329 : vector<1x1x128xf32> to vector<1x128xf32>
    %331 = vector.broadcast %330 : vector<1x128xf32> to vector<32x128xf32>
    %332 = arith.mulf %328, %331 : vector<32x128xf32>
    %333 = arith.truncf %332 : vector<32x128xf32> to vector<32x128xbf16>
    %c72_i32_168 = arith.constant 72 : i32
    %334 = tpu.dynamic_rotate %222 by %c72_i32_168 dim 1 : vector<32x128xf32>, i32 -> vector<32x128xf32>
    %c19_169 = arith.constant 19 : index
    %c0_170 = arith.constant 0 : index
    %c0_171 = arith.constant 0 : index
    %335 = vector.load %arg19[%c19_169, %c0_170, %c0_171] : memref<27x1x128xf32, #tpu.memory_space<vmem>>, vector<1x1x128xf32>
    %336 = vector.shape_cast %335 : vector<1x1x128xf32> to vector<1x128xf32>
    %337 = vector.broadcast %336 : vector<1x128xf32> to vector<32x128xf32>
    %338 = arith.mulf %334, %337 : vector<32x128xf32>
    %339 = arith.truncf %338 : vector<32x128xf32> to vector<32x128xbf16>
    %c71_i32_172 = arith.constant 71 : i32
    %340 = tpu.dynamic_rotate %222 by %c71_i32_172 dim 1 : vector<32x128xf32>, i32 -> vector<32x128xf32>
    %c20_173 = arith.constant 20 : index
    %c0_174 = arith.constant 0 : index
    %c0_175 = arith.constant 0 : index
    %341 = vector.load %arg19[%c20_173, %c0_174, %c0_175] : memref<27x1x128xf32, #tpu.memory_space<vmem>>, vector<1x1x128xf32>
    %342 = vector.shape_cast %341 : vector<1x1x128xf32> to vector<1x128xf32>
    %343 = vector.broadcast %342 : vector<1x128xf32> to vector<32x128xf32>
    %344 = arith.mulf %340, %343 : vector<32x128xf32>
    %345 = arith.truncf %344 : vector<32x128xf32> to vector<32x128xbf16>
    %c65_i32_176 = arith.constant 65 : i32
    %346 = tpu.dynamic_rotate %222 by %c65_i32_176 dim 1 : vector<32x128xf32>, i32 -> vector<32x128xf32>
    %c21_177 = arith.constant 21 : index
    %c0_178 = arith.constant 0 : index
    %c0_179 = arith.constant 0 : index
    %347 = vector.load %arg19[%c21_177, %c0_178, %c0_179] : memref<27x1x128xf32, #tpu.memory_space<vmem>>, vector<1x1x128xf32>
    %348 = vector.shape_cast %347 : vector<1x1x128xf32> to vector<1x128xf32>
    %349 = vector.broadcast %348 : vector<1x128xf32> to vector<32x128xf32>
    %350 = arith.mulf %346, %349 : vector<32x128xf32>
    %351 = arith.truncf %350 : vector<32x128xf32> to vector<32x128xbf16>
    %c64_i32_180 = arith.constant 64 : i32
    %352 = tpu.dynamic_rotate %222 by %c64_i32_180 dim 1 : vector<32x128xf32>, i32 -> vector<32x128xf32>
    %c22_181 = arith.constant 22 : index
    %c0_182 = arith.constant 0 : index
    %c0_183 = arith.constant 0 : index
    %353 = vector.load %arg19[%c22_181, %c0_182, %c0_183] : memref<27x1x128xf32, #tpu.memory_space<vmem>>, vector<1x1x128xf32>
    %354 = vector.shape_cast %353 : vector<1x1x128xf32> to vector<1x128xf32>
    %355 = vector.broadcast %354 : vector<1x128xf32> to vector<32x128xf32>
    %356 = arith.mulf %352, %355 : vector<32x128xf32>
    %357 = arith.truncf %356 : vector<32x128xf32> to vector<32x128xbf16>
    %c63_i32_184 = arith.constant 63 : i32
    %358 = tpu.dynamic_rotate %222 by %c63_i32_184 dim 1 : vector<32x128xf32>, i32 -> vector<32x128xf32>
    %c23_185 = arith.constant 23 : index
    %c0_186 = arith.constant 0 : index
    %c0_187 = arith.constant 0 : index
    %359 = vector.load %arg19[%c23_185, %c0_186, %c0_187] : memref<27x1x128xf32, #tpu.memory_space<vmem>>, vector<1x1x128xf32>
    %360 = vector.shape_cast %359 : vector<1x1x128xf32> to vector<1x128xf32>
    %361 = vector.broadcast %360 : vector<1x128xf32> to vector<32x128xf32>
    %362 = arith.mulf %358, %361 : vector<32x128xf32>
    %363 = arith.truncf %362 : vector<32x128xf32> to vector<32x128xbf16>
    %c57_i32_188 = arith.constant 57 : i32
    %364 = tpu.dynamic_rotate %222 by %c57_i32_188 dim 1 : vector<32x128xf32>, i32 -> vector<32x128xf32>
    %c24_189 = arith.constant 24 : index
    %c0_190 = arith.constant 0 : index
    %c0_191 = arith.constant 0 : index
    %365 = vector.load %arg19[%c24_189, %c0_190, %c0_191] : memref<27x1x128xf32, #tpu.memory_space<vmem>>, vector<1x1x128xf32>
    %366 = vector.shape_cast %365 : vector<1x1x128xf32> to vector<1x128xf32>
    %367 = vector.broadcast %366 : vector<1x128xf32> to vector<32x128xf32>
    %368 = arith.mulf %364, %367 : vector<32x128xf32>
    %369 = arith.truncf %368 : vector<32x128xf32> to vector<32x128xbf16>
    %c56_i32_192 = arith.constant 56 : i32
    %370 = tpu.dynamic_rotate %222 by %c56_i32_192 dim 1 : vector<32x128xf32>, i32 -> vector<32x128xf32>
    %c25_193 = arith.constant 25 : index
    %c0_194 = arith.constant 0 : index
    %c0_195 = arith.constant 0 : index
    %371 = vector.load %arg19[%c25_193, %c0_194, %c0_195] : memref<27x1x128xf32, #tpu.memory_space<vmem>>, vector<1x1x128xf32>
    %372 = vector.shape_cast %371 : vector<1x1x128xf32> to vector<1x128xf32>
    %373 = vector.broadcast %372 : vector<1x128xf32> to vector<32x128xf32>
    %374 = arith.mulf %370, %373 : vector<32x128xf32>
    %375 = arith.truncf %374 : vector<32x128xf32> to vector<32x128xbf16>
    %c55_i32_196 = arith.constant 55 : i32
    %376 = tpu.dynamic_rotate %222 by %c55_i32_196 dim 1 : vector<32x128xf32>, i32 -> vector<32x128xf32>
    %c26_197 = arith.constant 26 : index
    %c0_198 = arith.constant 0 : index
    %c0_199 = arith.constant 0 : index
    %377 = vector.load %arg19[%c26_197, %c0_198, %c0_199] : memref<27x1x128xf32, #tpu.memory_space<vmem>>, vector<1x1x128xf32>
    %378 = vector.shape_cast %377 : vector<1x1x128xf32> to vector<1x128xf32>
    %379 = vector.broadcast %378 : vector<1x128xf32> to vector<32x128xf32>
    %380 = arith.mulf %376, %379 : vector<32x128xf32>
    %381 = arith.truncf %380 : vector<32x128xf32> to vector<32x128xbf16>
    %382 = tpu.concatenate %230, %236, %242, %248, %254, %260, %266, %272, %278, %284, %290, %296, %302, %303, %309, %315 in 0 : vector<32x128xbf16>, vector<32x128xbf16>, vector<32x128xbf16>, vector<32x128xbf16>, vector<32x128xbf16>, vector<32x128xbf16>, vector<32x128xbf16>, vector<32x128xbf16>, vector<32x128xbf16>, vector<32x128xbf16>, vector<32x128xbf16>, vector<32x128xbf16>, vector<32x128xbf16>, vector<32x128xbf16>, vector<32x128xbf16>, vector<32x128xbf16> -> vector<512x128xbf16>
    %383 = tpu.concatenate %321, %327, %333, %339, %345, %351, %357, %363, %369, %375, %381 in 0 : vector<32x128xbf16>, vector<32x128xbf16>, vector<32x128xbf16>, vector<32x128xbf16>, vector<32x128xbf16>, vector<32x128xbf16>, vector<32x128xbf16>, vector<32x128xbf16>, vector<32x128xbf16>, vector<32x128xbf16>, vector<32x128xbf16> -> vector<352x128xbf16>
    %384 = tpu.concatenate %382, %383 in 0 : vector<512x128xbf16>, vector<352x128xbf16> -> vector<864x128xbf16>
    %cst_200 = arith.constant dense<0.000000e+00> : vector<32x128xf32>
    %385 = tpu.matmul %223, %384, %cst_200 {dimension_numbers = #tpu.dot_dimension_numbers<[1], [0], [0], [1], [0, 0, 1, 1], [], []>} : vector<32x864xbf16>, vector<864x128xbf16>, vector<32x128xf32> -> vector<32x128xf32>
    %386 = vector.broadcast %224 : vector<32x1xf32> to vector<32x128xf32>
    %387 = arith.addf %385, %386 : vector<32x128xf32>
    %c0_201 = arith.constant 0 : index
    %c0_202 = arith.constant 0 : index
    %388 = vector.load %arg6[%c0_201, %c0_202] : memref<32x16xf32, #tpu.memory_space<vmem>>, vector<32x16xf32>
    %cst_203 = arith.constant dense<0.000000e+00> : vector<32x128xf32>
    %389 = tpu.matmul %388, %1, %cst_203 {dimension_numbers = #tpu.dot_dimension_numbers<[1], [0], [0], [1], [0, 0, 1, 1], [], []>} : vector<32x16xf32>, vector<16x128xf32>, vector<32x128xf32> -> vector<32x128xf32>
    %c0_204 = arith.constant 0 : index
    %c0_205 = arith.constant 0 : index
    %390 = vector.load %arg11[%c0_204, %c0_205] : memref<32x1xf32, #tpu.memory_space<vmem>>, vector<32x1xf32>
    %c0_206 = arith.constant 0 : index
    %c0_207 = arith.constant 0 : index
    %391 = vector.load %arg12[%c0_206, %c0_207] : memref<32x1xf32, #tpu.memory_space<vmem>>, vector<32x1xf32>
    %c0_208 = arith.constant 0 : index
    %c0_209 = arith.constant 0 : index
    %392 = vector.load %arg18[%c0_208, %c0_209] : memref<32x32xf32, #tpu.memory_space<vmem>>, vector<32x32xf32>
    %cst_210 = arith.constant dense<0.000000e+00> : vector<32xf32>
    %393 = vector.multi_reduction <add>, %389, %cst_210 [1] : vector<32x128xf32> to vector<32xf32>
    %394 = vector.shape_cast %393 : vector<32xf32> to vector<32x1xf32>
    %395 = arith.mulf %389, %389 : vector<32x128xf32>
    %cst_211 = arith.constant dense<0.000000e+00> : vector<32xf32>
    %396 = vector.multi_reduction <add>, %395, %cst_211 [1] : vector<32x128xf32> to vector<32xf32>
    %397 = vector.shape_cast %396 : vector<32xf32> to vector<32x1xf32>
    %398 = tpu.concatenate %394, %397 in 1 : vector<32x1xf32>, vector<32x1xf32> -> vector<32x2xf32>
    %cst_212 = arith.constant dense<0.000000e+00> : vector<32x2xf32>
    %399 = tpu.matmul %392, %398, %cst_212 {dimension_numbers = #tpu.dot_dimension_numbers<[1], [0], [0], [1], [0, 0, 1, 1], [], []>} : vector<32x32xf32>, vector<32x2xf32>, vector<32x2xf32> -> vector<32x2xf32>
    %400 = vector.extract_strided_slice %399 {offsets = [0, 0], sizes = [32, 1], strides = [1, 1]} : vector<32x2xf32> to vector<32x1xf32>
    %401 = vector.extract_strided_slice %399 {offsets = [0, 1], sizes = [32, 1], strides = [1, 1]} : vector<32x2xf32> to vector<32x1xf32>
    %402 = arith.mulf %400, %400 : vector<32x1xf32>
    %403 = arith.subf %401, %402 : vector<32x1xf32>
    %cst_213 = arith.constant 0.000000e+00 : f32
    %404 = vector.broadcast %cst_213 : f32 to vector<32x1xf32>
    %405 = arith.maximumf %403, %404 : vector<32x1xf32>
    %cst_214 = arith.constant 9.99999974E-6 : f32
    %406 = vector.broadcast %cst_214 : f32 to vector<32x1xf32>
    %407 = arith.addf %405, %406 : vector<32x1xf32>
    %408 = math.rsqrt %407 : vector<32x1xf32>
    %409 = arith.mulf %390, %408 : vector<32x1xf32>
    %410 = arith.mulf %400, %409 : vector<32x1xf32>
    %411 = arith.subf %391, %410 : vector<32x1xf32>
    %412 = vector.broadcast %409 : vector<32x1xf32> to vector<32x128xf32>
    %413 = arith.mulf %389, %412 : vector<32x128xf32>
    %414 = vector.broadcast %411 : vector<32x1xf32> to vector<32x128xf32>
    %415 = arith.addf %413, %414 : vector<32x128xf32>
    %416 = arith.addf %387, %415 : vector<32x128xf32>
    %c0_215 = arith.constant 0 : index
    %c0_216 = arith.constant 0 : index
    %417 = vector.load %arg20[%c0_215, %c0_216] : memref<128x128xf32, #tpu.memory_space<vmem>>, vector<128x128xf32>
    %cst_217 = arith.constant dense<0.000000e+00> : vector<32x128xf32>
    %418 = tpu.matmul %416, %417, %cst_217 {dimension_numbers = #tpu.dot_dimension_numbers<[1], [0], [0], [1], [0, 0, 1, 1], [], []>} : vector<32x128xf32>, vector<128x128xf32>, vector<32x128xf32> -> vector<32x128xf32>
    %c0_218 = arith.constant 0 : index
    %c0_219 = arith.constant 0 : index
    %419 = vector.load %arg13[%c0_218, %c0_219] : memref<16x32xf32, #tpu.memory_space<vmem>>, vector<16x32xf32>
    %cst_220 = arith.constant dense<0.000000e+00> : vector<16x128xf32>
    %420 = tpu.matmul %419, %418, %cst_220 {dimension_numbers = #tpu.dot_dimension_numbers<[1], [0], [0], [1], [0, 0, 1, 1], [], []>} : vector<16x32xf32>, vector<32x128xf32>, vector<16x128xf32> -> vector<16x128xf32>
    %c0_221 = arith.constant 0 : index
    %c0_222 = arith.constant 0 : index
    %421 = vector.load %arg14[%c0_221, %c0_222] : memref<16x1xf32, #tpu.memory_space<vmem>>, vector<16x1xf32>
    %422 = vector.broadcast %421 : vector<16x1xf32> to vector<16x128xf32>
    %423 = arith.addf %420, %422 : vector<16x128xf32>
    %cst_223 = arith.constant 0.000000e+00 : f32
    %424 = vector.broadcast %cst_223 : f32 to vector<16x128xf32>
    %425 = arith.maximumf %423, %424 : vector<16x128xf32>
    %c0_224 = arith.constant 0 : index
    %c0_225 = arith.constant 0 : index
    %426 = vector.load %arg15[%c0_224, %c0_225] : memref<32x16xf32, #tpu.memory_space<vmem>>, vector<32x16xf32>
    %cst_226 = arith.constant dense<0.000000e+00> : vector<32x128xf32>
    %427 = tpu.matmul %426, %425, %cst_226 {dimension_numbers = #tpu.dot_dimension_numbers<[1], [0], [0], [1], [0, 0, 1, 1], [], []>} : vector<32x16xf32>, vector<16x128xf32>, vector<32x128xf32> -> vector<32x128xf32>
    %c0_227 = arith.constant 0 : index
    %c0_228 = arith.constant 0 : index
    %428 = vector.load %arg16[%c0_227, %c0_228] : memref<32x1xf32, #tpu.memory_space<vmem>>, vector<32x1xf32>
    %429 = vector.broadcast %428 : vector<32x1xf32> to vector<32x128xf32>
    %430 = arith.addf %427, %429 : vector<32x128xf32>
    %cst_229 = arith.constant 0.000000e+00 : f32
    %431 = vector.broadcast %cst_229 : f32 to vector<32x128xf32>
    %432 = arith.subf %431, %430 : vector<32x128xf32>
    %433 = math.exp %432 : vector<32x128xf32>
    %cst_230 = arith.constant 1.000000e+00 : f32
    %434 = vector.broadcast %cst_230 : f32 to vector<32x128xf32>
    %435 = arith.addf %434, %433 : vector<32x128xf32>
    %436 = tpu.reciprocal %435 {approx = true} : vector<32x128xf32> -> vector<32x128xf32>
    %437 = arith.mulf %416, %436 : vector<32x128xf32>
    %c0_231 = arith.constant 0 : index
    %c0_232 = arith.constant 0 : index
    %c0_233 = arith.constant 0 : index
    %438 = vector.load %arg21[%c0_231, %c0_232, %c0_233] : memref<1x32x128xf32, #tpu.memory_space<vmem>>, vector<1x32x128xf32>
    %439 = vector.shape_cast %438 : vector<1x32x128xf32> to vector<32x128xf32>
    %440 = vector.shape_cast %437 : vector<32x128xf32> to vector<1x32x128xf32>
    tpu.vector_store %arg21[%c0_231, %c0_232, %c0_233], %440 {strides = array<i32>} : memref<1x32x128xf32, #tpu.memory_space<vmem>>, vector<1x32x128xf32>,
    return
  }
  func.func @transform_0(%arg0: i32) -> (i32, i32, i32) {
    %c0_i32 = arith.constant 0 : i32
    %c0_i32_0 = arith.constant 0 : i32
    %c0_i32_1 = arith.constant 0 : i32
    return %arg0, %c0_i32, %c0_i32_0 : i32, i32, i32
  }
  func.func @transform_1(%arg0: i32) -> (i32, i32) {
    %c0_i32 = arith.constant 0 : i32
    %c0_i32_0 = arith.constant 0 : i32
    %c0_i32_1 = arith.constant 0 : i32
    return %c0_i32, %c0_i32_0 : i32, i32
  }
  func.func @transform_2(%arg0: i32) -> (i32, i32) {
    %c0_i32 = arith.constant 0 : i32
    %c0_i32_0 = arith.constant 0 : i32
    %c0_i32_1 = arith.constant 0 : i32
    return %c0_i32, %c0_i32_0 : i32, i32
  }
  func.func @transform_3(%arg0: i32) -> (i32, i32) {
    %c0_i32 = arith.constant 0 : i32
    %c0_i32_0 = arith.constant 0 : i32
    %c0_i32_1 = arith.constant 0 : i32
    return %c0_i32, %c0_i32_0 : i32, i32
  }
  func.func @transform_4(%arg0: i32) -> (i32, i32) {
    %c0_i32 = arith.constant 0 : i32
    %c0_i32_0 = arith.constant 0 : i32
    %c0_i32_1 = arith.constant 0 : i32
    return %c0_i32, %c0_i32_0 : i32, i32
  }
  func.func @transform_5(%arg0: i32) -> (i32, i32) {
    %c0_i32 = arith.constant 0 : i32
    %c0_i32_0 = arith.constant 0 : i32
    %c0_i32_1 = arith.constant 0 : i32
    return %c0_i32, %c0_i32_0 : i32, i32
  }
  func.func @transform_6(%arg0: i32) -> (i32, i32) {
    %c0_i32 = arith.constant 0 : i32
    %c0_i32_0 = arith.constant 0 : i32
    %c0_i32_1 = arith.constant 0 : i32
    return %c0_i32, %c0_i32_0 : i32, i32
  }
  func.func @transform_7(%arg0: i32) -> (i32, i32) {
    %c0_i32 = arith.constant 0 : i32
    %c0_i32_0 = arith.constant 0 : i32
    %c0_i32_1 = arith.constant 0 : i32
    return %c0_i32, %c0_i32_0 : i32, i32
  }
  func.func @transform_8(%arg0: i32) -> (i32, i32) {
    %c0_i32 = arith.constant 0 : i32
    %c0_i32_0 = arith.constant 0 : i32
    %c0_i32_1 = arith.constant 0 : i32
    return %c0_i32, %c0_i32_0 : i32, i32
  }
  func.func @transform_9(%arg0: i32) -> (i32, i32) {
    %c0_i32 = arith.constant 0 : i32
    %c0_i32_0 = arith.constant 0 : i32
    %c0_i32_1 = arith.constant 0 : i32
    return %c0_i32, %c0_i32_0 : i32, i32
  }
  func.func @transform_10(%arg0: i32) -> (i32, i32) {
    %c0_i32 = arith.constant 0 : i32
    %c0_i32_0 = arith.constant 0 : i32
    %c0_i32_1 = arith.constant 0 : i32
    return %c0_i32, %c0_i32_0 : i32, i32
  }
  func.func @transform_11(%arg0: i32) -> (i32, i32) {
    %c0_i32 = arith.constant 0 : i32
    %c0_i32_0 = arith.constant 0 : i32
    %c0_i32_1 = arith.constant 0 : i32
    return %c0_i32, %c0_i32_0 : i32, i32
  }
  func.func @transform_12(%arg0: i32) -> (i32, i32) {
    %c0_i32 = arith.constant 0 : i32
    %c0_i32_0 = arith.constant 0 : i32
    %c0_i32_1 = arith.constant 0 : i32
    return %c0_i32, %c0_i32_0 : i32, i32
  }
  func.func @transform_13(%arg0: i32) -> (i32, i32) {
    %c0_i32 = arith.constant 0 : i32
    %c0_i32_0 = arith.constant 0 : i32
    %c0_i32_1 = arith.constant 0 : i32
    return %c0_i32, %c0_i32_0 : i32, i32
  }
  func.func @transform_14(%arg0: i32) -> (i32, i32) {
    %c0_i32 = arith.constant 0 : i32
    %c0_i32_0 = arith.constant 0 : i32
    %c0_i32_1 = arith.constant 0 : i32
    return %c0_i32, %c0_i32_0 : i32, i32
  }
  func.func @transform_15(%arg0: i32) -> (i32, i32) {
    %c0_i32 = arith.constant 0 : i32
    %c0_i32_0 = arith.constant 0 : i32
    %c0_i32_1 = arith.constant 0 : i32
    return %c0_i32, %c0_i32_0 : i32, i32
  }
  func.func @transform_16(%arg0: i32) -> (i32, i32) {
    %c0_i32 = arith.constant 0 : i32
    %c0_i32_0 = arith.constant 0 : i32
    %c0_i32_1 = arith.constant 0 : i32
    return %c0_i32, %c0_i32_0 : i32, i32
  }
  func.func @transform_17(%arg0: i32) -> (i32, i32) {
    %c0_i32 = arith.constant 0 : i32
    %c0_i32_0 = arith.constant 0 : i32
    %c0_i32_1 = arith.constant 0 : i32
    return %c0_i32, %c0_i32_0 : i32, i32
  }
  func.func @transform_18(%arg0: i32) -> (i32, i32, i32) {
    %c0_i32 = arith.constant 0 : i32
    %c0_i32_0 = arith.constant 0 : i32
    %c0_i32_1 = arith.constant 0 : i32
    %c0_i32_2 = arith.constant 0 : i32
    return %c0_i32, %c0_i32_0, %c0_i32_1 : i32, i32, i32
  }
  func.func @transform_19(%arg0: i32) -> (i32, i32) {
    %c0_i32 = arith.constant 0 : i32
    %c0_i32_0 = arith.constant 0 : i32
    %c0_i32_1 = arith.constant 0 : i32
    return %c0_i32, %c0_i32_0 : i32, i32
  }
  func.func @transform_20(%arg0: i32) -> (i32, i32, i32) {
    %c0_i32 = arith.constant 0 : i32
    %c0_i32_0 = arith.constant 0 : i32
    %c0_i32_1 = arith.constant 0 : i32
    return %arg0, %c0_i32, %c0_i32_0 : i32, i32, i32
  }
}

</mosaic_0001>

<llo_original>
// kernel: down_forward.1
$region0: #{down_forward.1}
  #allocation0 [shape = 'u32[]', space=smem, size = 0x4, offset = 0x4, fixed_abs, tag = 'smem constant byte address 0x4 - core index']
  #allocation1 [shape = 'u32[144,128]{1,0:T(1,128)}', space=vmem, size = 0x12000, scoped, tag = 'internal scratch']
  %s0 = inlined_call_operand.vmem [shape: f32[2,16,128], index: 0, kind: input, shape index: {}]
  %s1 = inlined_call_operand.vmem [shape: bf16[32,432], index: 1, kind: input, shape index: {}]
  %s2 = inlined_call_operand.vmem [shape: f32[32,1], index: 2, kind: input, shape index: {}]
  %s3 = inlined_call_operand.vmem [shape: bf16[32,864], index: 3, kind: input, shape index: {}]
  %s4 = inlined_call_operand.vmem [shape: f32[32,1], index: 4, kind: input, shape index: {}]
  %s5 = inlined_call_operand.vmem [shape: f32[32,16], index: 5, kind: input, shape index: {}]
  %s6 = inlined_call_operand.vmem [shape: f32[16,1], index: 6, kind: input, shape index: {}]
  %s7 = inlined_call_operand.vmem [shape: f32[16,1], index: 7, kind: input, shape index: {}]
  %s8 = inlined_call_operand.vmem [shape: f32[32,1], index: 8, kind: input, shape index: {}]
  %s9 = inlined_call_operand.vmem [shape: f32[32,1], index: 9, kind: input, shape index: {}]
  %s10 = inlined_call_operand.vmem [shape: f32[32,1], index: 10, kind: input, shape index: {}]
  %s11 = inlined_call_operand.vmem [shape: f32[32,1], index: 11, kind: input, shape index: {}]
  %s12 = inlined_call_operand.vmem [shape: f32[16,32], index: 12, kind: input, shape index: {}]
  %s13 = inlined_call_operand.vmem [shape: f32[16,1], index: 13, kind: input, shape index: {}]
  %s14 = inlined_call_operand.vmem [shape: f32[32,16], index: 14, kind: input, shape index: {}]
  %s15 = inlined_call_operand.vmem [shape: f32[32,1], index: 15, kind: input, shape index: {}]
  %s16 = inlined_call_operand.vmem [shape: f32[16,16], index: 16, kind: input, shape index: {}]
  %s17 = inlined_call_operand.vmem [shape: f32[32,32], index: 17, kind: input, shape index: {}]
  %s18 = inlined_call_operand.vmem [shape: f32[27,1,128], index: 18, kind: input, shape index: {}]
  %s19 = inlined_call_operand.vmem [shape: f32[128,128], index: 19, kind: input, shape index: {}]
  %s20 = inlined_call_operand.vmem [shape: f32[2,32,128], index: 20, kind: output, shape index: {}]
  %s21 = sld [smem:[#allocation0]]
  $region113: #{down_forward.1} parent=0
    _
  %s23 = ssub.s32 1, %s21
  %s24 = scalar_select 0, %s23, %s21
  loop: start=0, step=1, limit=4
  $region2: #{down_forward.1} parent=0 // loop_pre_header
    _
  $region3: #{down_forward.1} parent=0 // loop_header
    %s26 = sphi 0, %s30
    %p27 = scmp.ge.s32.totalorder %s26, 4
    %s36 = sphi 0, %s38
    %s39 = sphi 0, %s36
    %s40 = sphi 0, %s39
    %s56 = sphi 0, %s40
    %s60 = sphi 0, %s60
    %s62 = sphi 0, %s60
    %s63 = sphi 0, %s62
    %s77 = sphi 0, %s63
    %s81 = sphi 0, %s81
    %s83 = sphi 0, %s81
    %s84 = sphi 0, %s83
    %s98 = sphi 0, %s84
    %s102 = sphi 0, %s102
    %s104 = sphi 0, %s102
    %s105 = sphi 0, %s104
    %s119 = sphi 0, %s105
    %s123 = sphi 0, %s123
    %s125 = sphi 0, %s123
    %s126 = sphi 0, %s125
    %s140 = sphi 0, %s126
    %s144 = sphi 0, %s144
    %s146 = sphi 0, %s144
    %s147 = sphi 0, %s146
    %s161 = sphi 0, %s147
    %s165 = sphi 0, %s165
    %s167 = sphi 0, %s165
    %s168 = sphi 0, %s167
    %s182 = sphi 0, %s168
    %s186 = sphi 0, %s186
    %s188 = sphi 0, %s186
    %s189 = sphi 0, %s188
    %s203 = sphi 0, %s189
    %s207 = sphi 0, %s207
    %s209 = sphi 0, %s207
    %s210 = sphi 0, %s209
    %s224 = sphi 0, %s210
    %s228 = sphi 0, %s228
    %s230 = sphi 0, %s228
    %s231 = sphi 0, %s230
    %s245 = sphi 0, %s231
    %s249 = sphi 0, %s249
    %s251 = sphi 0, %s249
    %s252 = sphi 0, %s251
    %s266 = sphi 0, %s252
    %s270 = sphi 0, %s270
    %s272 = sphi 0, %s270
    %s273 = sphi 0, %s272
    %s287 = sphi 0, %s273
    %s291 = sphi 0, %s291
    %s293 = sphi 0, %s291
    %s294 = sphi 0, %s293
    %s308 = sphi 0, %s294
    %s312 = sphi 0, %s312
    %s314 = sphi 0, %s312
    %s315 = sphi 0, %s314
    %s329 = sphi 0, %s315
    %s333 = sphi 0, %s333
    %s335 = sphi 0, %s333
    %s336 = sphi 0, %s335
    %s350 = sphi 0, %s336
    %s354 = sphi 0, %s354
    %s356 = sphi 0, %s354
    %s357 = sphi 0, %s356
    %s371 = sphi 0, %s357
    %s375 = sphi 0, %s375
    %s377 = sphi 0, %s375
    %s378 = sphi 0, %s377
    %s392 = sphi 0, %s378
    %s396 = sphi 0, %s396
    %s398 = sphi 0, %s396
    %s399 = sphi 0, %s398
    %s413 = sphi 0, %s399
    %s417 = sphi 0, %s417
    %s419 = sphi 0, %s417
    %s420 = sphi 0, %s419
    %s434 = sphi 0, %s420
    %s438 = sphi 0, %s438
    %s440 = sphi 0, %s438
    %s441 = sphi 0, %s440
    %s455 = sphi 0, %s441
    %s461 = sphi 0, %s463
    %s464 = sphi 0, %s461
    %s465 = sphi 0, %s464
    %s481 = sphi 0, %s465
  $region4: #{down_forward.1} parent=0 // loop_header_branch
    %29 = sbr.rel (%p27) target = $region8
  $region5: #{down_forward.1} parent=0 // loop_body
    %s31 = ssub.s32 %s26, 1
    %s32 = ssub.s32 %s26, 2
    %s33 = sadd.s32 %s26, 1
    %s34 = ssub.s32 %s26, %s33
    %p35 = scmp.eq.s32.totalorder %s34, 0
    %s37 = sadd.s32 %s36, 1
    %s38 = scalar_select %p35, %s36, %s37
    %p41 = pneg %p35
    %p42 = scmp.eq.s32.totalorder %s26, 1
    %p43 = por %p41, %p42
    %p44 = scmp.ne.s32.totalorder %s36, %s39
    %p45 = scmp.eq.s32.totalorder %s26, 0
    %p46 = por %p44, %p45
    %p47 = scmp.ne.s32.totalorder %s36, %s39
    %p48 = scmp.eq.s32.totalorder %s31, 1
    %p49 = por %p47, %p48
    %p50 = scmp.ne.s32.totalorder %s39, %s40
    %p51 = scmp.eq.s32.totalorder %s31, 0
    %p52 = por %p50, %p51
    %p53 = scmp.ne.s32.totalorder %s39, %s40
    %p54 = scmp.eq.s32.totalorder %s32, 1
    %p55 = por %p53, %p54
    %p57 = scmp.ne.s32.totalorder %s40, %s56
    %p58 = scmp.eq.s32.totalorder %s32, 0
    %p59 = por %p57, %p58
    %s61 = sadd.s32 %s60, 1
    %p64 = scmp.eq.s32.totalorder %s26, 1
    %p65 = scmp.ne.s32.totalorder %s60, %s62
    %p66 = scmp.eq.s32.totalorder %s26, 0
    %p67 = por %p65, %p66
    %p68 = scmp.ne.s32.totalorder %s60, %s62
    %p69 = scmp.eq.s32.totalorder %s31, 1
    %p70 = por %p68, %p69
    %p71 = scmp.ne.s32.totalorder %s62, %s63
    %p72 = scmp.eq.s32.totalorder %s31, 0
    %p73 = por %p71, %p72
    %p74 = scmp.ne.s32.totalorder %s62, %s63
    %p75 = scmp.eq.s32.totalorder %s32, 1
    %p76 = por %p74, %p75
    %p78 = scmp.ne.s32.totalorder %s63, %s77
    %p79 = scmp.eq.s32.totalorder %s32, 0
    %p80 = por %p78, %p79
    %s82 = sadd.s32 %s81, 1
    %p85 = scmp.eq.s32.totalorder %s26, 1
    %p86 = scmp.ne.s32.totalorder %s81, %s83
    %p87 = scmp.eq.s32.totalorder %s26, 0
    %p88 = por %p86, %p87
    %p89 = scmp.ne.s32.totalorder %s81, %s83
    %p90 = scmp.eq.s32.totalorder %s31, 1
    %p91 = por %p89, %p90
    %p92 = scmp.ne.s32.totalorder %s83, %s84
    %p93 = scmp.eq.s32.totalorder %s31, 0
    %p94 = por %p92, %p93
    %p95 = scmp.ne.s32.totalorder %s83, %s84
    %p96 = scmp.eq.s32.totalorder %s32, 1
    %p97 = por %p95, %p96
    %p99 = scmp.ne.s32.totalorder %s84, %s98
    %p100 = scmp.eq.s32.totalorder %s32, 0
    %p101 = por %p99, %p100
    %s103 = sadd.s32 %s102, 1
    %p106 = scmp.eq.s32.totalorder %s26, 1
    %p107 = scmp.ne.s32.totalorder %s102, %s104
    %p108 = scmp.eq.s32.totalorder %s26, 0
    %p109 = por %p107, %p108
    %p110 = scmp.ne.s32.totalorder %s102, %s104
    %p111 = scmp.eq.s32.totalorder %s31, 1
    %p112 = por %p110, %p111
    %p113 = scmp.ne.s32.totalorder %s104, %s105
    %p114 = scmp.eq.s32.totalorder %s31, 0
    %p115 = por %p113, %p114
    %p116 = scmp.ne.s32.totalorder %s104, %s105
    %p117 = scmp.eq.s32.totalorder %s32, 1
    %p118 = por %p116, %p117
    %p120 = scmp.ne.s32.totalorder %s105, %s119
    %p121 = scmp.eq.s32.totalorder %s32, 0
    %p122 = por %p120, %p121
    %s124 = sadd.s32 %s123, 1
    %p127 = scmp.eq.s32.totalorder %s26, 1
    %p128 = scmp.ne.s32.totalorder %s123, %s125
    %p129 = scmp.eq.s32.totalorder %s26, 0
    %p130 = por %p128, %p129
    %p131 = scmp.ne.s32.totalorder %s123, %s125
    %p132 = scmp.eq.s32.totalorder %s31, 1
    %p133 = por %p131, %p132
    %p134 = scmp.ne.s32.totalorder %s125, %s126
    %p135 = scmp.eq.s32.totalorder %s31, 0
    %p136 = por %p134, %p135
    %p137 = scmp.ne.s32.totalorder %s125, %s126
    %p138 = scmp.eq.s32.totalorder %s32, 1
    %p139 = por %p137, %p138
    %p141 = scmp.ne.s32.totalorder %s126, %s140
    %p142 = scmp.eq.s32.totalorder %s32, 0
    %p143 = por %p141, %p142
    %s145 = sadd.s32 %s144, 1
    %p148 = scmp.eq.s32.totalorder %s26, 1
    %p149 = scmp.ne.s32.totalorder %s144, %s146
    %p150 = scmp.eq.s32.totalorder %s26, 0
    %p151 = por %p149, %p150
    %p152 = scmp.ne.s32.totalorder %s144, %s146
    %p153 = scmp.eq.s32.totalorder %s31, 1
    %p154 = por %p152, %p153
    %p155 = scmp.ne.s32.totalorder %s146, %s147
    %p156 = scmp.eq.s32.totalorder %s31, 0
    %p157 = por %p155, %p156
    %p158 = scmp.ne.s32.totalorder %s146, %s147
    %p159 = scmp.eq.s32.totalorder %s32, 1
    %p160 = por %p158, %p159
    %p162 = scmp.ne.s32.totalorder %s147, %s161
    %p163 = scmp.eq.s32.totalorder %s32, 0
    %p164 = por %p162, %p163
    %s166 = sadd.s32 %s165, 1
    %p169 = scmp.eq.s32.totalorder %s26, 1
    %p170 = scmp.ne.s32.totalorder %s165, %s167
    %p171 = scmp.eq.s32.totalorder %s26, 0
    %p172 = por %p170, %p171
    %p173 = scmp.ne.s32.totalorder %s165, %s167
    %p174 = scmp.eq.s32.totalorder %s31, 1
    %p175 = por %p173, %p174
    %p176 = scmp.ne.s32.totalorder %s167, %s168
    %p177 = scmp.eq.s32.totalorder %s31, 0
    %p178 = por %p176, %p177
    %p179 = scmp.ne.s32.totalorder %s167, %s168
    %p180 = scmp.eq.s32.totalorder %s32, 1
    %p181 = por %p179, %p180
    %p183 = scmp.ne.s32.totalorder %s168, %s182
    %p184 = scmp.eq.s32.totalorder %s32, 0
    %p185 = por %p183, %p184
    %s187 = sadd.s32 %s186, 1
    %p190 = scmp.eq.s32.totalorder %s26, 1
    %p191 = scmp.ne.s32.totalorder %s186, %s188
    %p192 = scmp.eq.s32.totalorder %s26, 0
    %p193 = por %p191, %p192
    %p194 = scmp.ne.s32.totalorder %s186, %s188
    %p195 = scmp.eq.s32.totalorder %s31, 1
    %p196 = por %p194, %p195
    %p197 = scmp.ne.s32.totalorder %s188, %s189
    %p198 = scmp.eq.s32.totalorder %s31, 0
    %p199 = por %p197, %p198
    %p200 = scmp.ne.s32.totalorder %s188, %s189
    %p201 = scmp.eq.s32.totalorder %s32, 1
    %p202 = por %p200, %p201
    %p204 = scmp.ne.s32.totalorder %s189, %s203
    %p205 = scmp.eq.s32.totalorder %s32, 0
    %p206 = por %p204, %p205
    %s208 = sadd.s32 %s207, 1
    %p211 = scmp.eq.s32.totalorder %s26, 1
    %p212 = scmp.ne.s32.totalorder %s207, %s209
    %p213 = scmp.eq.s32.totalorder %s26, 0
    %p214 = por %p212, %p213
    %p215 = scmp.ne.s32.totalorder %s207, %s209
    %p216 = scmp.eq.s32.totalorder %s31, 1
    %p217 = por %p215, %p216
    %p218 = scmp.ne.s32.totalorder %s209, %s210
    %p219 = scmp.eq.s32.totalorder %s31, 0
    %p220 = por %p218, %p219
    %p221 = scmp.ne.s32.totalorder %s209, %s210
    %p222 = scmp.eq.s32.totalorder %s32, 1
    %p223 = por %p221, %p222
    %p225 = scmp.ne.s32.totalorder %s210, %s224
    %p226 = scmp.eq.s32.totalorder %s32, 0
    %p227 = por %p225, %p226
    %s229 = sadd.s32 %s228, 1
    %p232 = scmp.eq.s32.totalorder %s26, 1
    %p233 = scmp.ne.s32.totalorder %s228, %s230
    %p234 = scmp.eq.s32.totalorder %s26, 0
    %p235 = por %p233, %p234
    %p236 = scmp.ne.s32.totalorder %s228, %s230
    %p237 = scmp.eq.s32.totalorder %s31, 1
    %p238 = por %p236, %p237
    %p239 = scmp.ne.s32.totalorder %s230, %s231
    %p240 = scmp.eq.s32.totalorder %s31, 0
    %p241 = por %p239, %p240
    %p242 = scmp.ne.s32.totalorder %s230, %s231
    %p243 = scmp.eq.s32.totalorder %s32, 1
    %p244 = por %p242, %p243
    %p246 = scmp.ne.s32.totalorder %s231, %s245
    %p247 = scmp.eq.s32.totalorder %s32, 0
    %p248 = por %p246, %p247
    %s250 = sadd.s32 %s249, 1
    %p253 = scmp.eq.s32.totalorder %s26, 1
    %p254 = scmp.ne.s32.totalorder %s249, %s251
    %p255 = scmp.eq.s32.totalorder %s26, 0
    %p256 = por %p254, %p255
    %p257 = scmp.ne.s32.totalorder %s249, %s251
    %p258 = scmp.eq.s32.totalorder %s31, 1
    %p259 = por %p257, %p258
    %p260 = scmp.ne.s32.totalorder %s251, %s252
    %p261 = scmp.eq.s32.totalorder %s31, 0
    %p262 = por %p260, %p261
    %p263 = scmp.ne.s32.totalorder %s251, %s252
    %p264 = scmp.eq.s32.totalorder %s32, 1
    %p265 = por %p263, %p264
    %p267 = scmp.ne.s32.totalorder %s252, %s266
    %p268 = scmp.eq.s32.totalorder %s32, 0
    %p269 = por %p267, %p268
    %s271 = sadd.s32 %s270, 1
    %p274 = scmp.eq.s32.totalorder %s26, 1
    %p275 = scmp.ne.s32.totalorder %s270, %s272
    %p276 = scmp.eq.s32.totalorder %s26, 0
    %p277 = por %p275, %p276
    %p278 = scmp.ne.s32.totalorder %s270, %s272
    %p279 = scmp.eq.s32.totalorder %s31, 1
    %p280 = por %p278, %p279
    %p281 = scmp.ne.s32.totalorder %s272, %s273
    %p282 = scmp.eq.s32.totalorder %s31, 0
    %p283 = por %p281, %p282
    %p284 = scmp.ne.s32.totalorder %s272, %s273
    %p285 = scmp.eq.s32.totalorder %s32, 1
    %p286 = por %p284, %p285
    %p288 = scmp.ne.s32.totalorder %s273, %s287
    %p289 = scmp.eq.s32.totalorder %s32, 0
    %p290 = por %p288, %p289
    %s292 = sadd.s32 %s291, 1
    %p295 = scmp.eq.s32.totalorder %s26, 1
    %p296 = scmp.ne.s32.totalorder %s291, %s293
    %p297 = scmp.eq.s32.totalorder %s26, 0
    %p298 = por %p296, %p297
    %p299 = scmp.ne.s32.totalorder %s291, %s293
    %p300 = scmp.eq.s32.totalorder %s31, 1
    %p301 = por %p299, %p300
    %p302 = scmp.ne.s32.totalorder %s293, %s294
    %p303 = scmp.eq.s32.totalorder %s31, 0
    %p304 = por %p302, %p303
    %p305 = scmp.ne.s32.totalorder %s293, %s294
    %p306 = scmp.eq.s32.totalorder %s32, 1
    %p307 = por %p305, %p306
    %p309 = scmp.ne.s32.totalorder %s294, %s308
    %p310 = scmp.eq.s32.totalorder %s32, 0
    %p311 = por %p309, %p310
    %s313 = sadd.s32 %s312, 1
    %p316 = scmp.eq.s32.totalorder %s26, 1
    %p317 = scmp.ne.s32.totalorder %s312, %s314
    %p318 = scmp.eq.s32.totalorder %s26, 0
    %p319 = por %p317, %p318
    %p320 = scmp.ne.s32.totalorder %s312, %s314
    %p321 = scmp.eq.s32.totalorder %s31, 1
    %p322 = por %p320, %p321
    %p323 = scmp.ne.s32.totalorder %s314, %s315
    %p324 = scmp.eq.s32.totalorder %s31, 0
    %p325 = por %p323, %p324
    %p326 = scmp.ne.s32.totalorder %s314, %s315
    %p327 = scmp.eq.s32.totalorder %s32, 1
    %p328 = por %p326, %p327
    %p330 = scmp.ne.s32.totalorder %s315, %s329
    %p331 = scmp.eq.s32.totalorder %s32, 0
    %p332 = por %p330, %p331
    %s334 = sadd.s32 %s333, 1
    %p337 = scmp.eq.s32.totalorder %s26, 1
    %p338 = scmp.ne.s32.totalorder %s333, %s335
    %p339 = scmp.eq.s32.totalorder %s26, 0
    %p340 = por %p338, %p339
    %p341 = scmp.ne.s32.totalorder %s333, %s335
    %p342 = scmp.eq.s32.totalorder %s31, 1
    %p343 = por %p341, %p342
    %p344 = scmp.ne.s32.totalorder %s335, %s336
    %p345 = scmp.eq.s32.totalorder %s31, 0
    %p346 = por %p344, %p345
    %p347 = scmp.ne.s32.totalorder %s335, %s336
    %p348 = scmp.eq.s32.totalorder %s32, 1
    %p349 = por %p347, %p348
    %p351 = scmp.ne.s32.totalorder %s336, %s350
    %p352 = scmp.eq.s32.totalorder %s32, 0
    %p353 = por %p351, %p352
    %s355 = sadd.s32 %s354, 1
    %p358 = scmp.eq.s32.totalorder %s26, 1
    %p359 = scmp.ne.s32.totalorder %s354, %s356
    %p360 = scmp.eq.s32.totalorder %s26, 0
    %p361 = por %p359, %p360
    %p362 = scmp.ne.s32.totalorder %s354, %s356
    %p363 = scmp.eq.s32.totalorder %s31, 1
    %p364 = por %p362, %p363
    %p365 = scmp.ne.s32.totalorder %s356, %s357
    %p366 = scmp.eq.s32.totalorder %s31, 0
    %p367 = por %p365, %p366
    %p368 = scmp.ne.s32.totalorder %s356, %s357
    %p369 = scmp.eq.s32.totalorder %s32, 1
    %p370 = por %p368, %p369
    %p372 = scmp.ne.s32.totalorder %s357, %s371
    %p373 = scmp.eq.s32.totalorder %s32, 0
    %p374 = por %p372, %p373
    %s376 = sadd.s32 %s375, 1
    %p379 = scmp.eq.s32.totalorder %s26, 1
    %p380 = scmp.ne.s32.totalorder %s375, %s377
    %p381 = scmp.eq.s32.totalorder %s26, 0
    %p382 = por %p380, %p381
    %p383 = scmp.ne.s32.totalorder %s375, %s377
    %p384 = scmp.eq.s32.totalorder %s31, 1
    %p385 = por %p383, %p384
    %p386 = scmp.ne.s32.totalorder %s377, %s378
    %p387 = scmp.eq.s32.totalorder %s31, 0
    %p388 = por %p386, %p387
    %p389 = scmp.ne.s32.totalorder %s377, %s378
    %p390 = scmp.eq.s32.totalorder %s32, 1
    %p391 = por %p389, %p390
    %p393 = scmp.ne.s32.totalorder %s378, %s392
    %p394 = scmp.eq.s32.totalorder %s32, 0
    %p395 = por %p393, %p394
    %s397 = sadd.s32 %s396, 1
    %p400 = scmp.eq.s32.totalorder %s26, 1
    %p401 = scmp.ne.s32.totalorder %s396, %s398
    %p402 = scmp.eq.s32.totalorder %s26, 0
    %p403 = por %p401, %p402
    %p404 = scmp.ne.s32.totalorder %s396, %s398
    %p405 = scmp.eq.s32.totalorder %s31, 1
    %p406 = por %p404, %p405
    %p407 = scmp.ne.s32.totalorder %s398, %s399
    %p408 = scmp.eq.s32.totalorder %s31, 0
    %p409 = por %p407, %p408
    %p410 = scmp.ne.s32.totalorder %s398, %s399
    %p411 = scmp.eq.s32.totalorder %s32, 1
    %p412 = por %p410, %p411
    %p414 = scmp.ne.s32.totalorder %s399, %s413
    %p415 = scmp.eq.s32.totalorder %s32, 0
    %p416 = por %p414, %p415
    %s418 = sadd.s32 %s417, 1
    %p421 = scmp.eq.s32.totalorder %s26, 1
    %p422 = scmp.ne.s32.totalorder %s417, %s419
    %p423 = scmp.eq.s32.totalorder %s26, 0
    %p424 = por %p422, %p423
    %p425 = scmp.ne.s32.totalorder %s417, %s419
    %p426 = scmp.eq.s32.totalorder %s31, 1
    %p427 = por %p425, %p426
    %p428 = scmp.ne.s32.totalorder %s419, %s420
    %p429 = scmp.eq.s32.totalorder %s31, 0
    %p430 = por %p428, %p429
    %p431 = scmp.ne.s32.totalorder %s419, %s420
    %p432 = scmp.eq.s32.totalorder %s32, 1
    %p433 = por %p431, %p432
    %p435 = scmp.ne.s32.totalorder %s420, %s434
    %p436 = scmp.eq.s32.totalorder %s32, 0
    %p437 = por %p435, %p436
    %s439 = sadd.s32 %s438, 1
    %p442 = scmp.eq.s32.totalorder %s26, 1
    %p443 = scmp.ne.s32.totalorder %s438, %s440
    %p444 = scmp.eq.s32.totalorder %s26, 0
    %p445 = por %p443, %p444
    %p446 = scmp.ne.s32.totalorder %s438, %s440
    %p447 = scmp.eq.s32.totalorder %s31, 1
    %p448 = por %p446, %p447
    %p449 = scmp.ne.s32.totalorder %s440, %s441
    %p450 = scmp.eq.s32.totalorder %s31, 0
    %p451 = por %p449, %p450
    %p452 = scmp.ne.s32.totalorder %s440, %s441
    %p453 = scmp.eq.s32.totalorder %s32, 1
    %p454 = por %p452, %p453
    %p456 = scmp.ne.s32.totalorder %s441, %s455
    %p457 = scmp.eq.s32.totalorder %s32, 0
    %p458 = por %p456, %p457
    %s459 = ssub.s32 %s26, %s33
    %p460 = scmp.eq.s32.totalorder %s459, 0
    %s462 = sadd.s32 %s461, 1
    %s463 = scalar_select %p460, %s461, %s462
    %p466 = pneg %p460
    %p467 = scmp.eq.s32.totalorder %s26, 1
    %p468 = por %p466, %p467
    %p469 = scmp.ne.s32.totalorder %s461, %s464
    %p470 = scmp.eq.s32.totalorder %s26, 0
    %p471 = por %p469, %p470
    %p472 = scmp.ne.s32.totalorder %s461, %s464
    %p473 = scmp.eq.s32.totalorder %s31, 1
    %p474 = por %p472, %p473
    %p475 = scmp.ne.s32.totalorder %s464, %s465
    %p476 = scmp.eq.s32.totalorder %s31, 0
    %p477 = por %p475, %p476
    %p478 = scmp.ne.s32.totalorder %s464, %s465
    %p479 = scmp.eq.s32.totalorder %s32, 1
    %p480 = por %p478, %p479
    %p482 = scmp.ne.s32.totalorder %s465, %s481
    %p483 = scmp.eq.s32.totalorder %s32, 0
    %p484 = por %p482, %p483
    %p485 = scmp.le.s32.totalorder 1, %s26
    %p486 = scmp.lt.s32.totalorder %s26, 3
    %p487 = pnand %p485, %p486
    %p488 = pneg %p487
    // Predicated region
    $region9: #{down_forward.1} parent=5 // pred_check
      _
    $region10: #{down_forward.1} parent=5 // pred_check_branch
      %490 = sbr.rel (%p487) target = $region12
    $region11: #{down_forward.1} parent=5 // pred_region
      %s491 = ssub.s32 %s26, 1
      // Predicated region
      $region13: #{down_forward.1} parent=11 // pred_check
        %p492 = pneg %p73
      $region14: #{down_forward.1} parent=11 // pred_check_branch
        %494 = sbr.rel (%p492) target = $region16
      $region15: #{down_forward.1} parent=11 // pred_region
        _
      $region16: #{down_forward.1} parent=11 // pred_fallthru
        _
      // Predicated region
      $region17: #{down_forward.1} parent=11 // pred_check
        %p495 = pneg %p94
      $region18: #{down_forward.1} parent=11 // pred_check_branch
        %497 = sbr.rel (%p495) target = $region20
      $region19: #{down_forward.1} parent=11 // pred_region
        _
      $region20: #{down_forward.1} parent=11 // pred_fallthru
        _
      // Predicated region
      $region21: #{down_forward.1} parent=11 // pred_check
        %p498 = pneg %p115
      $region22: #{down_forward.1} parent=11 // pred_check_branch
        %500 = sbr.rel (%p498) target = $region24
      $region23: #{down_forward.1} parent=11 // pred_region
        _
      $region24: #{down_forward.1} parent=11 // pred_fallthru
        _
      // Predicated region
      $region25: #{down_forward.1} parent=11 // pred_check
        %p501 = pneg %p136
      $region26: #{down_forward.1} parent=11 // pred_check_branch
        %503 = sbr.rel (%p501) target = $region28
      $region27: #{down_forward.1} parent=11 // pred_region
        _
      $region28: #{down_forward.1} parent=11 // pred_fallthru
        _
      // Predicated region
      $region29: #{down_forward.1} parent=11 // pred_check
        %p504 = pneg %p157
      $region30: #{down_forward.1} parent=11 // pred_check_branch
        %506 = sbr.rel (%p504) target = $region32
      $region31: #{down_forward.1} parent=11 // pred_region
        _
      $region32: #{down_forward.1} parent=11 // pred_fallthru
        _
      // Predicated region
      $region33: #{down_forward.1} parent=11 // pred_check
        %p507 = pneg %p178
      $region34: #{down_forward.1} parent=11 // pred_check_branch
        %509 = sbr.rel (%p507) target = $region36
      $region35: #{down_forward.1} parent=11 // pred_region
        _
      $region36: #{down_forward.1} parent=11 // pred_fallthru
        _
      // Predicated region
      $region37: #{down_forward.1} parent=11 // pred_check
        %p510 = pneg %p199
      $region38: #{down_forward.1} parent=11 // pred_check_branch
        %512 = sbr.rel (%p510) target = $region40
      $region39: #{down_forward.1} parent=11 // pred_region
        _
      $region40: #{down_forward.1} parent=11 // pred_fallthru
        _
      // Predicated region
      $region41: #{down_forward.1} parent=11 // pred_check
        %p513 = pneg %p220
      $region42: #{down_forward.1} parent=11 // pred_check_branch
        %515 = sbr.rel (%p513) target = $region44
      $region43: #{down_forward.1} parent=11 // pred_region
        _
      $region44: #{down_forward.1} parent=11 // pred_fallthru
        _
      // Predicated region
      $region45: #{down_forward.1} parent=11 // pred_check
        %p516 = pneg %p241
      $region46: #{down_forward.1} parent=11 // pred_check_branch
        %518 = sbr.rel (%p516) target = $region48
      $region47: #{down_forward.1} parent=11 // pred_region
        _
      $region48: #{down_forward.1} parent=11 // pred_fallthru
        _
      // Predicated region
      $region49: #{down_forward.1} parent=11 // pred_check
        %p519 = pneg %p262
      $region50: #{down_forward.1} parent=11 // pred_check_branch
        %521 = sbr.rel (%p519) target = $region52
      $region51: #{down_forward.1} parent=11 // pred_region
        _
      $region52: #{down_forward.1} parent=11 // pred_fallthru
        _
      // Predicated region
      $region53: #{down_forward.1} parent=11 // pred_check
        %p522 = pneg %p283
      $region54: #{down_forward.1} parent=11 // pred_check_branch
        %524 = sbr.rel (%p522) target = $region56
      $region55: #{down_forward.1} parent=11 // pred_region
        _
      $region56: #{down_forward.1} parent=11 // pred_fallthru
        _
      // Predicated region
      $region57: #{down_forward.1} parent=11 // pred_check
        %p525 = pneg %p304
      $region58: #{down_forward.1} parent=11 // pred_check_branch
        %527 = sbr.rel (%p525) target = $region60
      $region59: #{down_forward.1} parent=11 // pred_region
        _
      $region60: #{down_forward.1} parent=11 // pred_fallthru
        _
      // Predicated region
      $region61: #{down_forward.1} parent=11 // pred_check
        %p528 = pneg %p325
      $region62: #{down_forward.1} parent=11 // pred_check_branch
        %530 = sbr.rel (%p528) target = $region64
      $region63: #{down_forward.1} parent=11 // pred_region
        _
      $region64: #{down_forward.1} parent=11 // pred_fallthru
        _
      // Predicated region
      $region65: #{down_forward.1} parent=11 // pred_check
        %p531 = pneg %p346
      $region66: #{down_forward.1} parent=11 // pred_check_branch
        %533 = sbr.rel (%p531) target = $region68
      $region67: #{down_forward.1} parent=11 // pred_region
        _
      $region68: #{down_forward.1} parent=11 // pred_fallthru
        _
      // Predicated region
      $region69: #{down_forward.1} parent=11 // pred_check
        %p534 = pneg %p367
      $region70: #{down_forward.1} parent=11 // pred_check_branch
        %536 = sbr.rel (%p534) target = $region72
      $region71: #{down_forward.1} parent=11 // pred_region
        _
      $region72: #{down_forward.1} parent=11 // pred_fallthru
        _
      // Predicated region
      $region73: #{down_forward.1} parent=11 // pred_check
        %p537 = pneg %p388
      $region74: #{down_forward.1} parent=11 // pred_check_branch
        %539 = sbr.rel (%p537) target = $region76
      $region75: #{down_forward.1} parent=11 // pred_region
        _
      $region76: #{down_forward.1} parent=11 // pred_fallthru
        _
      // Predicated region
      $region77: #{down_forward.1} parent=11 // pred_check
        %p540 = pneg %p409
      $region78: #{down_forward.1} parent=11 // pred_check_branch
        %542 = sbr.rel (%p540) target = $region80
      $region79: #{down_forward.1} parent=11 // pred_region
        _
      $region80: #{down_forward.1} parent=11 // pred_fallthru
        _
      // Predicated region
      $region81: #{down_forward.1} parent=11 // pred_check
        %p543 = pneg %p430
      $region82: #{down_forward.1} parent=11 // pred_check_branch
        %545 = sbr.rel (%p543) target = $region84
      $region83: #{down_forward.1} parent=11 // pred_region
        _
      $region84: #{down_forward.1} parent=11 // pred_fallthru
        _
      // Predicated region
      $region85: #{down_forward.1} parent=11 // pred_check
        %p546 = pneg %p451
      $region86: #{down_forward.1} parent=11 // pred_check_branch
        %548 = sbr.rel (%p546) target = $region88
      $region87: #{down_forward.1} parent=11 // pred_region
        _
      $region88: #{down_forward.1} parent=11 // pred_fallthru
        _
    $region12: #{down_forward.1} parent=5 // pred_fallthru
      _
    %p549 = scmp.lt.s32.totalorder %s26, 2
    // Predicated region
    $region89: #{down_forward.1} parent=5 // pred_check
      %p550 = pneg %p549
    $region90: #{down_forward.1} parent=5 // pred_check_branch
      %552 = sbr.rel (%p550) target = $region92
    $region91: #{down_forward.1} parent=5 // pred_region
      // Predicated region
      $region93: #{down_forward.1} parent=91 // pred_check
        %p553 = pneg %p46
      $region94: #{down_forward.1} parent=91 // pred_check_branch
        %555 = sbr.rel (%p553) target = $region96
      $region95: #{down_forward.1} parent=91 // pred_region
        %p556 = scmp.lt.s32.totalorder %s26, 1
        %s557 = scalar_select %p556, %s26, 1
        %s558 = smul.addr %s557, 2
        %s559 = smul.addr %s558, 8
        %s560 = scalar_lea.vmem %s0, %s559
      $region96: #{down_forward.1} parent=91 // pred_fallthru
        _
    $region92: #{down_forward.1} parent=5 // pred_fallthru
      _
    %p561 = scmp.le.s32.totalorder 1, %s26
    %p562 = scmp.lt.s32.totalorder %s26, 3
    %p563 = pnand %p561, %p562
    %p564 = pneg %p563
    // Predicated region
    $region97: #{down_forward.1} parent=5 // pred_check
      _
    $region98: #{down_forward.1} parent=5 // pred_check_branch
      %566 = sbr.rel (%p563) target = $region100
    $region99: #{down_forward.1} parent=5 // pred_region
      %s567 = ssub.s32 %s26, 1
      %p568 = scmp.lt.s32.totalorder %s31, 1
      %s569 = scalar_select %p568, %s31, 1
      %s570 = smul.addr %s569, 2
      %s571 = smul.addr %s570, 8
      %s572 = scalar_lea.vmem %s0, %s571
      %p573 = pneg %p52
      %p574 = pneg %p49
      %p575 = pneg %p73
      %p576 = pneg %p70
      %p577 = pneg %p94
      %p578 = pneg %p91
      %p579 = pneg %p115
      %p580 = pneg %p112
      %p581 = pneg %p136
      %p582 = pneg %p133
      %p583 = pneg %p157
      %p584 = pneg %p154
      %p585 = pneg %p178
      %p586 = pneg %p175
      %p587 = pneg %p199
      %p588 = pneg %p196
      %p589 = pneg %p220
      %p590 = pneg %p217
      %p591 = pneg %p241
      %p592 = pneg %p238
      %p593 = pneg %p262
      %p594 = pneg %p259
      %p595 = pneg %p283
      %p596 = pneg %p280
      %p597 = pneg %p304
      %p598 = pneg %p301
      %p599 = pneg %p325
      %p600 = pneg %p322
      %p601 = pneg %p346
      %p602 = pneg %p343
      %p603 = pneg %p367
      %p604 = pneg %p364
      %p605 = pneg %p388
      %p606 = pneg %p385
      %p607 = pneg %p409
      %p608 = pneg %p406
      %p609 = pneg %p430
      %p610 = pneg %p427
      %p611 = pneg %p451
      %p612 = pneg %p448
      %p613 = pneg %p477
      %p614 = pneg %p474
      %p615 = scmp.lt.s32.totalorder %s31, 1
      %s616 = scalar_select %p615, %s31, 1
      %s617 = smul.addr %s616, 4
      %s618 = smul.addr %s617, 8
      %s619 = scalar_lea.vmem %s20, %s618
      %p620 = scmp.lt.s32.totalorder %s31, 1
      %s621 = scalar_select %p620, %s31, 1
      %s622 = smul.addr %s621, 2
      %s623 = smul.addr %s622, 8
      %s624 = scalar_lea.vmem %s0, %s623
      %p625 = scmp.lt.s32.totalorder %s31, 1
      %s626 = scalar_select %p625, %s31, 1
      %s627 = smul.addr %s626, 4
      %s628 = smul.addr %s627, 8
      %s629 = scalar_lea.vmem %s20, %s628
      %v631 = vld [vmem:[%s624] sm:$0xff]
      %v632 = vld [vmem:[%s624 + $0x8] sm:$0xff]
      %v633 = vld [vmem:[%s6] sm:$0xff]
      %v634 = vld [vmem:[%s6 + $0x8] sm:$0xff]
      %v635 = vld [vmem:[%s7] sm:$0xff]
      %v636 = vld [vmem:[%s7 + $0x8] sm:$0xff]
      %v637 = vld [vmem:[%s16] sm:$0xff]
      %v638 = vld [vmem:[%s16 + $0x8] sm:$0xff]
      %639 = vadd.xlane.f32.xlu0 %v631
      %v640 = vpop.xlane.xlu0 %639
      %641 = vadd.xlane.f32.xlu0 %v632
      %v642 = vpop.xlane.xlu0 %641
      %v643 = vmul.f32 %v631, %v631
      %v644 = vmul.f32 %v632, %v632
      %645 = vadd.xlane.f32.xlu0 %v643
      %v646 = vpop.xlane.xlu0 %645
      %647 = vadd.xlane.f32.xlu0 %v644
      %v648 = vpop.xlane.xlu0 %647
      %vm649 = vcmask 7168
      %v650 = vsel %vm649, %v640, %v646
      %v651 = vsel %vm649, %v642, %v648
      %vm652 = vcmask 130048
      %v654 = vsel %vm652, %v637, 0
      %v657 = vsel %vm652, %v638, 0
      %659 = vmatprep.subr.mxu0 0.0
      %660 = vmatpush1.msra.mxu0 %v650
      %661 = vmatprep.subr.mxu0 0.0
      %662 = vmatpush1.msra.mxu0 %v651
      %663 = vmatprep.subr.mxu0 0.0
      %664 = vmatpush1.msra.mxu0 0.0
      %665 = vmatprep.subr.mxu0 0.0
      %666 = vmatpush1.msra.mxu0 0.0
      %667 = vmatprep.subr.mxu0 0.0
      %668 = vmatpush1.msra.mxu0 0.0
      %669 = vmatprep.subr.mxu0 0.0
      %670 = vmatpush1.msra.mxu0 0.0
      %671 = vmatprep.subr.mxu0 0.0
      %672 = vmatpush1.msra.mxu0 0.0
      %673 = vmatprep.subr.mxu0 0.0
      %674 = vmatpush1.msra.mxu0 0.0
      %675 = vmatprep.subr.mxu0 0.0
      %676 = vmatpush1.msra.mxu0 0.0
      %677 = vmatprep.subr.mxu0 0.0
      %678 = vmatpush1.msra.mxu0 0.0
      %679 = vmatprep.subr.mxu0 0.0
      %680 = vmatpush1.msra.mxu0 0.0
      %681 = vmatprep.subr.mxu0 0.0
      %682 = vmatpush1.msra.mxu0 0.0
      %683 = vmatprep.subr.mxu0 0.0
      %684 = vmatpush1.msra.mxu0 0.0
      %685 = vmatprep.subr.mxu0 0.0
      %686 = vmatpush1.msra.mxu0 0.0
      %687 = vmatprep.subr.mxu0 0.0
      %688 = vmatpush1.msra.mxu0 0.0
      %689 = vmatprep.subr.mxu0 0.0
      %690 = vmatpush1.msra.mxu0 0.0
      %691 = vmatprep.subr.mxu0 0.0
      %692 = vmatpush1.msra.mxu0 0.0
      %693 = vmatprep.subr.mxu0 0.0
      %694 = vmatpush1.msra.mxu0 0.0
      %695 = vmatprep.subr.mxu0 0.0
      %696 = vmatpush1.msra.mxu0 0.0
      %697 = vmatprep.subr.mxu0 0.0
      %698 = vmatpush1.msra.mxu0 0.0
      %699 = vmatprep.subr.mxu0 0.0
      %700 = vmatpush1.msra.mxu0 0.0
      %701 = vmatprep.subr.mxu0 0.0
      %702 = vmatpush1.msra.mxu0 0.0
      %703 = vmatprep.subr.mxu0 0.0
      %704 = vmatpush1.msra.mxu0 0.0
      %705 = vmatprep.subr.mxu0 0.0
      %706 = vmatpush1.msra.mxu0 0.0
      %707 = vmatprep.subr.mxu0 0.0
      %708 = vmatpush1.msra.mxu0 0.0
      %709 = vmatprep.subr.mxu0 0.0
      %710 = vmatpush1.msra.mxu0 0.0
      %711 = vmatprep.subr.mxu0 0.0
      %712 = vmatpush1.msra.mxu0 0.0
      %713 = vmatprep.subr.mxu0 0.0
      %714 = vmatpush1.msra.mxu0 0.0
      %715 = vmatprep.subr.mxu0 0.0
      %716 = vmatpush1.msra.mxu0 0.0
      %717 = vmatprep.subr.mxu0 0.0
      %718 = vmatpush1.msra.mxu0 0.0
      %719 = vmatprep.subr.mxu0 0.0
      %720 = vmatpush1.msra.mxu0 0.0
      %721 = vmatprep.subr.mxu0 0.0
      %722 = vmatpush1.msra.mxu0 0.0
      %723 = vmatprep.mubr.f32.mxu0 0.0
      %724 = vmatmul.mubr.f32.gmra.mrb[0].mxu0 %v654
      %v725 = vpop.f32.mrb[0].mxu0
      %v726 = vadd.f32 0.0, %v725
      %v727 = vpop.f32.mrb[0].mxu0
      %728 = vmatprep.mubr.f32.mxu0 0.0
      %729 = vmatmul.mubr.f32.gmra.mrb[0].mxu0 %v657
      %v730 = vpop.f32.mrb[0].mxu0
      %v731 = vadd.f32 0.0, %v730
      %v732 = vpop.f32.mrb[0].mxu0
      %733 = vdwg.mxu0
      %v734 = vmul.f32 %v726, %v726
      %v735 = vmul.f32 %v731, %v731
      %738 = vrot.lane.b32.xlu0 %v734, 1
      %v739 = vpop.permute.xlu0 %738
      %740 = vrot.lane.b32.xlu0 %v735, 1
      %v741 = vpop.permute.xlu0 %740
      %v744 = vsub.f32 %v726, %v739
      %v745 = vsub.f32 %v731, %v741
      %v746 = vmax.f32 %v744, 0.0
      %v747 = vmax.f32 %v745, 0.0
      %v748 = vadd.f32 %v746, 1e-05
      %v749 = vadd.f32 %v747, 1e-05
      %v750 = vrsqrt.pop %v748
      %v751 = vrsqrt.pop %v749
      %754 = vrot.lane.b32.xlu0 %v750, 127
      %v755 = vpop.permute.xlu0 %754
      %756 = vrot.lane.b32.xlu0 %v751, 127
      %v757 = vpop.permute.xlu0 %756
      %v760 = vmul.f32 %v633, %v755
      %v761 = vmul.f32 %v634, %v757
      %v762 = vmul.f32 %v726, %v760
      %v763 = vmul.f32 %v731, %v761
      %v764 = vsub.f32 %v635, %v762
      %v765 = vsub.f32 %v636, %v763
      %767 = vset.pattern.permute.xlu0 0
      %768 = vperm.xlu0 %767, %v760
      %v769 = vpop.permute.xlu0 %768
      %772 = vset.pattern.permute.xlu0 0
      %773 = vperm.xlu0 %772, %v761
      %v774 = vpop.permute.xlu0 %773
      %v776 = vmul.f32 %v631, %v769
      %v777 = vmul.f32 %v632, %v774
      %779 = vset.pattern.permute.xlu0 0
      %780 = vperm.xlu0 %779, %v764
      %v781 = vpop.permute.xlu0 %780
      %784 = vset.pattern.permute.xlu0 0
      %785 = vperm.xlu0 %784, %v765
      %v786 = vpop.permute.xlu0 %785
      %v788 = vadd.f32 %v776, %v781
      %v789 = vadd.f32 %v777, %v786
      %v790 = vmax.f32 %v788, 0.0
      %v791 = vmax.f32 %v789, 0.0
      %v792 = vld [vmem:[%s1] sm:$0xff]
      %v793 = vld [vmem:[%s1 + $0x8] sm:$0xff]
      %v794 = vld [vmem:[%s1 + $0x10] sm:$0xff]
      %v795 = vld [vmem:[%s1 + $0x18] sm:$0xff]
      %v796 = vld [vmem:[%s1 + $0x20] sm:$0xff]
      %v797 = vld [vmem:[%s1 + $0x28] sm:$0xff]
      %v798 = vld [vmem:[%s1 + $0x30] sm:$0xff]
      %v799 = vld [vmem:[%s1 + $0x38] sm:$0xff]
      %v800 = vld [vmem:[%s2] sm:$0xff]
      %v801 = vld [vmem:[%s2 + $0x8] sm:$0xff]
      %v802 = vld [vmem:[%s2 + $0x10] sm:$0xff]
      %v803 = vld [vmem:[%s2 + $0x18] sm:$0xff]
      %804 = vrot.lane.b32.xlu0 %v790, 73
      %v805 = vpop.permute.xlu0 %804
      %806 = vrot.lane.b32.xlu0 %v791, 73
      %v807 = vpop.permute.xlu0 %806
      %v808 = vld [vmem:[%s18] sm:$0x1]
      %v810 = vlaneseq
      %v811 = vshrl.u32 %v810, 7
      %v812 = vsub.s32 0, %v811
      %v813 = vrot.slane %v808, %v812
      %v815 = vmul.f32 %v805, %v813
      %v816 = vmul.f32 %v807, %v813
      %v817 = vpack.c.bf16 %v816, %v815
      %818 = vrot.lane.b32.xlu0 %v790, 72
      %v819 = vpop.permute.xlu0 %818
      %820 = vrot.lane.b32.xlu0 %v791, 72
      %v821 = vpop.permute.xlu0 %820
      %s822 = scalar_lea.vmem %s18, 1
      %v823 = vld [vmem:[%s822] sm:$0x1]
      %v825 = vlaneseq
      %v826 = vshrl.u32 %v825, 7
      %v827 = vsub.s32 0, %v826
      %v828 = vrot.slane %v823, %v827
      %v830 = vmul.f32 %v819, %v828
      %v831 = vmul.f32 %v821, %v828
      %v832 = vpack.c.bf16 %v831, %v830
      %833 = vrot.lane.b32.xlu0 %v790, 71
      %v834 = vpop.permute.xlu0 %833
      %835 = vrot.lane.b32.xlu0 %v791, 71
      %v836 = vpop.permute.xlu0 %835
      %s837 = scalar_lea.vmem %s18, 2
      %v838 = vld [vmem:[%s837] sm:$0x1]
      %v840 = vlaneseq
      %v841 = vshrl.u32 %v840, 7
      %v842 = vsub.s32 0, %v841
      %v843 = vrot.slane %v838, %v842
      %v845 = vmul.f32 %v834, %v843
      %v846 = vmul.f32 %v836, %v843
      %v847 = vpack.c.bf16 %v846, %v845
      %848 = vrot.lane.b32.xlu0 %v790, 65
      %v849 = vpop.permute.xlu0 %848
      %850 = vrot.lane.b32.xlu0 %v791, 65
      %v851 = vpop.permute.xlu0 %850
      %s852 = scalar_lea.vmem %s18, 3
      %v853 = vld [vmem:[%s852] sm:$0x1]
      %v855 = vlaneseq
      %v856 = vshrl.u32 %v855, 7
      %v857 = vsub.s32 0, %v856
      %v858 = vrot.slane %v853, %v857
      %v860 = vmul.f32 %v849, %v858
      %v861 = vmul.f32 %v851, %v858
      %v862 = vpack.c.bf16 %v861, %v860
      %863 = vrot.lane.b32.xlu0 %v790, 64
      %v864 = vpop.permute.xlu0 %863
      %865 = vrot.lane.b32.xlu0 %v791, 64
      %v866 = vpop.permute.xlu0 %865
      %s867 = scalar_lea.vmem %s18, 4
      %v868 = vld [vmem:[%s867] sm:$0x1]
      %v870 = vlaneseq
      %v871 = vshrl.u32 %v870, 7
      %v872 = vsub.s32 0, %v871
      %v873 = vrot.slane %v868, %v872
      %v875 = vmul.f32 %v864, %v873
      %v876 = vmul.f32 %v866, %v873
      %v877 = vpack.c.bf16 %v876, %v875
      %878 = vrot.lane.b32.xlu0 %v790, 63
      %v879 = vpop.permute.xlu0 %878
      %880 = vrot.lane.b32.xlu0 %v791, 63
      %v881 = vpop.permute.xlu0 %880
      %s882 = scalar_lea.vmem %s18, 5
      %v883 = vld [vmem:[%s882] sm:$0x1]
      %v885 = vlaneseq
      %v886 = vshrl.u32 %v885, 7
      %v887 = vsub.s32 0, %v886
      %v888 = vrot.slane %v883, %v887
      %v890 = vmul.f32 %v879, %v888
      %v891 = vmul.f32 %v881, %v888
      %v892 = vpack.c.bf16 %v891, %v890
      %893 = vrot.lane.b32.xlu0 %v790, 57
      %v894 = vpop.permute.xlu0 %893
      %895 = vrot.lane.b32.xlu0 %v791, 57
      %v896 = vpop.permute.xlu0 %895
      %s897 = scalar_lea.vmem %s18, 6
      %v898 = vld [vmem:[%s897] sm:$0x1]
      %v900 = vlaneseq
      %v901 = vshrl.u32 %v900, 7
      %v902 = vsub.s32 0, %v901
      %v903 = vrot.slane %v898, %v902
      %v905 = vmul.f32 %v894, %v903
      %v906 = vmul.f32 %v896, %v903
      %v907 = vpack.c.bf16 %v906, %v905
      %908 = vrot.lane.b32.xlu0 %v790, 56
      %v909 = vpop.permute.xlu0 %908
      %910 = vrot.lane.b32.xlu0 %v791, 56
      %v911 = vpop.permute.xlu0 %910
      %s912 = scalar_lea.vmem %s18, 7
      %v913 = vld [vmem:[%s912] sm:$0x1]
      %v915 = vlaneseq
      %v916 = vshrl.u32 %v915, 7
      %v917 = vsub.s32 0, %v916
      %v918 = vrot.slane %v913, %v917
      %v920 = vmul.f32 %v909, %v918
      %v921 = vmul.f32 %v911, %v918
      %v922 = vpack.c.bf16 %v921, %v920
      %923 = vrot.lane.b32.xlu0 %v790, 55
      %v924 = vpop.permute.xlu0 %923
      %925 = vrot.lane.b32.xlu0 %v791, 55
      %v926 = vpop.permute.xlu0 %925
      %s927 = scalar_lea.vmem %s18, 8
      %v928 = vld [vmem:[%s927] sm:$0x1]
      %v930 = vlaneseq
      %v931 = vshrl.u32 %v930, 7
      %v932 = vsub.s32 0, %v931
      %v933 = vrot.slane %v928, %v932
      %v935 = vmul.f32 %v924, %v933
      %v936 = vmul.f32 %v926, %v933
      %v937 = vpack.c.bf16 %v936, %v935
      %938 = vrot.lane.b32.xlu0 %v790, 9
      %v939 = vpop.permute.xlu0 %938
      %940 = vrot.lane.b32.xlu0 %v791, 9
      %v941 = vpop.permute.xlu0 %940
      %s942 = scalar_lea.vmem %s18, 9
      %v943 = vld [vmem:[%s942] sm:$0x1]
      %v945 = vlaneseq
      %v946 = vshrl.u32 %v945, 7
      %v947 = vsub.s32 0, %v946
      %v948 = vrot.slane %v943, %v947
      %v950 = vmul.f32 %v939, %v948
      %v951 = vmul.f32 %v941, %v948
      %v952 = vpack.c.bf16 %v951, %v950
      %953 = vrot.lane.b32.xlu0 %v790, 8
      %v954 = vpop.permute.xlu0 %953
      %955 = vrot.lane.b32.xlu0 %v791, 8
      %v956 = vpop.permute.xlu0 %955
      %s957 = scalar_lea.vmem %s18, 10
      %v958 = vld [vmem:[%s957] sm:$0x1]
      %v960 = vlaneseq
      %v961 = vshrl.u32 %v960, 7
      %v962 = vsub.s32 0, %v961
      %v963 = vrot.slane %v958, %v962
      %v965 = vmul.f32 %v954, %v963
      %v966 = vmul.f32 %v956, %v963
      %v967 = vpack.c.bf16 %v966, %v965
      %968 = vrot.lane.b32.xlu0 %v790, 7
      %v969 = vpop.permute.xlu0 %968
      %970 = vrot.lane.b32.xlu0 %v791, 7
      %v971 = vpop.permute.xlu0 %970
      %s972 = scalar_lea.vmem %s18, 11
      %v973 = vld [vmem:[%s972] sm:$0x1]
      %v975 = vlaneseq
      %v976 = vshrl.u32 %v975, 7
      %v977 = vsub.s32 0, %v976
      %v978 = vrot.slane %v973, %v977
      %v980 = vmul.f32 %v969, %v978
      %v981 = vmul.f32 %v971, %v978
      %v982 = vpack.c.bf16 %v981, %v980
      %983 = vrot.lane.b32.xlu0 %v790, 1
      %v984 = vpop.permute.xlu0 %983
      %985 = vrot.lane.b32.xlu0 %v791, 1
      %v986 = vpop.permute.xlu0 %985
      %s987 = scalar_lea.vmem %s18, 12
      %v988 = vld [vmem:[%s987] sm:$0x1]
      %v990 = vlaneseq
      %v991 = vshrl.u32 %v990, 7
      %v992 = vsub.s32 0, %v991
      %v993 = vrot.slane %v988, %v992
      %v995 = vmul.f32 %v984, %v993
      %v996 = vmul.f32 %v986, %v993
      %v997 = vpack.c.bf16 %v996, %v995
      %v998 = vpack.c.bf16 %v791, %v790
      %999 = vrot.lane.b32.xlu0 %v790, 127
      %v1000 = vpop.permute.xlu0 %999
      %1001 = vrot.lane.b32.xlu0 %v791, 127
      %v1002 = vpop.permute.xlu0 %1001
      %s1003 = scalar_lea.vmem %s18, 14
      %v1004 = vld [vmem:[%s1003] sm:$0x1]
      %v1006 = vlaneseq
      %v1007 = vshrl.u32 %v1006, 7
      %v1008 = vsub.s32 0, %v1007
      %v1009 = vrot.slane %v1004, %v1008
      %v1011 = vmul.f32 %v1000, %v1009
      %v1012 = vmul.f32 %v1002, %v1009
      %v1013 = vpack.c.bf16 %v1012, %v1011
      %1014 = vrot.lane.b32.xlu0 %v790, 121
      %v1015 = vpop.permute.xlu0 %1014
      %1016 = vrot.lane.b32.xlu0 %v791, 121
      %v1017 = vpop.permute.xlu0 %1016
      %s1018 = scalar_lea.vmem %s18, 15
      %v1019 = vld [vmem:[%s1018] sm:$0x1]
      %v1021 = vlaneseq
      %v1022 = vshrl.u32 %v1021, 7
      %v1023 = vsub.s32 0, %v1022
      %v1024 = vrot.slane %v1019, %v1023
      %v1026 = vmul.f32 %v1015, %v1024
      %v1027 = vmul.f32 %v1017, %v1024
      %v1028 = vpack.c.bf16 %v1027, %v1026
      %1029 = vrot.lane.b32.xlu0 %v790, 120
      %v1030 = vpop.permute.xlu0 %1029
      %1031 = vrot.lane.b32.xlu0 %v791, 120
      %v1032 = vpop.permute.xlu0 %1031
      %s1033 = scalar_lea.vmem %s18, 16
      %v1034 = vld [vmem:[%s1033] sm:$0x1]
      %v1036 = vlaneseq
      %v1037 = vshrl.u32 %v1036, 7
      %v1038 = vsub.s32 0, %v1037
      %v1039 = vrot.slane %v1034, %v1038
      %v1041 = vmul.f32 %v1030, %v1039
      %v1042 = vmul.f32 %v1032, %v1039
      %v1043 = vpack.c.bf16 %v1042, %v1041
      %1044 = vrot.lane.b32.xlu0 %v790, 119
      %v1045 = vpop.permute.xlu0 %1044
      %1046 = vrot.lane.b32.xlu0 %v791, 119
      %v1047 = vpop.permute.xlu0 %1046
      %s1048 = scalar_lea.vmem %s18, 17
      %v1049 = vld [vmem:[%s1048] sm:$0x1]
      %v1051 = vlaneseq
      %v1052 = vshrl.u32 %v1051, 7
      %v1053 = vsub.s32 0, %v1052
      %v1054 = vrot.slane %v1049, %v1053
      %v1056 = vmul.f32 %v1045, %v1054
      %v1057 = vmul.f32 %v1047, %v1054
      %v1058 = vpack.c.bf16 %v1057, %v1056
      %s1059 = scalar_lea.vmem %s18, 18
      %v1060 = vld [vmem:[%s1059] sm:$0x1]
      %v1062 = vlaneseq
      %v1063 = vshrl.u32 %v1062, 7
      %v1064 = vsub.s32 0, %v1063
      %v1065 = vrot.slane %v1060, %v1064
      %v1067 = vmul.f32 %v805, %v1065
      %v1068 = vmul.f32 %v807, %v1065
      %v1069 = vpack.c.bf16 %v1068, %v1067
      %s1070 = scalar_lea.vmem %s18, 19
      %v1071 = vld [vmem:[%s1070] sm:$0x1]
      %v1073 = vlaneseq
      %v1074 = vshrl.u32 %v1073, 7
      %v1075 = vsub.s32 0, %v1074
      %v1076 = vrot.slane %v1071, %v1075
      %v1078 = vmul.f32 %v819, %v1076
      %v1079 = vmul.f32 %v821, %v1076
      %v1080 = vpack.c.bf16 %v1079, %v1078
      %s1081 = scalar_lea.vmem %s18, 20
      %v1082 = vld [vmem:[%s1081] sm:$0x1]
      %v1084 = vlaneseq
      %v1085 = vshrl.u32 %v1084, 7
      %v1086 = vsub.s32 0, %v1085
      %v1087 = vrot.slane %v1082, %v1086
      %v1089 = vmul.f32 %v834, %v1087
      %v1090 = vmul.f32 %v836, %v1087
      %v1091 = vpack.c.bf16 %v1090, %v1089
      %s1092 = scalar_lea.vmem %s18, 21
      %v1093 = vld [vmem:[%s1092] sm:$0x1]
      %v1095 = vlaneseq
      %v1096 = vshrl.u32 %v1095, 7
      %v1097 = vsub.s32 0, %v1096
      %v1098 = vrot.slane %v1093, %v1097
      %v1100 = vmul.f32 %v849, %v1098
      %v1101 = vmul.f32 %v851, %v1098
      %v1102 = vpack.c.bf16 %v1101, %v1100
      %s1103 = scalar_lea.vmem %s18, 22
      %v1104 = vld [vmem:[%s1103] sm:$0x1]
      %v1106 = vlaneseq
      %v1107 = vshrl.u32 %v1106, 7
      %v1108 = vsub.s32 0, %v1107
      %v1109 = vrot.slane %v1104, %v1108
      %v1111 = vmul.f32 %v864, %v1109
      %v1112 = vmul.f32 %v866, %v1109
      %v1113 = vpack.c.bf16 %v1112, %v1111
      %s1114 = scalar_lea.vmem %s18, 23
      %v1115 = vld [vmem:[%s1114] sm:$0x1]
      %v1117 = vlaneseq
      %v1118 = vshrl.u32 %v1117, 7
      %v1119 = vsub.s32 0, %v1118
      %v1120 = vrot.slane %v1115, %v1119
      %v1122 = vmul.f32 %v879, %v1120
      %v1123 = vmul.f32 %v881, %v1120
      %v1124 = vpack.c.bf16 %v1123, %v1122
      %s1125 = scalar_lea.vmem %s18, 24
      %v1126 = vld [vmem:[%s1125] sm:$0x1]
      %v1128 = vlaneseq
      %v1129 = vshrl.u32 %v1128, 7
      %v1130 = vsub.s32 0, %v1129
      %v1131 = vrot.slane %v1126, %v1130
      %v1133 = vmul.f32 %v894, %v1131
      %v1134 = vmul.f32 %v896, %v1131
      %v1135 = vpack.c.bf16 %v1134, %v1133
      %s1136 = scalar_lea.vmem %s18, 25
      %v1137 = vld [vmem:[%s1136] sm:$0x1]
      %v1139 = vlaneseq
      %v1140 = vshrl.u32 %v1139, 7
      %v1141 = vsub.s32 0, %v1140
      %v1142 = vrot.slane %v1137, %v1141
      %v1144 = vmul.f32 %v909, %v1142
      %v1145 = vmul.f32 %v911, %v1142
      %v1146 = vpack.c.bf16 %v1145, %v1144
      %s1147 = scalar_lea.vmem %s18, 26
      %v1148 = vld [vmem:[%s1147] sm:$0x1]
      %v1150 = vlaneseq
      %v1151 = vshrl.u32 %v1150, 7
      %v1152 = vsub.s32 0, %v1151
      %v1153 = vrot.slane %v1148, %v1152
      %v1155 = vmul.f32 %v924, %v1153
      %v1156 = vmul.f32 %v926, %v1153
      %v1157 = vpack.c.bf16 %v1156, %v1155
      %1159 = vset.pattern.permute.xlu0 0
      %1160 = vperm.xlu0 %1159, %v800
      %v1161 = vpop.permute.xlu0 %1160
      %1164 = vset.pattern.permute.xlu0 0
      %1165 = vperm.xlu0 %1164, %v801
      %v1166 = vpop.permute.xlu0 %1165
      %1169 = vset.pattern.permute.xlu0 0
      %1170 = vperm.xlu0 %1169, %v802
      %v1171 = vpop.permute.xlu0 %1170
      %1174 = vset.pattern.permute.xlu0 0
      %1175 = vperm.xlu0 %1174, %v803
      %v1176 = vpop.permute.xlu0 %1175
      %v1186 = vunpack.c.l.b16 %v792
      %v1187 = vunpack.c.h.b16 %v792
      %v1188 = vunpack.c.l.b16 %v793
      %v1189 = vunpack.c.h.b16 %v793
      %v1190 = vunpack.c.l.b16 %v794
      %v1191 = vunpack.c.h.b16 %v794
      %v1192 = vunpack.c.l.b16 %v795
      %v1193 = vunpack.c.h.b16 %v795
      %v1194 = vunpack.c.l.b16 %v796
      %v1195 = vunpack.c.h.b16 %v796
      %v1196 = vunpack.c.l.b16 %v797
      %v1197 = vunpack.c.h.b16 %v797
      %v1198 = vunpack.c.l.b16 %v798
      %v1199 = vunpack.c.h.b16 %v798
      %v1200 = vunpack.c.l.b16 %v799
      %v1201 = vunpack.c.h.b16 %v799
      %v1202 = vpack.c.b16 %v1190, %v1186
      %v1203 = vpack.c.b16 %v1191, %v1187
      %v1204 = vpack.c.b16 %v1192, %v1188
      %v1205 = vpack.c.b16 %v1193, %v1189
      %v1206 = vpack.c.b16 %v1198, %v1194
      %v1207 = vpack.c.b16 %v1199, %v1195
      %v1208 = vpack.c.b16 %v1200, %v1196
      %v1209 = vpack.c.b16 %v1201, %v1197
      %vm1216 = vcmask 392192
      %v1218 = vsel %vm1216, %v1205, 0
      %v1221 = vsel %vm1216, %v1209, 0
      %1223 = vmatprep.subr.bf16.mxu0 0
      %1224 = vmatpush1.bf16.msra.mxu0 %v817
      %1225 = vmatprep.subr.bf16.mxu0 0
      %1226 = vmatpush1.bf16.msra.mxu0 %v832
      %1227 = vmatprep.subr.bf16.mxu0 0
      %1228 = vmatpush1.bf16.msra.mxu0 %v847
      %1229 = vmatprep.subr.bf16.mxu0 0
      %1230 = vmatpush1.bf16.msra.mxu0 %v862
      %1231 = vmatprep.subr.bf16.mxu0 0
      %1232 = vmatpush1.bf16.msra.mxu0 %v877
      %1233 = vmatprep.subr.bf16.mxu0 0
      %1234 = vmatpush1.bf16.msra.mxu0 %v892
      %1235 = vmatprep.subr.bf16.mxu0 0
      %1236 = vmatpush1.bf16.msra.mxu0 %v907
      %1237 = vmatprep.subr.bf16.mxu0 0
      %1238 = vmatpush1.bf16.msra.mxu0 %v922
      %1239 = vmatprep.subr.bf16.mxu0 0
      %1240 = vmatpush1.bf16.msra.mxu0 %v937
      %1241 = vmatprep.subr.bf16.mxu0 0
      %1242 = vmatpush1.bf16.msra.mxu0 %v952
      %1243 = vmatprep.subr.bf16.mxu0 0
      %1244 = vmatpush1.bf16.msra.mxu0 %v967
      %1245 = vmatprep.subr.bf16.mxu0 0
      %1246 = vmatpush1.bf16.msra.mxu0 %v982
      %1247 = vmatprep.subr.bf16.mxu0 0
      %1248 = vmatpush1.bf16.msra.mxu0 %v997
      %1249 = vmatprep.subr.bf16.mxu0 0
      %1250 = vmatpush1.bf16.msra.mxu0 %v998
      %1251 = vmatprep.subr.bf16.mxu0 0
      %1252 = vmatpush1.bf16.msra.mxu0 %v1013
      %1253 = vmatprep.subr.bf16.mxu0 0
      %1254 = vmatpush1.bf16.msra.mxu0 %v1028
      %1255 = vmatprep.mubr.bf16.mxu0 %v1203
      %1256 = vmatmul.mubr.bf16.gmra.mrb[0].mxu0 %v1202
      %v1257 = vpop.f32.mrb[0].mxu0
      %v1258 = vadd.f32 %v1161, %v1257
      %v1259 = vpop.f32.mrb[0].mxu0
      %v1260 = vpop.f32.mrb[0].mxu0
      %v1261 = vadd.f32 %v1166, %v1260
      %v1262 = vpop.f32.mrb[0].mxu0
      %1263 = vmatprep.mubr.bf16.mxu0 %v1207
      %1264 = vmatmul.mubr.bf16.gmra.mrb[0].mxu0 %v1206
      %v1265 = vpop.f32.mrb[0].mxu0
      %v1266 = vadd.f32 %v1171, %v1265
      %v1267 = vpop.f32.mrb[0].mxu0
      %v1268 = vpop.f32.mrb[0].mxu0
      %v1269 = vadd.f32 %v1176, %v1268
      %v1270 = vpop.f32.mrb[0].mxu0
      %1271 = vdwg.mxu0
      %1272 = vmatprep.subr.bf16.mxu0 0
      %1273 = vmatpush1.bf16.msra.mxu0 %v1043
      %1274 = vmatprep.subr.bf16.mxu0 0
      %1275 = vmatpush1.bf16.msra.mxu0 %v1058
      %1276 = vmatprep.subr.bf16.mxu0 0
      %1277 = vmatpush1.bf16.msra.mxu0 %v1069
      %1278 = vmatprep.subr.bf16.mxu0 0
      %1279 = vmatpush1.bf16.msra.mxu0 %v1080
      %1280 = vmatprep.subr.bf16.mxu0 0
      %1281 = vmatpush1.bf16.msra.mxu0 %v1091
      %1282 = vmatprep.subr.bf16.mxu0 0
      %1283 = vmatpush1.bf16.msra.mxu0 %v1102
      %1284 = vmatprep.subr.bf16.mxu0 0
      %1285 = vmatpush1.bf16.msra.mxu0 %v1113
      %1286 = vmatprep.subr.bf16.mxu0 0
      %1287 = vmatpush1.bf16.msra.mxu0 %v1124
      %1288 = vmatprep.subr.bf16.mxu0 0
      %1289 = vmatpush1.bf16.msra.mxu0 %v1135
      %1290 = vmatprep.subr.bf16.mxu0 0
      %1291 = vmatpush1.bf16.msra.mxu0 %v1146
      %1292 = vmatprep.subr.bf16.mxu0 0
      %1293 = vmatpush1.bf16.msra.mxu0 %v1157
      %1294 = vmatprep.subr.bf16.mxu0 0
      %1295 = vmatpush1.bf16.msra.mxu0 0
      %1296 = vmatprep.subr.bf16.mxu0 0
      %1297 = vmatpush1.bf16.msra.mxu0 0
      %1298 = vmatprep.subr.bf16.mxu0 0
      %1299 = vmatpush1.bf16.msra.mxu0 0
      %1300 = vmatprep.subr.bf16.mxu0 0
      %1301 = vmatpush1.bf16.msra.mxu0 0
      %1302 = vmatprep.subr.bf16.mxu0 0
      %1303 = vmatpush1.bf16.msra.mxu0 0
      %1304 = vmatprep.mubr.bf16.mxu0 %v1218
      %1305 = vmatmul.mubr.bf16.gmra.mrb[0].mxu0 %v1204
      %v1306 = vpop.f32.mrb[0].mxu0
      %v1307 = vadd.f32 %v1258, %v1306
      %v1308 = vpop.f32.mrb[0].mxu0
      %v1309 = vpop.f32.mrb[0].mxu0
      %v1310 = vadd.f32 %v1261, %v1309
      %v1311 = vpop.f32.mrb[0].mxu0
      %1312 = vmatprep.mubr.bf16.mxu0 %v1221
      %1313 = vmatmul.mubr.bf16.gmra.mrb[0].mxu0 %v1208
      %v1314 = vpop.f32.mrb[0].mxu0
      %v1315 = vadd.f32 %v1266, %v1314
      %v1316 = vpop.f32.mrb[0].mxu0
      %v1317 = vpop.f32.mrb[0].mxu0
      %v1318 = vadd.f32 %v1269, %v1317
      %v1319 = vpop.f32.mrb[0].mxu0
      %1320 = vdwg.mxu0
      %v1321 = vld [vmem:[%s8] sm:$0xff]
      %v1322 = vld [vmem:[%s8 + $0x8] sm:$0xff]
      %v1323 = vld [vmem:[%s8 + $0x10] sm:$0xff]
      %v1324 = vld [vmem:[%s8 + $0x18] sm:$0xff]
      %v1325 = vld [vmem:[%s9] sm:$0xff]
      %v1326 = vld [vmem:[%s9 + $0x8] sm:$0xff]
      %v1327 = vld [vmem:[%s9 + $0x10] sm:$0xff]
      %v1328 = vld [vmem:[%s9 + $0x18] sm:$0xff]
      %v1329 = vld [vmem:[%s17] sm:$0xff]
      %v1330 = vld [vmem:[%s17 + $0x8] sm:$0xff]
      %v1331 = vld [vmem:[%s17 + $0x10] sm:$0xff]
      %v1332 = vld [vmem:[%s17 + $0x18] sm:$0xff]
      %1333 = vadd.xlane.f32.xlu0 %v1307
      %v1334 = vpop.xlane.xlu0 %1333
      %1335 = vadd.xlane.f32.xlu0 %v1310
      %v1336 = vpop.xlane.xlu0 %1335
      %1337 = vadd.xlane.f32.xlu0 %v1315
      %v1338 = vpop.xlane.xlu0 %1337
      %1339 = vadd.xlane.f32.xlu0 %v1318
      %v1340 = vpop.xlane.xlu0 %1339
      %v1341 = vmul.f32 %v1307, %v1307
      %v1342 = vmul.f32 %v1310, %v1310
      %v1343 = vmul.f32 %v1315, %v1315
      %v1344 = vmul.f32 %v1318, %v1318
      %1345 = vadd.xlane.f32.xlu0 %v1341
      %v1346 = vpop.xlane.xlu0 %1345
      %1347 = vadd.xlane.f32.xlu0 %v1342
      %v1348 = vpop.xlane.xlu0 %1347
      %1349 = vadd.xlane.f32.xlu0 %v1343
      %v1350 = vpop.xlane.xlu0 %1349
      %1351 = vadd.xlane.f32.xlu0 %v1344
      %v1352 = vpop.xlane.xlu0 %1351
      %v1353 = vsel %vm649, %v1334, %v1346
      %v1354 = vsel %vm649, %v1336, %v1348
      %v1355 = vsel %vm649, %v1338, %v1350
      %v1356 = vsel %vm649, %v1340, %v1352
      %vm1357 = vcmask 261120
      %v1359 = vsel %vm1357, %v1329, 0
      %v1362 = vsel %vm1357, %v1330, 0
      %v1365 = vsel %vm1357, %v1331, 0
      %v1368 = vsel %vm1357, %v1332, 0
      %1370 = vmatprep.subr.mxu0 0.0
      %1371 = vmatpush1.msra.mxu0 %v1353
      %1372 = vmatprep.subr.mxu0 0.0
      %1373 = vmatpush1.msra.mxu0 %v1354
      %1374 = vmatprep.subr.mxu0 0.0
      %1375 = vmatpush1.msra.mxu0 %v1355
      %1376 = vmatprep.subr.mxu0 0.0
      %1377 = vmatpush1.msra.mxu0 %v1356
      %1378 = vmatprep.subr.mxu0 0.0
      %1379 = vmatpush1.msra.mxu0 0.0
      %1380 = vmatprep.subr.mxu0 0.0
      %1381 = vmatpush1.msra.mxu0 0.0
      %1382 = vmatprep.subr.mxu0 0.0
      %1383 = vmatpush1.msra.mxu0 0.0
      %1384 = vmatprep.subr.mxu0 0.0
      %1385 = vmatpush1.msra.mxu0 0.0
      %1386 = vmatprep.subr.mxu0 0.0
      %1387 = vmatpush1.msra.mxu0 0.0
      %1388 = vmatprep.subr.mxu0 0.0
      %1389 = vmatpush1.msra.mxu0 0.0
      %1390 = vmatprep.subr.mxu0 0.0
      %1391 = vmatpush1.msra.mxu0 0.0
      %1392 = vmatprep.subr.mxu0 0.0
      %1393 = vmatpush1.msra.mxu0 0.0
      %1394 = vmatprep.subr.mxu0 0.0
      %1395 = vmatpush1.msra.mxu0 0.0
      %1396 = vmatprep.subr.mxu0 0.0
      %1397 = vmatpush1.msra.mxu0 0.0
      %1398 = vmatprep.subr.mxu0 0.0
      %1399 = vmatpush1.msra.mxu0 0.0
      %1400 = vmatprep.subr.mxu0 0.0
      %1401 = vmatpush1.msra.mxu0 0.0
      %1402 = vmatprep.subr.mxu0 0.0
      %1403 = vmatpush1.msra.mxu0 0.0
      %1404 = vmatprep.subr.mxu0 0.0
      %1405 = vmatpush1.msra.mxu0 0.0
      %1406 = vmatprep.subr.mxu0 0.0
      %1407 = vmatpush1.msra.mxu0 0.0
      %1408 = vmatprep.subr.mxu0 0.0
      %1409 = vmatpush1.msra.mxu0 0.0
      %1410 = vmatprep.subr.mxu0 0.0
      %1411 = vmatpush1.msra.mxu0 0.0
      %1412 = vmatprep.subr.mxu0 0.0
      %1413 = vmatpush1.msra.mxu0 0.0
      %1414 = vmatprep.subr.mxu0 0.0
      %1415 = vmatpush1.msra.mxu0 0.0
      %1416 = vmatprep.subr.mxu0 0.0
      %1417 = vmatpush1.msra.mxu0 0.0
      %1418 = vmatprep.subr.mxu0 0.0
      %1419 = vmatpush1.msra.mxu0 0.0
      %1420 = vmatprep.subr.mxu0 0.0
      %1421 = vmatpush1.msra.mxu0 0.0
      %1422 = vmatprep.subr.mxu0 0.0
      %1423 = vmatpush1.msra.mxu0 0.0
      %1424 = vmatprep.subr.mxu0 0.0
      %1425 = vmatpush1.msra.mxu0 0.0
      %1426 = vmatprep.subr.mxu0 0.0
      %1427 = vmatpush1.msra.mxu0 0.0
      %1428 = vmatprep.subr.mxu0 0.0
      %1429 = vmatpush1.msra.mxu0 0.0
      %1430 = vmatprep.subr.mxu0 0.0
      %1431 = vmatpush1.msra.mxu0 0.0
      %1432 = vmatprep.subr.mxu0 0.0
      %1433 = vmatpush1.msra.mxu0 0.0
      %1434 = vmatprep.mubr.f32.mxu0 0.0
      %1435 = vmatmul.mubr.f32.gmra.mrb[0].mxu0 %v1359
      %v1436 = vpop.f32.mrb[0].mxu0
      %v1437 = vadd.f32 0.0, %v1436
      %v1438 = vpop.f32.mrb[0].mxu0
      %1439 = vmatprep.mubr.f32.mxu0 0.0
      %1440 = vmatmul.mubr.f32.gmra.mrb[0].mxu0 %v1362
      %v1441 = vpop.f32.mrb[0].mxu0
      %v1442 = vadd.f32 0.0, %v1441
      %v1443 = vpop.f32.mrb[0].mxu0
      %1444 = vmatprep.mubr.f32.mxu0 0.0
      %1445 = vmatmul.mubr.f32.gmra.mrb[0].mxu0 %v1365
      %v1446 = vpop.f32.mrb[0].mxu0
      %v1447 = vadd.f32 0.0, %v1446
      %v1448 = vpop.f32.mrb[0].mxu0
      %1449 = vmatprep.mubr.f32.mxu0 0.0
      %1450 = vmatmul.mubr.f32.gmra.mrb[0].mxu0 %v1368
      %v1451 = vpop.f32.mrb[0].mxu0
      %v1452 = vadd.f32 0.0, %v1451
      %v1453 = vpop.f32.mrb[0].mxu0
      %1454 = vdwg.mxu0
      %v1455 = vmul.f32 %v1437, %v1437
      %v1456 = vmul.f32 %v1442, %v1442
      %v1457 = vmul.f32 %v1447, %v1447
      %v1458 = vmul.f32 %v1452, %v1452
      %1463 = vrot.lane.b32.xlu0 %v1455, 1
      %v1464 = vpop.permute.xlu0 %1463
      %1465 = vrot.lane.b32.xlu0 %v1456, 1
      %v1466 = vpop.permute.xlu0 %1465
      %1467 = vrot.lane.b32.xlu0 %v1457, 1
      %v1468 = vpop.permute.xlu0 %1467
      %1469 = vrot.lane.b32.xlu0 %v1458, 1
      %v1470 = vpop.permute.xlu0 %1469
      %v1475 = vsub.f32 %v1437, %v1464
      %v1476 = vsub.f32 %v1442, %v1466
      %v1477 = vsub.f32 %v1447, %v1468
      %v1478 = vsub.f32 %v1452, %v1470
      %v1479 = vmax.f32 %v1475, 0.0
      %v1480 = vmax.f32 %v1476, 0.0
      %v1481 = vmax.f32 %v1477, 0.0
      %v1482 = vmax.f32 %v1478, 0.0
      %v1483 = vadd.f32 %v1479, 1e-05
      %v1484 = vadd.f32 %v1480, 1e-05
      %v1485 = vadd.f32 %v1481, 1e-05
      %v1486 = vadd.f32 %v1482, 1e-05
      %v1487 = vrsqrt.pop %v1483
      %v1488 = vrsqrt.pop %v1484
      %v1489 = vrsqrt.pop %v1485
      %v1490 = vrsqrt.pop %v1486
      %1495 = vrot.lane.b32.xlu0 %v1487, 127
      %v1496 = vpop.permute.xlu0 %1495
      %1497 = vrot.lane.b32.xlu0 %v1488, 127
      %v1498 = vpop.permute.xlu0 %1497
      %1499 = vrot.lane.b32.xlu0 %v1489, 127
      %v1500 = vpop.permute.xlu0 %1499
      %1501 = vrot.lane.b32.xlu0 %v1490, 127
      %v1502 = vpop.permute.xlu0 %1501
      %v1507 = vmul.f32 %v1321, %v1496
      %v1508 = vmul.f32 %v1322, %v1498
      %v1509 = vmul.f32 %v1323, %v1500
      %v1510 = vmul.f32 %v1324, %v1502
      %v1511 = vmul.f32 %v1437, %v1507
      %v1512 = vmul.f32 %v1442, %v1508
      %v1513 = vmul.f32 %v1447, %v1509
      %v1514 = vmul.f32 %v1452, %v1510
      %v1515 = vsub.f32 %v1325, %v1511
      %v1516 = vsub.f32 %v1326, %v1512
      %v1517 = vsub.f32 %v1327, %v1513
      %v1518 = vsub.f32 %v1328, %v1514
      %1520 = vset.pattern.permute.xlu0 0
      %1521 = vperm.xlu0 %1520, %v1507
      %v1522 = vpop.permute.xlu0 %1521
      %1525 = vset.pattern.permute.xlu0 0
      %1526 = vperm.xlu0 %1525, %v1508
      %v1527 = vpop.permute.xlu0 %1526
      %1530 = vset.pattern.permute.xlu0 0
      %1531 = vperm.xlu0 %1530, %v1509
      %v1532 = vpop.permute.xlu0 %1531
      %1535 = vset.pattern.permute.xlu0 0
      %1536 = vperm.xlu0 %1535, %v1510
      %v1537 = vpop.permute.xlu0 %1536
      %v1539 = vmul.f32 %v1307, %v1522
      %v1540 = vmul.f32 %v1310, %v1527
      %v1541 = vmul.f32 %v1315, %v1532
      %v1542 = vmul.f32 %v1318, %v1537
      %1544 = vset.pattern.permute.xlu0 0
      %1545 = vperm.xlu0 %1544, %v1515
      %v1546 = vpop.permute.xlu0 %1545
      %1549 = vset.pattern.permute.xlu0 0
      %1550 = vperm.xlu0 %1549, %v1516
      %v1551 = vpop.permute.xlu0 %1550
      %1554 = vset.pattern.permute.xlu0 0
      %1555 = vperm.xlu0 %1554, %v1517
      %v1556 = vpop.permute.xlu0 %1555
      %1559 = vset.pattern.permute.xlu0 0
      %1560 = vperm.xlu0 %1559, %v1518
      %v1561 = vpop.permute.xlu0 %1560
      %v1563 = vadd.f32 %v1539, %v1546
      %v1564 = vadd.f32 %v1540, %v1551
      %v1565 = vadd.f32 %v1541, %v1556
      %v1566 = vadd.f32 %v1542, %v1561
      %v1567 = vmax.f32 %v1563, 0.0
      %v1568 = vmax.f32 %v1564, 0.0
      %v1569 = vmax.f32 %v1565, 0.0
      %v1570 = vmax.f32 %v1566, 0.0
      %v1571 = vld [vmem:[%s3] sm:$0xff]
      %v1572 = vld [vmem:[%s3 + $0x8] sm:$0xff]
      %v1573 = vld [vmem:[%s3 + $0x10] sm:$0xff]
      %v1574 = vld [vmem:[%s3 + $0x18] sm:$0xf]
      %v1575 = vld [vmem:[%s3 + $0x1c] sm:$0xff]
      %v1576 = vld [vmem:[%s3 + $0x24] sm:$0xff]
      %v1577 = vld [vmem:[%s3 + $0x2c] sm:$0xff]
      %v1578 = vld [vmem:[%s3 + $0x34] sm:$0xf]
      %v1579 = vld [vmem:[%s3 + $0x38] sm:$0xff]
      %v1580 = vld [vmem:[%s3 + $0x40] sm:$0xff]
      %v1581 = vld [vmem:[%s3 + $0x48] sm:$0xff]
      %v1582 = vld [vmem:[%s3 + $0x50] sm:$0xf]
      %v1583 = vld [vmem:[%s3 + $0x54] sm:$0xff]
      %v1584 = vld [vmem:[%s3 + $0x5c] sm:$0xff]
      %v1585 = vld [vmem:[%s3 + $0x64] sm:$0xff]
      %v1586 = vld [vmem:[%s3 + $0x6c] sm:$0xf]
      %v1587 = vld [vmem:[%s4] sm:$0xff]
      %v1588 = vld [vmem:[%s4 + $0x8] sm:$0xff]
      %v1589 = vld [vmem:[%s4 + $0x10] sm:$0xff]
      %v1590 = vld [vmem:[%s4 + $0x18] sm:$0xff]
      %1591 = vrot.lane.b32.xlu0 %v1567, 73
      %v1592 = vpop.permute.xlu0 %1591
      %1593 = vrot.lane.b32.xlu0 %v1568, 73
      %v1594 = vpop.permute.xlu0 %1593
      %1595 = vrot.lane.b32.xlu0 %v1569, 73
      %v1596 = vpop.permute.xlu0 %1595
      %1597 = vrot.lane.b32.xlu0 %v1570, 73
      %v1598 = vpop.permute.xlu0 %1597
      %v1599 = vmul.f32 %v1592, %v813
      %v1600 = vmul.f32 %v1594, %v813
      %v1601 = vmul.f32 %v1596, %v813
      %v1602 = vmul.f32 %v1598, %v813
      %v1603 = vpack.c.bf16 %v1600, %v1599
      %v1604 = vpack.c.bf16 %v1602, %v1601
      %1605 = vrot.lane.b32.xlu0 %v1567, 72
      %v1606 = vpop.permute.xlu0 %1605
      %1607 = vrot.lane.b32.xlu0 %v1568, 72
      %v1608 = vpop.permute.xlu0 %1607
      %1609 = vrot.lane.b32.xlu0 %v1569, 72
      %v1610 = vpop.permute.xlu0 %1609
      %1611 = vrot.lane.b32.xlu0 %v1570, 72
      %v1612 = vpop.permute.xlu0 %1611
      %v1613 = vmul.f32 %v1606, %v828
      %v1614 = vmul.f32 %v1608, %v828
      %v1615 = vmul.f32 %v1610, %v828
      %v1616 = vmul.f32 %v1612, %v828
      %v1617 = vpack.c.bf16 %v1614, %v1613
      %v1618 = vpack.c.bf16 %v1616, %v1615
      %1619 = vrot.lane.b32.xlu0 %v1567, 71
      %v1620 = vpop.permute.xlu0 %1619
      %1621 = vrot.lane.b32.xlu0 %v1568, 71
      %v1622 = vpop.permute.xlu0 %1621
      %1623 = vrot.lane.b32.xlu0 %v1569, 71
      %v1624 = vpop.permute.xlu0 %1623
      %1625 = vrot.lane.b32.xlu0 %v1570, 71
      %v1626 = vpop.permute.xlu0 %1625
      %v1627 = vmul.f32 %v1620, %v843
      %v1628 = vmul.f32 %v1622, %v843
      %v1629 = vmul.f32 %v1624, %v843
      %v1630 = vmul.f32 %v1626, %v843
      %v1631 = vpack.c.bf16 %v1628, %v1627
      %v1632 = vpack.c.bf16 %v1630, %v1629
      %1633 = vrot.lane.b32.xlu0 %v1567, 65
      %v1634 = vpop.permute.xlu0 %1633
      %1635 = vrot.lane.b32.xlu0 %v1568, 65
      %v1636 = vpop.permute.xlu0 %1635
      %1637 = vrot.lane.b32.xlu0 %v1569, 65
      %v1638 = vpop.permute.xlu0 %1637
      %1639 = vrot.lane.b32.xlu0 %v1570, 65
      %v1640 = vpop.permute.xlu0 %1639
      %v1641 = vmul.f32 %v1634, %v858
      %v1642 = vmul.f32 %v1636, %v858
      %v1643 = vmul.f32 %v1638, %v858
      %v1644 = vmul.f32 %v1640, %v858
      %v1645 = vpack.c.bf16 %v1642, %v1641
      %v1646 = vpack.c.bf16 %v1644, %v1643
      %1647 = vrot.lane.b32.xlu0 %v1567, 64
      %v1648 = vpop.permute.xlu0 %1647
      %1649 = vrot.lane.b32.xlu0 %v1568, 64
      %v1650 = vpop.permute.xlu0 %1649
      %1651 = vrot.lane.b32.xlu0 %v1569, 64
      %v1652 = vpop.permute.xlu0 %1651
      %1653 = vrot.lane.b32.xlu0 %v1570, 64
      %v1654 = vpop.permute.xlu0 %1653
      %v1655 = vmul.f32 %v1648, %v873
      %v1656 = vmul.f32 %v1650, %v873
      %v1657 = vmul.f32 %v1652, %v873
      %v1658 = vmul.f32 %v1654, %v873
      %v1659 = vpack.c.bf16 %v1656, %v1655
      %v1660 = vpack.c.bf16 %v1658, %v1657
      %1661 = vrot.lane.b32.xlu0 %v1567, 63
      %v1662 = vpop.permute.xlu0 %1661
      %1663 = vrot.lane.b32.xlu0 %v1568, 63
      %v1664 = vpop.permute.xlu0 %1663
      %1665 = vrot.lane.b32.xlu0 %v1569, 63
      %v1666 = vpop.permute.xlu0 %1665
      %1667 = vrot.lane.b32.xlu0 %v1570, 63
      %v1668 = vpop.permute.xlu0 %1667
      %v1669 = vmul.f32 %v1662, %v888
      %v1670 = vmul.f32 %v1664, %v888
      %v1671 = vmul.f32 %v1666, %v888
      %v1672 = vmul.f32 %v1668, %v888
      %v1673 = vpack.c.bf16 %v1670, %v1669
      %v1674 = vpack.c.bf16 %v1672, %v1671
      %1675 = vrot.lane.b32.xlu0 %v1567, 57
      %v1676 = vpop.permute.xlu0 %1675
      %1677 = vrot.lane.b32.xlu0 %v1568, 57
      %v1678 = vpop.permute.xlu0 %1677
      %1679 = vrot.lane.b32.xlu0 %v1569, 57
      %v1680 = vpop.permute.xlu0 %1679
      %1681 = vrot.lane.b32.xlu0 %v1570, 57
      %v1682 = vpop.permute.xlu0 %1681
      %v1683 = vmul.f32 %v1676, %v903
      %v1684 = vmul.f32 %v1678, %v903
      %v1685 = vmul.f32 %v1680, %v903
      %v1686 = vmul.f32 %v1682, %v903
      %v1687 = vpack.c.bf16 %v1684, %v1683
      %v1688 = vpack.c.bf16 %v1686, %v1685
      %1689 = vrot.lane.b32.xlu0 %v1567, 56
      %v1690 = vpop.permute.xlu0 %1689
      %1691 = vrot.lane.b32.xlu0 %v1568, 56
      %v1692 = vpop.permute.xlu0 %1691
      %1693 = vrot.lane.b32.xlu0 %v1569, 56
      %v1694 = vpop.permute.xlu0 %1693
      %1695 = vrot.lane.b32.xlu0 %v1570, 56
      %v1696 = vpop.permute.xlu0 %1695
      %v1697 = vmul.f32 %v1690, %v918
      %v1698 = vmul.f32 %v1692, %v918
      %v1699 = vmul.f32 %v1694, %v918
      %v1700 = vmul.f32 %v1696, %v918
      %v1701 = vpack.c.bf16 %v1698, %v1697
      %v1702 = vpack.c.bf16 %v1700, %v1699
      %1703 = vrot.lane.b32.xlu0 %v1567, 55
      %v1704 = vpop.permute.xlu0 %1703
      %1705 = vrot.lane.b32.xlu0 %v1568, 55
      %v1706 = vpop.permute.xlu0 %1705
      %1707 = vrot.lane.b32.xlu0 %v1569, 55
      %v1708 = vpop.permute.xlu0 %1707
      %1709 = vrot.lane.b32.xlu0 %v1570, 55
      %v1710 = vpop.permute.xlu0 %1709
      %v1711 = vmul.f32 %v1704, %v933
      %v1712 = vmul.f32 %v1706, %v933
      %v1713 = vmul.f32 %v1708, %v933
      %v1714 = vmul.f32 %v1710, %v933
      %v1715 = vpack.c.bf16 %v1712, %v1711
      %v1716 = vpack.c.bf16 %v1714, %v1713
      %1717 = vrot.lane.b32.xlu0 %v1567, 9
      %v1718 = vpop.permute.xlu0 %1717
      %1719 = vrot.lane.b32.xlu0 %v1568, 9
      %v1720 = vpop.permute.xlu0 %1719
      %1721 = vrot.lane.b32.xlu0 %v1569, 9
      %v1722 = vpop.permute.xlu0 %1721
      %1723 = vrot.lane.b32.xlu0 %v1570, 9
      %v1724 = vpop.permute.xlu0 %1723
      %v1725 = vmul.f32 %v1718, %v948
      %v1726 = vmul.f32 %v1720, %v948
      %v1727 = vmul.f32 %v1722, %v948
      %v1728 = vmul.f32 %v1724, %v948
      %v1729 = vpack.c.bf16 %v1726, %v1725
      %v1730 = vpack.c.bf16 %v1728, %v1727
      %1731 = vrot.lane.b32.xlu0 %v1567, 8
      %v1732 = vpop.permute.xlu0 %1731
      %1733 = vrot.lane.b32.xlu0 %v1568, 8
      %v1734 = vpop.permute.xlu0 %1733
      %1735 = vrot.lane.b32.xlu0 %v1569, 8
      %v1736 = vpop.permute.xlu0 %1735
      %1737 = vrot.lane.b32.xlu0 %v1570, 8
      %v1738 = vpop.permute.xlu0 %1737
      %v1739 = vmul.f32 %v1732, %v963
      %v1740 = vmul.f32 %v1734, %v963
      %v1741 = vmul.f32 %v1736, %v963
      %v1742 = vmul.f32 %v1738, %v963
      %v1743 = vpack.c.bf16 %v1740, %v1739
      %v1744 = vpack.c.bf16 %v1742, %v1741
      %1745 = vrot.lane.b32.xlu0 %v1567, 7
      %v1746 = vpop.permute.xlu0 %1745
      %1747 = vrot.lane.b32.xlu0 %v1568, 7
      %v1748 = vpop.permute.xlu0 %1747
      %1749 = vrot.lane.b32.xlu0 %v1569, 7
      %v1750 = vpop.permute.xlu0 %1749
      %1751 = vrot.lane.b32.xlu0 %v1570, 7
      %v1752 = vpop.permute.xlu0 %1751
      %v1753 = vmul.f32 %v1746, %v978
      %v1754 = vmul.f32 %v1748, %v978
      %v1755 = vmul.f32 %v1750, %v978
      %v1756 = vmul.f32 %v1752, %v978
      %v1757 = vpack.c.bf16 %v1754, %v1753
      %v1758 = vpack.c.bf16 %v1756, %v1755
      %1759 = vrot.lane.b32.xlu0 %v1567, 1
      %v1760 = vpop.permute.xlu0 %1759
      %1761 = vrot.lane.b32.xlu0 %v1568, 1
      %v1762 = vpop.permute.xlu0 %1761
      %1763 = vrot.lane.b32.xlu0 %v1569, 1
      %v1764 = vpop.permute.xlu0 %1763
      %1765 = vrot.lane.b32.xlu0 %v1570, 1
      %v1766 = vpop.permute.xlu0 %1765
      %v1767 = vmul.f32 %v1760, %v993
      %v1768 = vmul.f32 %v1762, %v993
      %v1769 = vmul.f32 %v1764, %v993
      %v1770 = vmul.f32 %v1766, %v993
      %v1771 = vpack.c.bf16 %v1768, %v1767
      %v1772 = vpack.c.bf16 %v1770, %v1769
      %v1773 = vpack.c.bf16 %v1568, %v1567
      %v1774 = vpack.c.bf16 %v1570, %v1569
      %1775 = vrot.lane.b32.xlu0 %v1567, 127
      %v1776 = vpop.permute.xlu0 %1775
      %1777 = vrot.lane.b32.xlu0 %v1568, 127
      %v1778 = vpop.permute.xlu0 %1777
      %1779 = vrot.lane.b32.xlu0 %v1569, 127
      %v1780 = vpop.permute.xlu0 %1779
      %1781 = vrot.lane.b32.xlu0 %v1570, 127
      %v1782 = vpop.permute.xlu0 %1781
      %v1783 = vmul.f32 %v1776, %v1009
      %v1784 = vmul.f32 %v1778, %v1009
      %v1785 = vmul.f32 %v1780, %v1009
      %v1786 = vmul.f32 %v1782, %v1009
      %v1787 = vpack.c.bf16 %v1784, %v1783
      %v1788 = vpack.c.bf16 %v1786, %v1785
      %1789 = vrot.lane.b32.xlu0 %v1567, 121
      %v1790 = vpop.permute.xlu0 %1789
      %1791 = vrot.lane.b32.xlu0 %v1568, 121
      %v1792 = vpop.permute.xlu0 %1791
      %1793 = vrot.lane.b32.xlu0 %v1569, 121
      %v1794 = vpop.permute.xlu0 %1793
      %1795 = vrot.lane.b32.xlu0 %v1570, 121
      %v1796 = vpop.permute.xlu0 %1795
      %v1797 = vmul.f32 %v1790, %v1024
      %v1798 = vmul.f32 %v1792, %v1024
      %v1799 = vmul.f32 %v1794, %v1024
      %v1800 = vmul.f32 %v1796, %v1024
      %v1801 = vpack.c.bf16 %v1798, %v1797
      %v1802 = vpack.c.bf16 %v1800, %v1799
      %1803 = vrot.lane.b32.xlu0 %v1567, 120
      %v1804 = vpop.permute.xlu0 %1803
      %1805 = vrot.lane.b32.xlu0 %v1568, 120
      %v1806 = vpop.permute.xlu0 %1805
      %1807 = vrot.lane.b32.xlu0 %v1569, 120
      %v1808 = vpop.permute.xlu0 %1807
      %1809 = vrot.lane.b32.xlu0 %v1570, 120
      %v1810 = vpop.permute.xlu0 %1809
      %v1811 = vmul.f32 %v1804, %v1039
      %v1812 = vmul.f32 %v1806, %v1039
      %v1813 = vmul.f32 %v1808, %v1039
      %v1814 = vmul.f32 %v1810, %v1039
      %v1815 = vpack.c.bf16 %v1812, %v1811
      %v1816 = vpack.c.bf16 %v1814, %v1813
      %1817 = vrot.lane.b32.xlu0 %v1567, 119
      %v1818 = vpop.permute.xlu0 %1817
      %1819 = vrot.lane.b32.xlu0 %v1568, 119
      %v1820 = vpop.permute.xlu0 %1819
      %1821 = vrot.lane.b32.xlu0 %v1569, 119
      %v1822 = vpop.permute.xlu0 %1821
      %1823 = vrot.lane.b32.xlu0 %v1570, 119
      %v1824 = vpop.permute.xlu0 %1823
      %v1825 = vmul.f32 %v1818, %v1054
      %v1826 = vmul.f32 %v1820, %v1054
      %v1827 = vmul.f32 %v1822, %v1054
      %v1828 = vmul.f32 %v1824, %v1054
      %v1829 = vpack.c.bf16 %v1826, %v1825
      %v1830 = vpack.c.bf16 %v1828, %v1827
      %v1831 = vmul.f32 %v1592, %v1065
      %v1832 = vmul.f32 %v1594, %v1065
      %v1833 = vmul.f32 %v1596, %v1065
      %v1834 = vmul.f32 %v1598, %v1065
      %v1835 = vpack.c.bf16 %v1832, %v1831
      %v1836 = vpack.c.bf16 %v1834, %v1833
      %v1837 = vmul.f32 %v1606, %v1076
      %v1838 = vmul.f32 %v1608, %v1076
      %v1839 = vmul.f32 %v1610, %v1076
      %v1840 = vmul.f32 %v1612, %v1076
      %v1841 = vpack.c.bf16 %v1838, %v1837
      %v1842 = vpack.c.bf16 %v1840, %v1839
      %v1843 = vmul.f32 %v1620, %v1087
      %v1844 = vmul.f32 %v1622, %v1087
      %v1845 = vmul.f32 %v1624, %v1087
      %v1846 = vmul.f32 %v1626, %v1087
      %v1847 = vpack.c.bf16 %v1844, %v1843
      %v1848 = vpack.c.bf16 %v1846, %v1845
      %v1849 = vmul.f32 %v1634, %v1098
      %v1850 = vmul.f32 %v1636, %v1098
      %v1851 = vmul.f32 %v1638, %v1098
      %v1852 = vmul.f32 %v1640, %v1098
      %v1853 = vpack.c.bf16 %v1850, %v1849
      %v1854 = vpack.c.bf16 %v1852, %v1851
      %v1855 = vmul.f32 %v1648, %v1109
      %v1856 = vmul.f32 %v1650, %v1109
      %v1857 = vmul.f32 %v1652, %v1109
      %v1858 = vmul.f32 %v1654, %v1109
      %v1859 = vpack.c.bf16 %v1856, %v1855
      %v1860 = vpack.c.bf16 %v1858, %v1857
      %v1861 = vmul.f32 %v1662, %v1120
      %v1862 = vmul.f32 %v1664, %v1120
      %v1863 = vmul.f32 %v1666, %v1120
      %v1864 = vmul.f32 %v1668, %v1120
      %v1865 = vpack.c.bf16 %v1862, %v1861
      %v1866 = vpack.c.bf16 %v1864, %v1863
      %v1867 = vmul.f32 %v1676, %v1131
      %v1868 = vmul.f32 %v1678, %v1131
      %v1869 = vmul.f32 %v1680, %v1131
      %v1870 = vmul.f32 %v1682, %v1131
      %v1871 = vpack.c.bf16 %v1868, %v1867
      %v1872 = vpack.c.bf16 %v1870, %v1869
      %v1873 = vmul.f32 %v1690, %v1142
      %v1874 = vmul.f32 %v1692, %v1142
      %v1875 = vmul.f32 %v1694, %v1142
      %v1876 = vmul.f32 %v1696, %v1142
      %v1877 = vpack.c.bf16 %v1874, %v1873
      %v1878 = vpack.c.bf16 %v1876, %v1875
      %v1879 = vmul.f32 %v1704, %v1153
      %v1880 = vmul.f32 %v1706, %v1153
      %v1881 = vmul.f32 %v1708, %v1153
      %v1882 = vmul.f32 %v1710, %v1153
      %v1883 = vpack.c.bf16 %v1880, %v1879
      %v1884 = vpack.c.bf16 %v1882, %v1881
      %1886 = vset.pattern.permute.xlu0 0
      %1887 = vperm.xlu0 %1886, %v1587
      %v1888 = vpop.permute.xlu0 %1887
      %1891 = vset.pattern.permute.xlu0 0
      %1892 = vperm.xlu0 %1891, %v1588
      %v1893 = vpop.permute.xlu0 %1892
      %1896 = vset.pattern.permute.xlu0 0
      %1897 = vperm.xlu0 %1896, %v1589
      %v1898 = vpop.permute.xlu0 %1897
      %1901 = vset.pattern.permute.xlu0 0
      %1902 = vperm.xlu0 %1901, %v1590
      %v1903 = vpop.permute.xlu0 %1902
      %v1921 = vunpack.c.l.b16 %v1571
      %v1922 = vunpack.c.h.b16 %v1571
      %v1923 = vunpack.c.l.b16 %v1572
      %v1924 = vunpack.c.h.b16 %v1572
      %v1925 = vunpack.c.l.b16 %v1573
      %v1926 = vunpack.c.h.b16 %v1573
      %v1927 = vunpack.c.l.b16 %v1574
      %v1928 = vunpack.c.l.b16 %v1575
      %v1929 = vunpack.c.h.b16 %v1575
      %v1930 = vunpack.c.l.b16 %v1576
      %v1931 = vunpack.c.h.b16 %v1576
      %v1932 = vunpack.c.l.b16 %v1577
      %v1933 = vunpack.c.h.b16 %v1577
      %v1934 = vunpack.c.l.b16 %v1578
      %v1935 = vunpack.c.l.b16 %v1579
      %v1936 = vunpack.c.h.b16 %v1579
      %v1937 = vunpack.c.l.b16 %v1580
      %v1938 = vunpack.c.h.b16 %v1580
      %v1939 = vunpack.c.l.b16 %v1581
      %v1940 = vunpack.c.h.b16 %v1581
      %v1941 = vunpack.c.l.b16 %v1582
      %v1942 = vunpack.c.l.b16 %v1583
      %v1943 = vunpack.c.h.b16 %v1583
      %v1944 = vunpack.c.l.b16 %v1584
      %v1945 = vunpack.c.h.b16 %v1584
      %v1946 = vunpack.c.l.b16 %v1585
      %v1947 = vunpack.c.h.b16 %v1585
      %v1948 = vunpack.c.l.b16 %v1586
      %v1949 = vpack.c.b16 %v1928, %v1921
      %v1950 = vpack.c.b16 %v1929, %v1922
      %v1951 = vpack.c.b16 %v1930, %v1923
      %v1952 = vpack.c.b16 %v1931, %v1924
      %v1953 = vpack.c.b16 %v1932, %v1925
      %v1954 = vpack.c.b16 %v1933, %v1926
      %v1955 = vpack.c.b16 %v1934, %v1927
      %v1956 = vpack.c.b16 %v1942, %v1935
      %v1957 = vpack.c.b16 %v1943, %v1936
      %v1958 = vpack.c.b16 %v1944, %v1937
      %v1959 = vpack.c.b16 %v1945, %v1938
      %v1960 = vpack.c.b16 %v1946, %v1939
      %v1961 = vpack.c.b16 %v1947, %v1940
      %v1962 = vpack.c.b16 %v1948, %v1941
      %vm1975 = vcmask 785408
      %v1977 = vsel %vm1975, %v1955, 0
      %v1980 = vsel %vm1975, %v1962, 0
      %1982 = vmatprep.subr.bf16.mxu0 0
      %1983 = vmatpush1.bf16.msra.mxu0 %v1603
      %1984 = vmatprep.subr.bf16.mxu0 0
      %1985 = vmatpush1.bf16.msra.mxu0 %v1604
      %1986 = vmatprep.subr.bf16.mxu0 0
      %1987 = vmatpush1.bf16.msra.mxu0 %v1617
      %1988 = vmatprep.subr.bf16.mxu0 0
      %1989 = vmatpush1.bf16.msra.mxu0 %v1618
      %1990 = vmatprep.subr.bf16.mxu0 0
      %1991 = vmatpush1.bf16.msra.mxu0 %v1631
      %1992 = vmatprep.subr.bf16.mxu0 0
      %1993 = vmatpush1.bf16.msra.mxu0 %v1632
      %1994 = vmatprep.subr.bf16.mxu0 0
      %1995 = vmatpush1.bf16.msra.mxu0 %v1645
      %1996 = vmatprep.subr.bf16.mxu0 0
      %1997 = vmatpush1.bf16.msra.mxu0 %v1646
      %1998 = vmatprep.subr.bf16.mxu0 0
      %1999 = vmatpush1.bf16.msra.mxu0 %v1659
      %2000 = vmatprep.subr.bf16.mxu0 0
      %2001 = vmatpush1.bf16.msra.mxu0 %v1660
      %2002 = vmatprep.subr.bf16.mxu0 0
      %2003 = vmatpush1.bf16.msra.mxu0 %v1673
      %2004 = vmatprep.subr.bf16.mxu0 0
      %2005 = vmatpush1.bf16.msra.mxu0 %v1674
      %2006 = vmatprep.subr.bf16.mxu0 0
      %2007 = vmatpush1.bf16.msra.mxu0 %v1687
      %2008 = vmatprep.subr.bf16.mxu0 0
      %2009 = vmatpush1.bf16.msra.mxu0 %v1688
      %2010 = vmatprep.subr.bf16.mxu0 0
      %2011 = vmatpush1.bf16.msra.mxu0 %v1701
      %2012 = vmatprep.subr.bf16.mxu0 0
      %2013 = vmatpush1.bf16.msra.mxu0 %v1702
      %2014 = vmatprep.mubr.bf16.mxu0 %v1950
      %2015 = vmatmul.mubr.bf16.gmra.mrb[0].mxu0 %v1949
      %v2016 = vpop.f32.mrb[0].mxu0
      %v2017 = vadd.f32 %v1888, %v2016
      %v2018 = vpop.f32.mrb[0].mxu0
      %v2019 = vpop.f32.mrb[0].mxu0
      %v2020 = vadd.f32 %v1893, %v2019
      %v2021 = vpop.f32.mrb[0].mxu0
      %2022 = vmatprep.mubr.bf16.mxu0 %v1957
      %2023 = vmatmul.mubr.bf16.gmra.mrb[0].mxu0 %v1956
      %v2024 = vpop.f32.mrb[0].mxu0
      %v2025 = vadd.f32 %v1898, %v2024
      %v2026 = vpop.f32.mrb[0].mxu0
      %v2027 = vpop.f32.mrb[0].mxu0
      %v2028 = vadd.f32 %v1903, %v2027
      %v2029 = vpop.f32.mrb[0].mxu0
      %2030 = vdwg.mxu0
      %2031 = vmatprep.subr.bf16.mxu0 0
      %2032 = vmatpush1.bf16.msra.mxu0 %v1715
      %2033 = vmatprep.subr.bf16.mxu0 0
      %2034 = vmatpush1.bf16.msra.mxu0 %v1716
      %2035 = vmatprep.subr.bf16.mxu0 0
      %2036 = vmatpush1.bf16.msra.mxu0 %v1729
      %2037 = vmatprep.subr.bf16.mxu0 0
      %2038 = vmatpush1.bf16.msra.mxu0 %v1730
      %2039 = vmatprep.subr.bf16.mxu0 0
      %2040 = vmatpush1.bf16.msra.mxu0 %v1743
      %2041 = vmatprep.subr.bf16.mxu0 0
      %2042 = vmatpush1.bf16.msra.mxu0 %v1744
      %2043 = vmatprep.subr.bf16.mxu0 0
      %2044 = vmatpush1.bf16.msra.mxu0 %v1757
      %2045 = vmatprep.subr.bf16.mxu0 0
      %2046 = vmatpush1.bf16.msra.mxu0 %v1758
      %2047 = vmatprep.subr.bf16.mxu0 0
      %2048 = vmatpush1.bf16.msra.mxu0 %v1771
      %2049 = vmatprep.subr.bf16.mxu0 0
      %2050 = vmatpush1.bf16.msra.mxu0 %v1772
      %2051 = vmatprep.subr.bf16.mxu0 0
      %2052 = vmatpush1.bf16.msra.mxu0 %v1773
      %2053 = vmatprep.subr.bf16.mxu0 0
      %2054 = vmatpush1.bf16.msra.mxu0 %v1774
      %2055 = vmatprep.subr.bf16.mxu0 0
      %2056 = vmatpush1.bf16.msra.mxu0 %v1787
      %2057 = vmatprep.subr.bf16.mxu0 0
      %2058 = vmatpush1.bf16.msra.mxu0 %v1788
      %2059 = vmatprep.subr.bf16.mxu0 0
      %2060 = vmatpush1.bf16.msra.mxu0 %v1801
      %2061 = vmatprep.subr.bf16.mxu0 0
      %2062 = vmatpush1.bf16.msra.mxu0 %v1802
      %2063 = vmatprep.mubr.bf16.mxu0 %v1952
      %2064 = vmatmul.mubr.bf16.gmra.mrb[0].mxu0 %v1951
      %v2065 = vpop.f32.mrb[0].mxu0
      %v2066 = vadd.f32 %v2017, %v2065
      %v2067 = vpop.f32.mrb[0].mxu0
      %v2068 = vpop.f32.mrb[0].mxu0
      %v2069 = vadd.f32 %v2020, %v2068
      %v2070 = vpop.f32.mrb[0].mxu0
      %2071 = vmatprep.mubr.bf16.mxu0 %v1959
      %2072 = vmatmul.mubr.bf16.gmra.mrb[0].mxu0 %v1958
      %v2073 = vpop.f32.mrb[0].mxu0
      %v2074 = vadd.f32 %v2025, %v2073
      %v2075 = vpop.f32.mrb[0].mxu0
      %v2076 = vpop.f32.mrb[0].mxu0
      %v2077 = vadd.f32 %v2028, %v2076
      %v2078 = vpop.f32.mrb[0].mxu0
      %2079 = vdwg.mxu0
      %2080 = vmatprep.subr.bf16.mxu0 0
      %2081 = vmatpush1.bf16.msra.mxu0 %v1815
      %2082 = vmatprep.subr.bf16.mxu0 0
      %2083 = vmatpush1.bf16.msra.mxu0 %v1816
      %2084 = vmatprep.subr.bf16.mxu0 0
      %2085 = vmatpush1.bf16.msra.mxu0 %v1829
      %2086 = vmatprep.subr.bf16.mxu0 0
      %2087 = vmatpush1.bf16.msra.mxu0 %v1830
      %2088 = vmatprep.subr.bf16.mxu0 0
      %2089 = vmatpush1.bf16.msra.mxu0 %v1835
      %2090 = vmatprep.subr.bf16.mxu0 0
      %2091 = vmatpush1.bf16.msra.mxu0 %v1836
      %2092 = vmatprep.subr.bf16.mxu0 0
      %2093 = vmatpush1.bf16.msra.mxu0 %v1841
      %2094 = vmatprep.subr.bf16.mxu0 0
      %2095 = vmatpush1.bf16.msra.mxu0 %v1842
      %2096 = vmatprep.subr.bf16.mxu0 0
      %2097 = vmatpush1.bf16.msra.mxu0 %v1847
      %2098 = vmatprep.subr.bf16.mxu0 0
      %2099 = vmatpush1.bf16.msra.mxu0 %v1848
      %2100 = vmatprep.subr.bf16.mxu0 0
      %2101 = vmatpush1.bf16.msra.mxu0 %v1853
      %2102 = vmatprep.subr.bf16.mxu0 0
      %2103 = vmatpush1.bf16.msra.mxu0 %v1854
      %2104 = vmatprep.subr.bf16.mxu0 0
      %2105 = vmatpush1.bf16.msra.mxu0 %v1859
      %2106 = vmatprep.subr.bf16.mxu0 0
      %2107 = vmatpush1.bf16.msra.mxu0 %v1860
      %2108 = vmatprep.subr.bf16.mxu0 0
      %2109 = vmatpush1.bf16.msra.mxu0 %v1865
      %2110 = vmatprep.subr.bf16.mxu0 0
      %2111 = vmatpush1.bf16.msra.mxu0 %v1866
      %2112 = vmatprep.mubr.bf16.mxu0 %v1954
      %2113 = vmatmul.mubr.bf16.gmra.mrb[0].mxu0 %v1953
      %v2114 = vpop.f32.mrb[0].mxu0
      %v2115 = vadd.f32 %v2066, %v2114
      %v2116 = vpop.f32.mrb[0].mxu0
      %v2117 = vpop.f32.mrb[0].mxu0
      %v2118 = vadd.f32 %v2069, %v2117
      %v2119 = vpop.f32.mrb[0].mxu0
      %2120 = vmatprep.mubr.bf16.mxu0 %v1961
      %2121 = vmatmul.mubr.bf16.gmra.mrb[0].mxu0 %v1960
      %v2122 = vpop.f32.mrb[0].mxu0
      %v2123 = vadd.f32 %v2074, %v2122
      %v2124 = vpop.f32.mrb[0].mxu0
      %v2125 = vpop.f32.mrb[0].mxu0
      %v2126 = vadd.f32 %v2077, %v2125
      %v2127 = vpop.f32.mrb[0].mxu0
      %2128 = vdwg.mxu0
      %2129 = vmatprep.subr.bf16.mxu0 0
      %2130 = vmatpush1.bf16.msra.mxu0 %v1871
      %2131 = vmatprep.subr.bf16.mxu0 0
      %2132 = vmatpush1.bf16.msra.mxu0 %v1872
      %2133 = vmatprep.subr.bf16.mxu0 0
      %2134 = vmatpush1.bf16.msra.mxu0 %v1877
      %2135 = vmatprep.subr.bf16.mxu0 0
      %2136 = vmatpush1.bf16.msra.mxu0 %v1878
      %2137 = vmatprep.subr.bf16.mxu0 0
      %2138 = vmatpush1.bf16.msra.mxu0 %v1883
      %2139 = vmatprep.subr.bf16.mxu0 0
      %2140 = vmatpush1.bf16.msra.mxu0 %v1884
      %2141 = vmatprep.subr.bf16.mxu0 0
      %2142 = vmatpush1.bf16.msra.mxu0 0
      %2143 = vmatprep.subr.bf16.mxu0 0
      %2144 = vmatpush1.bf16.msra.mxu0 0
      %2145 = vmatprep.subr.bf16.mxu0 0
      %2146 = vmatpush1.bf16.msra.mxu0 0
      %2147 = vmatprep.subr.bf16.mxu0 0
      %2148 = vmatpush1.bf16.msra.mxu0 0
      %2149 = vmatprep.subr.bf16.mxu0 0
      %2150 = vmatpush1.bf16.msra.mxu0 0
      %2151 = vmatprep.subr.bf16.mxu0 0
      %2152 = vmatpush1.bf16.msra.mxu0 0
      %2153 = vmatprep.subr.bf16.mxu0 0
      %2154 = vmatpush1.bf16.msra.mxu0 0
      %2155 = vmatprep.subr.bf16.mxu0 0
      %2156 = vmatpush1.bf16.msra.mxu0 0
      %2157 = vmatprep.subr.bf16.mxu0 0
      %2158 = vmatpush1.bf16.msra.mxu0 0
      %2159 = vmatprep.subr.bf16.mxu0 0
      %2160 = vmatpush1.bf16.msra.mxu0 0
      %2161 = vmatprep.mubr.bf16.mxu0 0
      %2162 = vmatmul.mubr.bf16.gmra.mrb[0].mxu0 %v1977
      %v2163 = vpop.f32.mrb[0].mxu0
      %v2164 = vadd.f32 %v2115, %v2163
      %v2165 = vpop.f32.mrb[0].mxu0
      %v2166 = vpop.f32.mrb[0].mxu0
      %v2167 = vadd.f32 %v2118, %v2166
      %v2168 = vpop.f32.mrb[0].mxu0
      %2169 = vmatprep.mubr.bf16.mxu0 0
      %2170 = vmatmul.mubr.bf16.gmra.mrb[0].mxu0 %v1980
      %v2171 = vpop.f32.mrb[0].mxu0
      %v2172 = vadd.f32 %v2123, %v2171
      %v2173 = vpop.f32.mrb[0].mxu0
      %v2174 = vpop.f32.mrb[0].mxu0
      %v2175 = vadd.f32 %v2126, %v2174
      %v2176 = vpop.f32.mrb[0].mxu0
      %2177 = vdwg.mxu0
      %v2178 = vld [vmem:[%s5] sm:$0xff]
      %v2179 = vld [vmem:[%s5 + $0x8] sm:$0xff]
      %v2180 = vld [vmem:[%s5 + $0x10] sm:$0xff]
      %v2181 = vld [vmem:[%s5 + $0x18] sm:$0xff]
      %v2183 = vsel %vm652, %v2178, 0
      %v2186 = vsel %vm652, %v2179, 0
      %v2189 = vsel %vm652, %v2180, 0
      %v2192 = vsel %vm652, %v2181, 0
      %2194 = vmatprep.subr.mxu0 0.0
      %2195 = vmatpush1.msra.mxu0 %v631
      %2196 = vmatprep.subr.mxu0 0.0
      %2197 = vmatpush1.msra.mxu0 %v632
      %2198 = vmatprep.subr.mxu0 0.0
      %2199 = vmatpush1.msra.mxu0 0.0
      %2200 = vmatprep.subr.mxu0 0.0
      %2201 = vmatpush1.msra.mxu0 0.0
      %2202 = vmatprep.subr.mxu0 0.0
      %2203 = vmatpush1.msra.mxu0 0.0
      %2204 = vmatprep.subr.mxu0 0.0
      %2205 = vmatpush1.msra.mxu0 0.0
      %2206 = vmatprep.subr.mxu0 0.0
      %2207 = vmatpush1.msra.mxu0 0.0
      %2208 = vmatprep.subr.mxu0 0.0
      %2209 = vmatpush1.msra.mxu0 0.0
      %2210 = vmatprep.subr.mxu0 0.0
      %2211 = vmatpush1.msra.mxu0 0.0
      %2212 = vmatprep.subr.mxu0 0.0
      %2213 = vmatpush1.msra.mxu0 0.0
      %2214 = vmatprep.subr.mxu0 0.0
      %2215 = vmatpush1.msra.mxu0 0.0
      %2216 = vmatprep.subr.mxu0 0.0
      %2217 = vmatpush1.msra.mxu0 0.0
      %2218 = vmatprep.subr.mxu0 0.0
      %2219 = vmatpush1.msra.mxu0 0.0
      %2220 = vmatprep.subr.mxu0 0.0
      %2221 = vmatpush1.msra.mxu0 0.0
      %2222 = vmatprep.subr.mxu0 0.0
      %2223 = vmatpush1.msra.mxu0 0.0
      %2224 = vmatprep.subr.mxu0 0.0
      %2225 = vmatpush1.msra.mxu0 0.0
      %2226 = vmatprep.subr.mxu0 0.0
      %2227 = vmatpush1.msra.mxu0 0.0
      %2228 = vmatprep.subr.mxu0 0.0
      %2229 = vmatpush1.msra.mxu0 0.0
      %2230 = vmatprep.subr.mxu0 0.0
      %2231 = vmatpush1.msra.mxu0 0.0
      %2232 = vmatprep.subr.mxu0 0.0
      %2233 = vmatpush1.msra.mxu0 0.0
      %2234 = vmatprep.subr.mxu0 0.0
      %2235 = vmatpush1.msra.mxu0 0.0
      %2236 = vmatprep.subr.mxu0 0.0
      %2237 = vmatpush1.msra.mxu0 0.0
      %2238 = vmatprep.subr.mxu0 0.0
      %2239 = vmatpush1.msra.mxu0 0.0
      %2240 = vmatprep.subr.mxu0 0.0
      %2241 = vmatpush1.msra.mxu0 0.0
      %2242 = vmatprep.subr.mxu0 0.0
      %2243 = vmatpush1.msra.mxu0 0.0
      %2244 = vmatprep.subr.mxu0 0.0
      %2245 = vmatpush1.msra.mxu0 0.0
      %2246 = vmatprep.subr.mxu0 0.0
      %2247 = vmatpush1.msra.mxu0 0.0
      %2248 = vmatprep.subr.mxu0 0.0
      %2249 = vmatpush1.msra.mxu0 0.0
      %2250 = vmatprep.subr.mxu0 0.0
      %2251 = vmatpush1.msra.mxu0 0.0
      %2252 = vmatprep.subr.mxu0 0.0
      %2253 = vmatpush1.msra.mxu0 0.0
      %2254 = vmatprep.subr.mxu0 0.0
      %2255 = vmatpush1.msra.mxu0 0.0
      %2256 = vmatprep.subr.mxu0 0.0
      %2257 = vmatpush1.msra.mxu0 0.0
      %2258 = vmatprep.mubr.f32.mxu0 0.0
      %2259 = vmatmul.mubr.f32.gmra.mrb[0].mxu0 %v2183
      %v2260 = vpop.f32.mrb[0].mxu0
      %v2261 = vadd.f32 0.0, %v2260
      %v2262 = vpop.f32.mrb[0].mxu0
      %2263 = vmatprep.mubr.f32.mxu0 0.0
      %2264 = vmatmul.mubr.f32.gmra.mrb[0].mxu0 %v2186
      %v2265 = vpop.f32.mrb[0].mxu0
      %v2266 = vadd.f32 0.0, %v2265
      %v2267 = vpop.f32.mrb[0].mxu0
      %2268 = vmatprep.mubr.f32.mxu0 0.0
      %2269 = vmatmul.mubr.f32.gmra.mrb[0].mxu0 %v2189
      %v2270 = vpop.f32.mrb[0].mxu0
      %v2271 = vadd.f32 0.0, %v2270
      %v2272 = vpop.f32.mrb[0].mxu0
      %2273 = vmatprep.mubr.f32.mxu0 0.0
      %2274 = vmatmul.mubr.f32.gmra.mrb[0].mxu0 %v2192
      %v2275 = vpop.f32.mrb[0].mxu0
      %v2276 = vadd.f32 0.0, %v2275
      %v2277 = vpop.f32.mrb[0].mxu0
      %2278 = vdwg.mxu0
      %v2279 = vld [vmem:[%s10] sm:$0xff]
      %v2280 = vld [vmem:[%s10 + $0x8] sm:$0xff]
      %v2281 = vld [vmem:[%s10 + $0x10] sm:$0xff]
      %v2282 = vld [vmem:[%s10 + $0x18] sm:$0xff]
      %v2283 = vld [vmem:[%s11] sm:$0xff]
      %v2284 = vld [vmem:[%s11 + $0x8] sm:$0xff]
      %v2285 = vld [vmem:[%s11 + $0x10] sm:$0xff]
      %v2286 = vld [vmem:[%s11 + $0x18] sm:$0xff]
      %2287 = vadd.xlane.f32.xlu0 %v2261
      %v2288 = vpop.xlane.xlu0 %2287
      %2289 = vadd.xlane.f32.xlu0 %v2266
      %v2290 = vpop.xlane.xlu0 %2289
      %2291 = vadd.xlane.f32.xlu0 %v2271
      %v2292 = vpop.xlane.xlu0 %2291
      %2293 = vadd.xlane.f32.xlu0 %v2276
      %v2294 = vpop.xlane.xlu0 %2293
      %v2295 = vmul.f32 %v2261, %v2261
      %v2296 = vmul.f32 %v2266, %v2266
      %v2297 = vmul.f32 %v2271, %v2271
      %v2298 = vmul.f32 %v2276, %v2276
      %2299 = vadd.xlane.f32.xlu0 %v2295
      %v2300 = vpop.xlane.xlu0 %2299
      %2301 = vadd.xlane.f32.xlu0 %v2296
      %v2302 = vpop.xlane.xlu0 %2301
      %2303 = vadd.xlane.f32.xlu0 %v2297
      %v2304 = vpop.xlane.xlu0 %2303
      %2305 = vadd.xlane.f32.xlu0 %v2298
      %v2306 = vpop.xlane.xlu0 %2305
      %v2307 = vsel %vm649, %v2288, %v2300
      %v2308 = vsel %vm649, %v2290, %v2302
      %v2309 = vsel %vm649, %v2292, %v2304
      %v2310 = vsel %vm649, %v2294, %v2306
      %2311 = vmatprep.subr.mxu0 0.0
      %2312 = vmatpush1.msra.mxu0 %v2307
      %2313 = vmatprep.subr.mxu0 0.0
      %2314 = vmatpush1.msra.mxu0 %v2308
      %2315 = vmatprep.subr.mxu0 0.0
      %2316 = vmatpush1.msra.mxu0 %v2309
      %2317 = vmatprep.subr.mxu0 0.0
      %2318 = vmatpush1.msra.mxu0 %v2310
      %2319 = vmatprep.subr.mxu0 0.0
      %2320 = vmatpush1.msra.mxu0 0.0
      %2321 = vmatprep.subr.mxu0 0.0
      %2322 = vmatpush1.msra.mxu0 0.0
      %2323 = vmatprep.subr.mxu0 0.0
      %2324 = vmatpush1.msra.mxu0 0.0
      %2325 = vmatprep.subr.mxu0 0.0
      %2326 = vmatpush1.msra.mxu0 0.0
      %2327 = vmatprep.subr.mxu0 0.0
      %2328 = vmatpush1.msra.mxu0 0.0
      %2329 = vmatprep.subr.mxu0 0.0
      %2330 = vmatpush1.msra.mxu0 0.0
      %2331 = vmatprep.subr.mxu0 0.0
      %2332 = vmatpush1.msra.mxu0 0.0
      %2333 = vmatprep.subr.mxu0 0.0
      %2334 = vmatpush1.msra.mxu0 0.0
      %2335 = vmatprep.subr.mxu0 0.0
      %2336 = vmatpush1.msra.mxu0 0.0
      %2337 = vmatprep.subr.mxu0 0.0
      %2338 = vmatpush1.msra.mxu0 0.0
      %2339 = vmatprep.subr.mxu0 0.0
      %2340 = vmatpush1.msra.mxu0 0.0
      %2341 = vmatprep.subr.mxu0 0.0
      %2342 = vmatpush1.msra.mxu0 0.0
      %2343 = vmatprep.subr.mxu0 0.0
      %2344 = vmatpush1.msra.mxu0 0.0
      %2345 = vmatprep.subr.mxu0 0.0
      %2346 = vmatpush1.msra.mxu0 0.0
      %2347 = vmatprep.subr.mxu0 0.0
      %2348 = vmatpush1.msra.mxu0 0.0
      %2349 = vmatprep.subr.mxu0 0.0
      %2350 = vmatpush1.msra.mxu0 0.0
      %2351 = vmatprep.subr.mxu0 0.0
      %2352 = vmatpush1.msra.mxu0 0.0
      %2353 = vmatprep.subr.mxu0 0.0
      %2354 = vmatpush1.msra.mxu0 0.0
      %2355 = vmatprep.subr.mxu0 0.0
      %2356 = vmatpush1.msra.mxu0 0.0
      %2357 = vmatprep.subr.mxu0 0.0
      %2358 = vmatpush1.msra.mxu0 0.0
      %2359 = vmatprep.subr.mxu0 0.0
      %2360 = vmatpush1.msra.mxu0 0.0
      %2361 = vmatprep.subr.mxu0 0.0
      %2362 = vmatpush1.msra.mxu0 0.0
      %2363 = vmatprep.subr.mxu0 0.0
      %2364 = vmatpush1.msra.mxu0 0.0
      %2365 = vmatprep.subr.mxu0 0.0
      %2366 = vmatpush1.msra.mxu0 0.0
      %2367 = vmatprep.subr.mxu0 0.0
      %2368 = vmatpush1.msra.mxu0 0.0
      %2369 = vmatprep.subr.mxu0 0.0
      %2370 = vmatpush1.msra.mxu0 0.0
      %2371 = vmatprep.subr.mxu0 0.0
      %2372 = vmatpush1.msra.mxu0 0.0
      %2373 = vmatprep.subr.mxu0 0.0
      %2374 = vmatpush1.msra.mxu0 0.0
      %2375 = vmatprep.mubr.f32.mxu0 0.0
      %2376 = vmatmul.mubr.f32.gmra.mrb[0].mxu0 %v1359
      %v2377 = vpop.f32.mrb[0].mxu0
      %v2378 = vadd.f32 0.0, %v2377
      %v2379 = vpop.f32.mrb[0].mxu0
      %2380 = vmatprep.mubr.f32.mxu0 0.0
      %2381 = vmatmul.mubr.f32.gmra.mrb[0].mxu0 %v1362
      %v2382 = vpop.f32.mrb[0].mxu0
      %v2383 = vadd.f32 0.0, %v2382
      %v2384 = vpop.f32.mrb[0].mxu0
      %2385 = vmatprep.mubr.f32.mxu0 0.0
      %2386 = vmatmul.mubr.f32.gmra.mrb[0].mxu0 %v1365
      %v2387 = vpop.f32.mrb[0].mxu0
      %v2388 = vadd.f32 0.0, %v2387
      %v2389 = vpop.f32.mrb[0].mxu0
      %2390 = vmatprep.mubr.f32.mxu0 0.0
      %2391 = vmatmul.mubr.f32.gmra.mrb[0].mxu0 %v1368
      %v2392 = vpop.f32.mrb[0].mxu0
      %v2393 = vadd.f32 0.0, %v2392
      %v2394 = vpop.f32.mrb[0].mxu0
      %2395 = vdwg.mxu0
      %v2396 = vmul.f32 %v2378, %v2378
      %v2397 = vmul.f32 %v2383, %v2383
      %v2398 = vmul.f32 %v2388, %v2388
      %v2399 = vmul.f32 %v2393, %v2393
      %2404 = vrot.lane.b32.xlu0 %v2396, 1
      %v2405 = vpop.permute.xlu0 %2404
      %2406 = vrot.lane.b32.xlu0 %v2397, 1
      %v2407 = vpop.permute.xlu0 %2406
      %2408 = vrot.lane.b32.xlu0 %v2398, 1
      %v2409 = vpop.permute.xlu0 %2408
      %2410 = vrot.lane.b32.xlu0 %v2399, 1
      %v2411 = vpop.permute.xlu0 %2410
      %v2416 = vsub.f32 %v2378, %v2405
      %v2417 = vsub.f32 %v2383, %v2407
      %v2418 = vsub.f32 %v2388, %v2409
      %v2419 = vsub.f32 %v2393, %v2411
      %v2420 = vmax.f32 %v2416, 0.0
      %v2421 = vmax.f32 %v2417, 0.0
      %v2422 = vmax.f32 %v2418, 0.0
      %v2423 = vmax.f32 %v2419, 0.0
      %v2424 = vadd.f32 %v2420, 1e-05
      %v2425 = vadd.f32 %v2421, 1e-05
      %v2426 = vadd.f32 %v2422, 1e-05
      %v2427 = vadd.f32 %v2423, 1e-05
      %v2428 = vrsqrt.pop %v2424
      %v2429 = vrsqrt.pop %v2425
      %v2430 = vrsqrt.pop %v2426
      %v2431 = vrsqrt.pop %v2427
      %2436 = vrot.lane.b32.xlu0 %v2428, 127
      %v2437 = vpop.permute.xlu0 %2436
      %2438 = vrot.lane.b32.xlu0 %v2429, 127
      %v2439 = vpop.permute.xlu0 %2438
      %2440 = vrot.lane.b32.xlu0 %v2430, 127
      %v2441 = vpop.permute.xlu0 %2440
      %2442 = vrot.lane.b32.xlu0 %v2431, 127
      %v2443 = vpop.permute.xlu0 %2442
      %v2448 = vmul.f32 %v2279, %v2437
      %v2449 = vmul.f32 %v2280, %v2439
      %v2450 = vmul.f32 %v2281, %v2441
      %v2451 = vmul.f32 %v2282, %v2443
      %v2452 = vmul.f32 %v2378, %v2448
      %v2453 = vmul.f32 %v2383, %v2449
      %v2454 = vmul.f32 %v2388, %v2450
      %v2455 = vmul.f32 %v2393, %v2451
      %v2456 = vsub.f32 %v2283, %v2452
      %v2457 = vsub.f32 %v2284, %v2453
      %v2458 = vsub.f32 %v2285, %v2454
      %v2459 = vsub.f32 %v2286, %v2455
      %2461 = vset.pattern.permute.xlu0 0
      %2462 = vperm.xlu0 %2461, %v2448
      %v2463 = vpop.permute.xlu0 %2462
      %2466 = vset.pattern.permute.xlu0 0
      %2467 = vperm.xlu0 %2466, %v2449
      %v2468 = vpop.permute.xlu0 %2467
      %2471 = vset.pattern.permute.xlu0 0
      %2472 = vperm.xlu0 %2471, %v2450
      %v2473 = vpop.permute.xlu0 %2472
      %2476 = vset.pattern.permute.xlu0 0
      %2477 = vperm.xlu0 %2476, %v2451
      %v2478 = vpop.permute.xlu0 %2477
      %v2480 = vmul.f32 %v2261, %v2463
      %v2481 = vmul.f32 %v2266, %v2468
      %v2482 = vmul.f32 %v2271, %v2473
      %v2483 = vmul.f32 %v2276, %v2478
      %2485 = vset.pattern.permute.xlu0 0
      %2486 = vperm.xlu0 %2485, %v2456
      %v2487 = vpop.permute.xlu0 %2486
      %2490 = vset.pattern.permute.xlu0 0
      %2491 = vperm.xlu0 %2490, %v2457
      %v2492 = vpop.permute.xlu0 %2491
      %2495 = vset.pattern.permute.xlu0 0
      %2496 = vperm.xlu0 %2495, %v2458
      %v2497 = vpop.permute.xlu0 %2496
      %2500 = vset.pattern.permute.xlu0 0
      %2501 = vperm.xlu0 %2500, %v2459
      %v2502 = vpop.permute.xlu0 %2501
      %v2504 = vadd.f32 %v2480, %v2487
      %v2505 = vadd.f32 %v2481, %v2492
      %v2506 = vadd.f32 %v2482, %v2497
      %v2507 = vadd.f32 %v2483, %v2502
      %v2508 = vadd.f32 %v2164, %v2504
      %v2509 = vadd.f32 %v2167, %v2505
      %v2510 = vadd.f32 %v2172, %v2506
      %v2511 = vadd.f32 %v2175, %v2507
      %v2512 = vld [vmem:[%s19] sm:$0xff]
      %v2513 = vld [vmem:[%s19 + $0x8] sm:$0xff]
      %v2514 = vld [vmem:[%s19 + $0x10] sm:$0xff]
      %v2515 = vld [vmem:[%s19 + $0x18] sm:$0xff]
      %v2516 = vld [vmem:[%s19 + $0x20] sm:$0xff]
      %v2517 = vld [vmem:[%s19 + $0x28] sm:$0xff]
      %v2518 = vld [vmem:[%s19 + $0x30] sm:$0xff]
      %v2519 = vld [vmem:[%s19 + $0x38] sm:$0xff]
      %v2520 = vld [vmem:[%s19 + $0x40] sm:$0xff]
      %v2521 = vld [vmem:[%s19 + $0x48] sm:$0xff]
      %v2522 = vld [vmem:[%s19 + $0x50] sm:$0xff]
      %v2523 = vld [vmem:[%s19 + $0x58] sm:$0xff]
      %v2524 = vld [vmem:[%s19 + $0x60] sm:$0xff]
      %v2525 = vld [vmem:[%s19 + $0x68] sm:$0xff]
      %v2526 = vld [vmem:[%s19 + $0x70] sm:$0xff]
      %v2527 = vld [vmem:[%s19 + $0x78] sm:$0xff]
      %2528 = vmatprep.subr.mxu0 0.0
      %2529 = vmatpush1.msra.mxu0 %v2512
      %2530 = vmatprep.subr.mxu0 0.0
      %2531 = vmatpush1.msra.mxu0 %v2513
      %2532 = vmatprep.subr.mxu0 0.0
      %2533 = vmatpush1.msra.mxu0 %v2514
      %2534 = vmatprep.subr.mxu0 0.0
      %2535 = vmatpush1.msra.mxu0 %v2515
      %2536 = vmatprep.subr.mxu0 0.0
      %2537 = vmatpush1.msra.mxu0 %v2516
      %2538 = vmatprep.subr.mxu0 0.0
      %2539 = vmatpush1.msra.mxu0 %v2517
      %2540 = vmatprep.subr.mxu0 0.0
      %2541 = vmatpush1.msra.mxu0 %v2518
      %2542 = vmatprep.subr.mxu0 0.0
      %2543 = vmatpush1.msra.mxu0 %v2519
      %2544 = vmatprep.subr.mxu0 0.0
      %2545 = vmatpush1.msra.mxu0 %v2520
      %2546 = vmatprep.subr.mxu0 0.0
      %2547 = vmatpush1.msra.mxu0 %v2521
      %2548 = vmatprep.subr.mxu0 0.0
      %2549 = vmatpush1.msra.mxu0 %v2522
      %2550 = vmatprep.subr.mxu0 0.0
      %2551 = vmatpush1.msra.mxu0 %v2523
      %2552 = vmatprep.subr.mxu0 0.0
      %2553 = vmatpush1.msra.mxu0 %v2524
      %2554 = vmatprep.subr.mxu0 0.0
      %2555 = vmatpush1.msra.mxu0 %v2525
      %2556 = vmatprep.subr.mxu0 0.0
      %2557 = vmatpush1.msra.mxu0 %v2526
      %2558 = vmatprep.subr.mxu0 0.0
      %2559 = vmatpush1.msra.mxu0 %v2527
      %2560 = vmatprep.subr.mxu0 0.0
      %2561 = vmatpush1.msra.mxu0 0.0
      %2562 = vmatprep.subr.mxu0 0.0
      %2563 = vmatpush1.msra.mxu0 0.0
      %2564 = vmatprep.subr.mxu0 0.0
      %2565 = vmatpush1.msra.mxu0 0.0
      %2566 = vmatprep.subr.mxu0 0.0
      %2567 = vmatpush1.msra.mxu0 0.0
      %2568 = vmatprep.subr.mxu0 0.0
      %2569 = vmatpush1.msra.mxu0 0.0
      %2570 = vmatprep.subr.mxu0 0.0
      %2571 = vmatpush1.msra.mxu0 0.0
      %2572 = vmatprep.subr.mxu0 0.0
      %2573 = vmatpush1.msra.mxu0 0.0
      %2574 = vmatprep.subr.mxu0 0.0
      %2575 = vmatpush1.msra.mxu0 0.0
      %2576 = vmatprep.subr.mxu0 0.0
      %2577 = vmatpush1.msra.mxu0 0.0
      %2578 = vmatprep.subr.mxu0 0.0
      %2579 = vmatpush1.msra.mxu0 0.0
      %2580 = vmatprep.subr.mxu0 0.0
      %2581 = vmatpush1.msra.mxu0 0.0
      %2582 = vmatprep.subr.mxu0 0.0
      %2583 = vmatpush1.msra.mxu0 0.0
      %2584 = vmatprep.subr.mxu0 0.0
      %2585 = vmatpush1.msra.mxu0 0.0
      %2586 = vmatprep.subr.mxu0 0.0
      %2587 = vmatpush1.msra.mxu0 0.0
      %2588 = vmatprep.subr.mxu0 0.0
      %2589 = vmatpush1.msra.mxu0 0.0
      %2590 = vmatprep.subr.mxu0 0.0
      %2591 = vmatpush1.msra.mxu0 0.0
      %2592 = vmatprep.mubr.f32.mxu0 0.0
      %2593 = vmatmul.mubr.f32.gmra.mrb[0].mxu0 %v2508
      %v2594 = vpop.f32.mrb[0].mxu0
      %v2595 = vadd.f32 0.0, %v2594
      %v2596 = vpop.f32.mrb[0].mxu0
      %2597 = vmatprep.mubr.f32.mxu0 0.0
      %2598 = vmatmul.mubr.f32.gmra.mrb[0].mxu0 %v2509
      %v2599 = vpop.f32.mrb[0].mxu0
      %v2600 = vadd.f32 0.0, %v2599
      %v2601 = vpop.f32.mrb[0].mxu0
      %2602 = vmatprep.mubr.f32.mxu0 0.0
      %2603 = vmatmul.mubr.f32.gmra.mrb[0].mxu0 %v2510
      %v2604 = vpop.f32.mrb[0].mxu0
      %v2605 = vadd.f32 0.0, %v2604
      %v2606 = vpop.f32.mrb[0].mxu0
      %2607 = vmatprep.mubr.f32.mxu0 0.0
      %2608 = vmatmul.mubr.f32.gmra.mrb[0].mxu0 %v2511
      %v2609 = vpop.f32.mrb[0].mxu0
      %v2610 = vadd.f32 0.0, %v2609
      %v2611 = vpop.f32.mrb[0].mxu0
      %2612 = vdwg.mxu0
      %v2613 = vld [vmem:[%s12] sm:$0xff]
      %v2614 = vld [vmem:[%s12 + $0x8] sm:$0xff]
      %v2615 = vld [vmem:[%s13] sm:$0xff]
      %v2616 = vld [vmem:[%s13 + $0x8] sm:$0xff]
      %2618 = vset.pattern.permute.xlu0 0
      %2619 = vperm.xlu0 %2618, %v2615
      %v2620 = vpop.permute.xlu0 %2619
      %2623 = vset.pattern.permute.xlu0 0
      %2624 = vperm.xlu0 %2623, %v2616
      %v2625 = vpop.permute.xlu0 %2624
      %v2628 = vsel %vm1357, %v2613, 0
      %v2631 = vsel %vm1357, %v2614, 0
      %2633 = vmatprep.subr.mxu0 0.0
      %2634 = vmatpush1.msra.mxu0 %v2595
      %2635 = vmatprep.subr.mxu0 0.0
      %2636 = vmatpush1.msra.mxu0 %v2600
      %2637 = vmatprep.subr.mxu0 0.0
      %2638 = vmatpush1.msra.mxu0 %v2605
      %2639 = vmatprep.subr.mxu0 0.0
      %2640 = vmatpush1.msra.mxu0 %v2610
      %2641 = vmatprep.subr.mxu0 0.0
      %2642 = vmatpush1.msra.mxu0 0.0
      %2643 = vmatprep.subr.mxu0 0.0
      %2644 = vmatpush1.msra.mxu0 0.0
      %2645 = vmatprep.subr.mxu0 0.0
      %2646 = vmatpush1.msra.mxu0 0.0
      %2647 = vmatprep.subr.mxu0 0.0
      %2648 = vmatpush1.msra.mxu0 0.0
      %2649 = vmatprep.subr.mxu0 0.0
      %2650 = vmatpush1.msra.mxu0 0.0
      %2651 = vmatprep.subr.mxu0 0.0
      %2652 = vmatpush1.msra.mxu0 0.0
      %2653 = vmatprep.subr.mxu0 0.0
      %2654 = vmatpush1.msra.mxu0 0.0
      %2655 = vmatprep.subr.mxu0 0.0
      %2656 = vmatpush1.msra.mxu0 0.0
      %2657 = vmatprep.subr.mxu0 0.0
      %2658 = vmatpush1.msra.mxu0 0.0
      %2659 = vmatprep.subr.mxu0 0.0
      %2660 = vmatpush1.msra.mxu0 0.0
      %2661 = vmatprep.subr.mxu0 0.0
      %2662 = vmatpush1.msra.mxu0 0.0
      %2663 = vmatprep.subr.mxu0 0.0
      %2664 = vmatpush1.msra.mxu0 0.0
      %2665 = vmatprep.subr.mxu0 0.0
      %2666 = vmatpush1.msra.mxu0 0.0
      %2667 = vmatprep.subr.mxu0 0.0
      %2668 = vmatpush1.msra.mxu0 0.0
      %2669 = vmatprep.subr.mxu0 0.0
      %2670 = vmatpush1.msra.mxu0 0.0
      %2671 = vmatprep.subr.mxu0 0.0
      %2672 = vmatpush1.msra.mxu0 0.0
      %2673 = vmatprep.subr.mxu0 0.0
      %2674 = vmatpush1.msra.mxu0 0.0
      %2675 = vmatprep.subr.mxu0 0.0
      %2676 = vmatpush1.msra.mxu0 0.0
      %2677 = vmatprep.subr.mxu0 0.0
      %2678 = vmatpush1.msra.mxu0 0.0
      %2679 = vmatprep.subr.mxu0 0.0
      %2680 = vmatpush1.msra.mxu0 0.0
      %2681 = vmatprep.subr.mxu0 0.0
      %2682 = vmatpush1.msra.mxu0 0.0
      %2683 = vmatprep.subr.mxu0 0.0
      %2684 = vmatpush1.msra.mxu0 0.0
      %2685 = vmatprep.subr.mxu0 0.0
      %2686 = vmatpush1.msra.mxu0 0.0
      %2687 = vmatprep.subr.mxu0 0.0
      %2688 = vmatpush1.msra.mxu0 0.0
      %2689 = vmatprep.subr.mxu0 0.0
      %2690 = vmatpush1.msra.mxu0 0.0
      %2691 = vmatprep.subr.mxu0 0.0
      %2692 = vmatpush1.msra.mxu0 0.0
      %2693 = vmatprep.subr.mxu0 0.0
      %2694 = vmatpush1.msra.mxu0 0.0
      %2695 = vmatprep.subr.mxu0 0.0
      %2696 = vmatpush1.msra.mxu0 0.0
      %2697 = vmatprep.mubr.f32.mxu0 0.0
      %2698 = vmatmul.mubr.f32.gmra.mrb[0].mxu0 %v2628
      %v2699 = vpop.f32.mrb[0].mxu0
      %v2700 = vadd.f32 %v2620, %v2699
      %v2701 = vpop.f32.mrb[0].mxu0
      %2702 = vmatprep.mubr.f32.mxu0 0.0
      %2703 = vmatmul.mubr.f32.gmra.mrb[0].mxu0 %v2631
      %v2704 = vpop.f32.mrb[0].mxu0
      %v2705 = vadd.f32 %v2625, %v2704
      %v2706 = vpop.f32.mrb[0].mxu0
      %2707 = vdwg.mxu0
      %v2708 = vmax.f32 %v2700, 0.0
      %v2709 = vmax.f32 %v2705, 0.0
      %v2710 = vld [vmem:[%s14] sm:$0xff]
      %v2711 = vld [vmem:[%s14 + $0x8] sm:$0xff]
      %v2712 = vld [vmem:[%s14 + $0x10] sm:$0xff]
      %v2713 = vld [vmem:[%s14 + $0x18] sm:$0xff]
      %v2714 = vld [vmem:[%s15] sm:$0xff]
      %v2715 = vld [vmem:[%s15 + $0x8] sm:$0xff]
      %v2716 = vld [vmem:[%s15 + $0x10] sm:$0xff]
      %v2717 = vld [vmem:[%s15 + $0x18] sm:$0xff]
      %2719 = vset.pattern.permute.xlu0 0
      %2720 = vperm.xlu0 %2719, %v2714
      %v2721 = vpop.permute.xlu0 %2720
      %2724 = vset.pattern.permute.xlu0 0
      %2725 = vperm.xlu0 %2724, %v2715
      %v2726 = vpop.permute.xlu0 %2725
      %2729 = vset.pattern.permute.xlu0 0
      %2730 = vperm.xlu0 %2729, %v2716
      %v2731 = vpop.permute.xlu0 %2730
      %2734 = vset.pattern.permute.xlu0 0
      %2735 = vperm.xlu0 %2734, %v2717
      %v2736 = vpop.permute.xlu0 %2735
      %v2739 = vsel %vm652, %v2710, 0
      %v2742 = vsel %vm652, %v2711, 0
      %v2745 = vsel %vm652, %v2712, 0
      %v2748 = vsel %vm652, %v2713, 0
      %2750 = vmatprep.subr.mxu0 0.0
      %2751 = vmatpush1.msra.mxu0 %v2708
      %2752 = vmatprep.subr.mxu0 0.0
      %2753 = vmatpush1.msra.mxu0 %v2709
      %2754 = vmatprep.subr.mxu0 0.0
      %2755 = vmatpush1.msra.mxu0 0.0
      %2756 = vmatprep.subr.mxu0 0.0
      %2757 = vmatpush1.msra.mxu0 0.0
      %2758 = vmatprep.subr.mxu0 0.0
      %2759 = vmatpush1.msra.mxu0 0.0
      %2760 = vmatprep.subr.mxu0 0.0
      %2761 = vmatpush1.msra.mxu0 0.0
      %2762 = vmatprep.subr.mxu0 0.0
      %2763 = vmatpush1.msra.mxu0 0.0
      %2764 = vmatprep.subr.mxu0 0.0
      %2765 = vmatpush1.msra.mxu0 0.0
      %2766 = vmatprep.subr.mxu0 0.0
      %2767 = vmatpush1.msra.mxu0 0.0
      %2768 = vmatprep.subr.mxu0 0.0
      %2769 = vmatpush1.msra.mxu0 0.0
      %2770 = vmatprep.subr.mxu0 0.0
      %2771 = vmatpush1.msra.mxu0 0.0
      %2772 = vmatprep.subr.mxu0 0.0
      %2773 = vmatpush1.msra.mxu0 0.0
      %2774 = vmatprep.subr.mxu0 0.0
      %2775 = vmatpush1.msra.mxu0 0.0
      %2776 = vmatprep.subr.mxu0 0.0
      %2777 = vmatpush1.msra.mxu0 0.0
      %2778 = vmatprep.subr.mxu0 0.0
      %2779 = vmatpush1.msra.mxu0 0.0
      %2780 = vmatprep.subr.mxu0 0.0
      %2781 = vmatpush1.msra.mxu0 0.0
      %2782 = vmatprep.subr.mxu0 0.0
      %2783 = vmatpush1.msra.mxu0 0.0
      %2784 = vmatprep.subr.mxu0 0.0
      %2785 = vmatpush1.msra.mxu0 0.0
      %2786 = vmatprep.subr.mxu0 0.0
      %2787 = vmatpush1.msra.mxu0 0.0
      %2788 = vmatprep.subr.mxu0 0.0
      %2789 = vmatpush1.msra.mxu0 0.0
      %2790 = vmatprep.subr.mxu0 0.0
      %2791 = vmatpush1.msra.mxu0 0.0
      %2792 = vmatprep.subr.mxu0 0.0
      %2793 = vmatpush1.msra.mxu0 0.0
      %2794 = vmatprep.subr.mxu0 0.0
      %2795 = vmatpush1.msra.mxu0 0.0
      %2796 = vmatprep.subr.mxu0 0.0
      %2797 = vmatpush1.msra.mxu0 0.0
      %2798 = vmatprep.subr.mxu0 0.0
      %2799 = vmatpush1.msra.mxu0 0.0
      %2800 = vmatprep.subr.mxu0 0.0
      %2801 = vmatpush1.msra.mxu0 0.0
      %2802 = vmatprep.subr.mxu0 0.0
      %2803 = vmatpush1.msra.mxu0 0.0
      %2804 = vmatprep.subr.mxu0 0.0
      %2805 = vmatpush1.msra.mxu0 0.0
      %2806 = vmatprep.subr.mxu0 0.0
      %2807 = vmatpush1.msra.mxu0 0.0
      %2808 = vmatprep.subr.mxu0 0.0
      %2809 = vmatpush1.msra.mxu0 0.0
      %2810 = vmatprep.subr.mxu0 0.0
      %2811 = vmatpush1.msra.mxu0 0.0
      %2812 = vmatprep.subr.mxu0 0.0
      %2813 = vmatpush1.msra.mxu0 0.0
      %2814 = vmatprep.mubr.f32.mxu0 0.0
      %2815 = vmatmul.mubr.f32.gmra.mrb[0].mxu0 %v2739
      %v2816 = vpop.f32.mrb[0].mxu0
      %v2817 = vadd.f32 %v2721, %v2816
      %v2818 = vpop.f32.mrb[0].mxu0
      %2819 = vmatprep.mubr.f32.mxu0 0.0
      %2820 = vmatmul.mubr.f32.gmra.mrb[0].mxu0 %v2742
      %v2821 = vpop.f32.mrb[0].mxu0
      %v2822 = vadd.f32 %v2726, %v2821
      %v2823 = vpop.f32.mrb[0].mxu0
      %2824 = vmatprep.mubr.f32.mxu0 0.0
      %2825 = vmatmul.mubr.f32.gmra.mrb[0].mxu0 %v2745
      %v2826 = vpop.f32.mrb[0].mxu0
      %v2827 = vadd.f32 %v2731, %v2826
      %v2828 = vpop.f32.mrb[0].mxu0
      %2829 = vmatprep.mubr.f32.mxu0 0.0
      %2830 = vmatmul.mubr.f32.gmra.mrb[0].mxu0 %v2748
      %v2831 = vpop.f32.mrb[0].mxu0
      %v2832 = vadd.f32 %v2736, %v2831
      %v2833 = vpop.f32.mrb[0].mxu0
      %2834 = vdwg.mxu0
      %v2835 = vsub.f32 0.0, %v2817
      %v2836 = vsub.f32 0.0, %v2822
      %v2837 = vsub.f32 0.0, %v2827
      %v2838 = vsub.f32 0.0, %v2832
      %v2839 = vmul.f32 %v2835, 1.442695
      %v2840 = vpow.pop %v2839
      %v2841 = vmul.f32 %v2836, 1.442695
      %v2842 = vpow.pop %v2841
      %v2843 = vmul.f32 %v2837, 1.442695
      %v2844 = vpow.pop %v2843
      %v2845 = vmul.f32 %v2838, 1.442695
      %v2846 = vpow.pop %v2845
      %v2847 = vadd.f32 %v2840, 1.0
      %v2848 = vadd.f32 %v2842, 1.0
      %v2849 = vadd.f32 %v2844, 1.0
      %v2850 = vadd.f32 %v2846, 1.0
      %v2851 = vrcp.pop %v2847
      %v2852 = vrcp.pop %v2848
      %v2853 = vrcp.pop %v2849
      %v2854 = vrcp.pop %v2850
      %v2855 = vmul.f32 %v2508, %v2851
      %v2856 = vmul.f32 %v2509, %v2852
      %v2857 = vmul.f32 %v2510, %v2853
      %v2858 = vmul.f32 %v2511, %v2854
      %2859 = vst [vmem:[%s629] sm:$0xff] %v2855
      %2860 = vst [vmem:[%s629 + $0x8] sm:$0xff] %v2856
      %2861 = vst [vmem:[%s629 + $0x10] sm:$0xff] %v2857
      %2862 = vst [vmem:[%s629 + $0x18] sm:$0xff] %v2858
      %p2863 = scmp.lt.s32.totalorder %s31, 1
      %s2864 = scalar_select %p2863, %s31, 1
      %s2865 = smul.addr %s2864, 4
      %s2866 = smul.addr %s2865, 8
      %s2867 = scalar_lea.vmem %s20, %s2866
      // Predicated region
      $region101: #{down_forward.1} parent=99 // pred_check
        %p2868 = pneg %p474
      $region102: #{down_forward.1} parent=99 // pred_check_branch
        %2870 = sbr.rel (%p2868) target = $region104
      $region103: #{down_forward.1} parent=99 // pred_region
        _
      $region104: #{down_forward.1} parent=99 // pred_fallthru
        _
    $region100: #{down_forward.1} parent=5 // pred_fallthru
      _
    %p2871 = scmp.le.s32.totalorder 2, %s26
    // Predicated region
    $region105: #{down_forward.1} parent=5 // pred_check
      %p2872 = pneg %p2871
    $region106: #{down_forward.1} parent=5 // pred_check_branch
      %2874 = sbr.rel (%p2872) target = $region108
    $region107: #{down_forward.1} parent=5 // pred_region
      %s2875 = ssub.s32 %s26, 2
      // Predicated region
      $region109: #{down_forward.1} parent=107 // pred_check
        %p2876 = pneg %p480
      $region110: #{down_forward.1} parent=107 // pred_check_branch
        %2878 = sbr.rel (%p2876) target = $region112
      $region111: #{down_forward.1} parent=107 // pred_region
        %p2879 = scmp.lt.s32.totalorder %s32, 1
        %s2880 = scalar_select %p2879, %s32, 1
        %s2881 = smul.addr %s2880, 4
        %s2882 = smul.addr %s2881, 8
        %s2883 = scalar_lea.vmem %s20, %s2882
      $region112: #{down_forward.1} parent=107 // pred_fallthru
        _
    $region108: #{down_forward.1} parent=5 // pred_fallthru
      _
  $region6: #{down_forward.1} parent=0 // loop_footer
    %s30 = sadd.s32 1, %s26
  $region7: #{down_forward.1} parent=0 // loop_footer_branch
    %25 = sbr.rel target = $region3
  $region8: #{down_forward.1} parent=0 // loop_exit
    _

</llo_original>
